<compile_context>
chip_gen: v7x
topology: tpu7x:2x2x1
jax: 0.10.0
libtpu: 0.0.40
codegen_flags: <defaults>
</compile_context>

<pallas_src>
import jax
import jax.numpy as jnp
import numpy as np
from jax import lax
from jax.experimental import pallas as pl
from jax.experimental.pallas import tpu as pltpu

BN_EPS = 1e-5
_HIGHEST = lax.Precision.HIGHEST


# ----------------------------- in-kernel helpers ----------------------------


def _bn_relu(x, proj_ref, gamma_ref, beta_ref, inv_count):
    """Single-pass training-mode BatchNorm (batch stats, biased var) + ReLU.

    proj is the 0/1 'same channel' projector: x @ proj sums each row's lanes
    per channel; summing over rows yields per-channel batch statistics already
    broadcast back to every lane of that channel.  Stats stay in f32.
    """
    proj = proj_ref[...]
    s1 = jnp.sum(jnp.dot(x, proj, preferred_element_type=jnp.float32),
                 axis=0, keepdims=True)
    s2 = jnp.sum(jnp.dot(x * x, proj, preferred_element_type=jnp.float32),
                 axis=0, keepdims=True)
    mean = s1 * inv_count
    var = s2 * inv_count - mean * mean
    y = (x - mean) * (gamma_ref[...] * lax.rsqrt(var + BN_EPS)) + beta_ref[...]
    return jnp.maximum(y, 0.0)


def _make_network_kernel(n_layers, inv_count, conv_dtype):
    """Whole-network kernel: stem -> n_layers ResBlocks -> head, one launch."""

    def conv_pair(x, sup_ref, sdn_ref, m_ref, b_ref):
        # Fused depthwise-3x3 (pad=1) + pointwise-1x1 on a (R, W*Cin) tile.
        # Nine taps + channel mixing are pre-folded into m[dy] (W*Cin, W*Cout);
        # sup/sdn are 0/1 row-shift matrices with image-boundary zeroing baked
        # in.  Conv matmuls use `conv_dtype` operands, f32 accumulation.
        xc = x.astype(conv_dtype)
        x_up = jnp.dot(sup_ref[...], xc)            # row h-1 (exact selection)
        x_dn = jnp.dot(sdn_ref[...], xc)            # row h+1
        acc = jnp.dot(x_up, m_ref[0], preferred_element_type=jnp.float32)
        acc = acc + jnp.dot(xc, m_ref[1], preferred_element_type=jnp.float32)
        acc = acc + jnp.dot(x_dn, m_ref[2], preferred_element_type=jnp.float32)
        return acc + b_ref[...]

    def kernel(*refs):
        x_ref, sup_ref, sdn_ref = refs[0], refs[1], refs[2]
        o_ref = refs[-1]
        w = refs[3:-1]
        pos = 0

        def take(n):
            nonlocal pos
            vals = w[pos:pos + n]
            pos += n
            return vals

        x = x_ref[...]
        sm, sb = take(2)                                     # stem
        x = jnp.maximum(conv_pair(x, sup_ref, sdn_ref, sm, sb), 0.0)
        for _ in range(n_layers):                            # statically unrolled
            p1, g1, b1, m1, c1, p2, g2, b2, m2, c2 = take(10)
            x = _bn_relu(x, p1, g1, b1, inv_count)           # relu(bn1(x))
            x = conv_pair(x, sup_ref, sdn_ref, m1, c1)       # convp1(convd1(x))
            x = _bn_relu(x, p2, g2, b2, inv_count)           # relu(bn2(x))
            x = conv_pair(x, sup_ref, sdn_ref, m2, c2)       # convp2(convd2(x))
        hm, hb = take(2)                                     # head
        o_ref[...] = conv_pair(x, sup_ref, sdn_ref, hm, hb)

    return kernel


def _full_spec(shape):
    nd = len(shape)
    return pl.BlockSpec(tuple(shape), lambda i, _nd=nd: (0,) * _nd)


# ----------------------------- one-time weight packing ----------------------


def _mm(a, b):
    return jnp.matmul(a, b, precision=_HIGHEST)


def _pair_mats(w9, bd, Wp, bp, W, expand=None, out_pad_to=None,
               conv_dtype=jnp.float32):
    """Fold depthwise-3x3 weights (9, Cd)+bias and pointwise weights
    (Cd, Cout)+bias into a (3, W*Cin_raw, W*Cout) stack (one slab per vertical
    tap dy) and a fused (1, W*Cout) f32 bias, for the w-major / c-minor lane
    layout.  `expand` ((Craw, Cd) 0/1) folds a grouped-conv channel
    multiplier; `out_pad_to` zero-pads the output lanes (unmasked stores)."""
    Cd = w9.shape[1]
    eyeW = jnp.eye(W, dtype=jnp.float32)
    wbd = jnp.kron(eyeW, Wp)                                   # (W*Cd, W*Cout)
    pre = None if expand is None else jnp.kron(eyeW, expand)   # (W*Craw, W*Cd)
    mats = []
    for dy in (-1, 0, 1):
        a = jnp.zeros((W * Cd, W * Cd), jnp.float32)
        for dx in (-1, 0, 1):
            tap = (dy + 1) * 3 + (dx + 1)
            sdx = jnp.eye(W, k=-dx, dtype=jnp.float32)         # w_src = w_dst + dx
            a = a + jnp.kron(sdx, jnp.diag(w9[tap]))
        m = _mm(a, wbd)
        if pre is not None:
            m = _mm(pre, m)
        mats.append(m)
    mats = jnp.stack(mats, axis=0)                             # (3, Lin, Lout)
    bias = jnp.tile(_mm(bd[None, :], Wp)[0] + bp, W)[None, :]  # (1, Lout)
    if out_pad_to is not None and mats.shape[-1] < out_pad_to:
        pad = out_pad_to - mats.shape[-1]
        mats = jnp.pad(mats, ((0, 0), (0, 0), (0, pad)))
        bias = jnp.pad(bias, ((0, 0), (0, pad)))
    return mats.astype(conv_dtype), bias.astype(jnp.float32)


def _bn_lane_params(gamma, beta, W):
    Cx = gamma.shape[0]
    proj = jnp.kron(jnp.ones((W, W), jnp.float32),
                    jnp.eye(Cx, dtype=jnp.float32))            # (W*Cx, W*Cx)
    return proj, jnp.tile(gamma, W)[None, :], jnp.tile(beta, W)[None, :]


def _row_shift_mats(N, H):
    """(R, R) matrices shifting rows by -/+1 within each image (zero pad)."""
    R = N * H
    r = np.arange(R)
    h = r % H
    up = ((r[:, None] - 1 == r[None, :]) & (h[:, None] > 0)).astype(np.float32)
    dn = ((r[:, None] + 1 == r[None, :]) & (h[:, None] < H - 1)).astype(np.float32)
    return jnp.asarray(up), jnp.asarray(dn)


def prepare(params, x_shape, C, M, conv_dtype=jnp.bfloat16):
    """One-time packing: canonical (PyTorch-layout) params -> kernel operands.

    Called ONCE at init, outside the jitted forward (perf feedback item 2).
    Returns (sup, sdn, weights) where `weights` is the flat ref tuple the
    fused kernel consumes.
    """
    N, _, H, W = x_shape
    # convd_in: groups=C with channel multiplier M -> output channel o reads
    # input channel o // M.  Fold that expansion into the stem matrices.
    expand = jnp.kron(jnp.eye(C, dtype=jnp.float32),
                      jnp.ones((1, M), jnp.float32))           # (C, C*M)
    out_pad = ((W * C + 127) // 128) * 128                     # lane-dense head
    weights = []
    sm, sb = _pair_mats(params["convd_in_w"], params["convd_in_b"],
                        params["convp_in_w"], params["convp_in_b"], W,
                        expand=expand, conv_dtype=conv_dtype)
    weights += [sm, sb]
    for p in params["res"]:
        p1, g1, b1 = _bn_lane_params(p["bn1_g"], p["bn1_b"], W)
        m1, c1 = _pair_mats(p["convd1_w"], p["convd1_b"],
                            p["convp1_w"], p["convp1_b"], W,
                            conv_dtype=conv_dtype)
        p2, g2, b2 = _bn_lane_params(p["bn2_g"], p["bn2_b"], W)
        m2, c2 = _pair_mats(p["convd2_w"], p["convd2_b"],
                            p["convp2_w"], p["convp2_b"], W,
                            conv_dtype=conv_dtype)
        weights += [p1, g1, b1, m1, c1, p2, g2, b2, m2, c2]
    hm, hb = _pair_mats(params["convd_out_w"], params["convd_out_b"],
                        params["convp_out_w"], params["convp_out_b"], W,
                        out_pad_to=out_pad, conv_dtype=conv_dtype)
    weights += [hm, hb]
    sup, sdn = _row_shift_mats(N, H)
    # 0/1 shift matrices are exact in the conv operand dtype.
    return sup.astype(conv_dtype), sdn.astype(conv_dtype), tuple(weights)


# ----------------------------- Parameters -----------------------------------


def init_params(key, nLayers, C, M):
    """Deterministic synthetic parameters (kernel-layout weights)."""
    CM = C * M
    keys = iter(jax.random.split(key, 8 + 8 * nLayers))

    def w9(cout):  # depthwise weight: (9, cout) == torch (cout,1,3,3) flattened
        return 0.1 * jax.random.normal(next(keys), (9, cout), jnp.float32)

    def pw(cin, cout):  # pointwise weight: (cin, cout) == torch (cout,cin,1,1).T
        return 0.1 * jax.random.normal(next(keys), (cin, cout), jnp.float32)

    def bias(c):
        return 0.1 * jax.random.normal(next(keys), (c,), jnp.float32)

    params = {
        "convd_in_w": w9(CM), "convd_in_b": bias(CM),
        "convp_in_w": pw(CM, CM), "convp_in_b": bias(CM),
        "convd_out_w": w9(CM), "convd_out_b": bias(CM),
        "convp_out_w": pw(CM, C), "convp_out_b": bias(C),
        "res": [],
    }
    for _ in range(nLayers):
        params["res"].append({
            "bn1_g": jnp.ones((CM,), jnp.float32),
            "bn1_b": jnp.zeros((CM,), jnp.float32),
            "convd1_w": w9(CM), "convd1_b": bias(CM),
            "convp1_w": pw(CM, C), "convp1_b": bias(C),
            "bn2_g": jnp.ones((C,), jnp.float32),
            "bn2_b": jnp.zeros((C,), jnp.float32),
            "convd2_w": w9(C), "convd2_b": bias(C),
            "convp2_w": pw(C, CM), "convp2_b": bias(CM),
        })
    return params


# ----------------------------- Forward (Pallas) ------------------------------


def zeroshot_forward(x_nchw, sup, sdn, weights):
    """Fused forward.  `weights` is the packed tuple from prepare()."""
    N, C, H, W = x_nchw.shape
    R = N * H
    n_layers = (len(weights) - 4) // 10
    inv_count = 1.0 / float(N * H * W)
    out_lanes = weights[-2].shape[-1]        # padded head output lanes
    conv_dtype = weights[0].dtype            # bf16 (prod) or f32 (validation)

    # NCHW -> lane-dense (N*H, W*C) (w-major, channel-minor lanes).
    x = jnp.transpose(x_nchw, (0, 2, 3, 1)).astype(jnp.float32).reshape(R, W * C)

    args = (x, sup, sdn) + tuple(weights)
    kernel = _make_network_kernel(n_layers, inv_count, conv_dtype)
    y = pl.pallas_call(
        kernel,
        out_shape=jax.ShapeDtypeStruct((R, out_lanes), jnp.float32),
        grid=(1,),
        in_specs=[_full_spec(a.shape) for a in args],
        out_specs=_full_spec((R, out_lanes)),
        compiler_params=pltpu.CompilerParams(dimension_semantics=("arbitrary",)),
    )(*args)

    y = y[:, : W * C].reshape(N, H, W, C)    # drop zero-padded lanes
    return jnp.transpose(y, (0, 3, 1, 2))    # -> NCHW


# ----------------------------- Reference (plain JAX) -------------------------


def ref_forward(x_nchw, params, nLayers, C, M):
    x = jnp.transpose(x_nchw, (0, 2, 3, 1)).astype(jnp.float32)

    def dconv(x4, w9, b, groups):
        cout = w9.shape[1]
        whwio = w9.reshape(3, 3, 1, cout)
        y = lax.conv_general_dilated(
            x4, whwio, (1, 1), "SAME",
            dimension_numbers=("NHWC", "HWIO", "NHWC"),
            feature_group_count=groups, precision=_HIGHEST)
        return y + b

    def pconv(x4, w, b, relu=False):
        y = jnp.einsum("nhwc,cd->nhwd", x4, w, precision=_HIGHEST) + b
        return jnp.maximum(y, 0.0) if relu else y

    def bnrelu(x4, g, bt):
        mean = x4.mean(axis=(0, 1, 2), keepdims=True)
        var = ((x4 - mean) ** 2).mean(axis=(0, 1, 2), keepdims=True)
        return jnp.maximum((x4 - mean) / jnp.sqrt(var + BN_EPS) * g + bt, 0.0)

    x = dconv(x, params["convd_in_w"], params["convd_in_b"], groups=C)
    x = pconv(x, params["convp_in_w"], params["convp_in_b"], relu=True)
    for i in range(nLayers):
        p = params["res"][i]
        x = bnrelu(x, p["bn1_g"], p["bn1_b"])
        x = dconv(x, p["convd1_w"], p["convd1_b"], groups=C * M)
        x = pconv(x, p["convp1_w"], p["convp1_b"])
        x = bnrelu(x, p["bn2_g"], p["bn2_b"])
        x = dconv(x, p["convd2_w"], p["convd2_b"], groups=C)
        x = pconv(x, p["convp2_w"], p["convp2_b"])
    x = dconv(x, params["convd_out_w"], params["convd_out_b"], groups=C * M)
    x = pconv(x, params["convp_out_w"], params["convp_out_b"])
    return jnp.transpose(x, (0, 3, 1, 2))


# ----------------------------- Main ------------------------------------------


if __name__ == "__main__":
    nLayers, nChannels, multiply, att_rate = 2, 4, 2, 0.5  # att_rate unused in forward
    N, H, W = 2, 16, 16

    key = jax.random.PRNGKey(0)
    kx, kp = jax.random.split(key)
    x = jax.random.normal(kx, (N, nChannels, H, W), jnp.float32)  # NCHW input
    params = init_params(kp, nLayers, nChannels, multiply)

    ref = jax.block_until_ready(ref_forward(x, params, nLayers, nChannels, multiply))

    fwd = jax.jit(zeroshot_forward)

    # 1) Strict structural check: exact-f32 conv operands must match the
    #    f32 XLA reference tightly.
    sup32, sdn32, w32 = prepare(params, x.shape, nChannels, multiply,
                                conv_dtype=jnp.float32)
    out32 = jax.block_until_ready(fwd(x, sup32, sdn32, w32))
    assert out32.shape == (N, nChannels, H, W)
    np.testing.assert_allclose(np.asarray(out32), np.asarray(ref),
                               rtol=5e-3, atol=5e-3)

    # 2) Production path: bf16 MXU operands (f32 accumulate, f32 BN stats);
    #    slightly looser tolerance for the bf16 operand rounding.
    supb, sdnb, wbf = prepare(params, x.shape, nChannels, multiply,
                              conv_dtype=jnp.bfloat16)
    out = jax.block_until_ready(fwd(x, supb, sdnb, wbf))
    assert out.shape == (N, nChannels, H, W)
    np.testing.assert_allclose(np.asarray(out), np.asarray(ref),
                               rtol=2e-2, atol=2e-2)

    print("KERNEL_OK")
</pallas_src>

<mosaic_0001>
module attributes {stable_mosaic.version = 11 : i64} {
  func.func @kernel(%arg0: i32, %arg1: memref<32x64xf32, #tpu.memory_space<vmem>>, %arg2: memref<32x32xf32, #tpu.memory_space<vmem>>, %arg3: memref<32x32xf32, #tpu.memory_space<vmem>>, %arg4: memref<3x64x128xf32, #tpu.memory_space<vmem>>, %arg5: memref<1x128xf32, #tpu.memory_space<vmem>>, %arg6: memref<128x128xf32, #tpu.memory_space<vmem>>, %arg7: memref<1x128xf32, #tpu.memory_space<vmem>>, %arg8: memref<1x128xf32, #tpu.memory_space<vmem>>, %arg9: memref<3x128x64xf32, #tpu.memory_space<vmem>>, %arg10: memref<1x64xf32, #tpu.memory_space<vmem>>, %arg11: memref<64x64xf32, #tpu.memory_space<vmem>>, %arg12: memref<1x64xf32, #tpu.memory_space<vmem>>, %arg13: memref<1x64xf32, #tpu.memory_space<vmem>>, %arg14: memref<3x64x128xf32, #tpu.memory_space<vmem>>, %arg15: memref<1x128xf32, #tpu.memory_space<vmem>>, %arg16: memref<128x128xf32, #tpu.memory_space<vmem>>, %arg17: memref<1x128xf32, #tpu.memory_space<vmem>>, %arg18: memref<1x128xf32, #tpu.memory_space<vmem>>, %arg19: memref<3x128x64xf32, #tpu.memory_space<vmem>>, %arg20: memref<1x64xf32, #tpu.memory_space<vmem>>, %arg21: memref<64x64xf32, #tpu.memory_space<vmem>>, %arg22: memref<1x64xf32, #tpu.memory_space<vmem>>, %arg23: memref<1x64xf32, #tpu.memory_space<vmem>>, %arg24: memref<3x64x128xf32, #tpu.memory_space<vmem>>, %arg25: memref<1x128xf32, #tpu.memory_space<vmem>>, %arg26: memref<3x128x128xf32, #tpu.memory_space<vmem>>, %arg27: memref<1x128xf32, #tpu.memory_space<vmem>>, %arg28: memref<32x128xf32, #tpu.memory_space<vmem>>) attributes {dimension_semantics = [#tpu.dimension_semantics<arbitrary>], iteration_bounds = array<i64: 1>, scalar_prefetch = 0 : i64, scratch_operands = 0 : i64, tpu.core_type = #tpu.core_type<tc>, window_params = [{pipeline_mode = #tpu.pipeline_mode<synchronous>, transform_indices = @transform_0, window_bounds = array<i64: 32, 64>}, {pipeline_mode = #tpu.pipeline_mode<synchronous>, transform_indices = @transform_1, window_bounds = array<i64: 32, 32>}, {pipeline_mode = #tpu.pipeline_mode<synchronous>, transform_indices = @transform_2, window_bounds = array<i64: 32, 32>}, {pipeline_mode = #tpu.pipeline_mode<synchronous>, transform_indices = @transform_3, window_bounds = array<i64: 3, 64, 128>}, {pipeline_mode = #tpu.pipeline_mode<synchronous>, transform_indices = @transform_4, window_bounds = array<i64: 1, 128>}, {pipeline_mode = #tpu.pipeline_mode<synchronous>, transform_indices = @transform_5, window_bounds = array<i64: 128, 128>}, {pipeline_mode = #tpu.pipeline_mode<synchronous>, transform_indices = @transform_6, window_bounds = array<i64: 1, 128>}, {pipeline_mode = #tpu.pipeline_mode<synchronous>, transform_indices = @transform_7, window_bounds = array<i64: 1, 128>}, {pipeline_mode = #tpu.pipeline_mode<synchronous>, transform_indices = @transform_8, window_bounds = array<i64: 3, 128, 64>}, {pipeline_mode = #tpu.pipeline_mode<synchronous>, transform_indices = @transform_9, window_bounds = array<i64: 1, 64>}, {pipeline_mode = #tpu.pipeline_mode<synchronous>, transform_indices = @transform_10, window_bounds = array<i64: 64, 64>}, {pipeline_mode = #tpu.pipeline_mode<synchronous>, transform_indices = @transform_11, window_bounds = array<i64: 1, 64>}, {pipeline_mode = #tpu.pipeline_mode<synchronous>, transform_indices = @transform_12, window_bounds = array<i64: 1, 64>}, {pipeline_mode = #tpu.pipeline_mode<synchronous>, transform_indices = @transform_13, window_bounds = array<i64: 3, 64, 128>}, {pipeline_mode = #tpu.pipeline_mode<synchronous>, transform_indices = @transform_14, window_bounds = array<i64: 1, 128>}, {pipeline_mode = #tpu.pipeline_mode<synchronous>, transform_indices = @transform_15, window_bounds = array<i64: 128, 128>}, {pipeline_mode = #tpu.pipeline_mode<synchronous>, transform_indices = @transform_16, window_bounds = array<i64: 1, 128>}, {pipeline_mode = #tpu.pipeline_mode<synchronous>, transform_indices = @transform_17, window_bounds = array<i64: 1, 128>}, {pipeline_mode = #tpu.pipeline_mode<synchronous>, transform_indices = @transform_18, window_bounds = array<i64: 3, 128, 64>}, {pipeline_mode = #tpu.pipeline_mode<synchronous>, transform_indices = @transform_19, window_bounds = array<i64: 1, 64>}, {pipeline_mode = #tpu.pipeline_mode<synchronous>, transform_indices = @transform_20, window_bounds = array<i64: 64, 64>}, {pipeline_mode = #tpu.pipeline_mode<synchronous>, transform_indices = @transform_21, window_bounds = array<i64: 1, 64>}, {pipeline_mode = #tpu.pipeline_mode<synchronous>, transform_indices = @transform_22, window_bounds = array<i64: 1, 64>}, {pipeline_mode = #tpu.pipeline_mode<synchronous>, transform_indices = @transform_23, window_bounds = array<i64: 3, 64, 128>}, {pipeline_mode = #tpu.pipeline_mode<synchronous>, transform_indices = @transform_24, window_bounds = array<i64: 1, 128>}, {pipeline_mode = #tpu.pipeline_mode<synchronous>, transform_indices = @transform_25, window_bounds = array<i64: 3, 128, 128>}, {pipeline_mode = #tpu.pipeline_mode<synchronous>, transform_indices = @transform_26, window_bounds = array<i64: 1, 128>}, {pipeline_mode = #tpu.pipeline_mode<synchronous>, transform_indices = @transform_27, window_bounds = array<i64: 32, 128>}]} {
    %c0 = arith.constant 0 : index
    %c0_0 = arith.constant 0 : index
    %0 = vector.load %arg1[%c0, %c0_0] : memref<32x64xf32, #tpu.memory_space<vmem>>, vector<32x64xf32>
    %c0_1 = arith.constant 0 : index
    %c0_2 = arith.constant 0 : index
    %1 = vector.load %arg2[%c0_1, %c0_2] : memref<32x32xf32, #tpu.memory_space<vmem>>, vector<32x32xf32>
    %cst = arith.constant dense<0.000000e+00> : vector<32x64xf32>
    %2 = tpu.matmul %1, %0, %cst {dimension_numbers = #tpu.dot_dimension_numbers<[1], [0], [0], [1], [0, 0, 1, 1], [], []>} : vector<32x32xf32>, vector<32x64xf32>, vector<32x64xf32> -> vector<32x64xf32>
    %c0_3 = arith.constant 0 : index
    %c0_4 = arith.constant 0 : index
    %3 = vector.load %arg3[%c0_3, %c0_4] : memref<32x32xf32, #tpu.memory_space<vmem>>, vector<32x32xf32>
    %cst_5 = arith.constant dense<0.000000e+00> : vector<32x64xf32>
    %4 = tpu.matmul %3, %0, %cst_5 {dimension_numbers = #tpu.dot_dimension_numbers<[1], [0], [0], [1], [0, 0, 1, 1], [], []>} : vector<32x32xf32>, vector<32x64xf32>, vector<32x64xf32> -> vector<32x64xf32>
    %c0_6 = arith.constant 0 : index
    %c0_7 = arith.constant 0 : index
    %c0_8 = arith.constant 0 : index
    %5 = vector.load %arg4[%c0_6, %c0_7, %c0_8] : memref<3x64x128xf32, #tpu.memory_space<vmem>>, vector<1x64x128xf32>
    %6 = vector.shape_cast %5 : vector<1x64x128xf32> to vector<64x128xf32>
    %cst_9 = arith.constant dense<0.000000e+00> : vector<32x128xf32>
    %7 = tpu.matmul %2, %6, %cst_9 {dimension_numbers = #tpu.dot_dimension_numbers<[1], [0], [0], [1], [0, 0, 1, 1], [], []>} : vector<32x64xf32>, vector<64x128xf32>, vector<32x128xf32> -> vector<32x128xf32>
    %c1 = arith.constant 1 : index
    %c0_10 = arith.constant 0 : index
    %c0_11 = arith.constant 0 : index
    %8 = vector.load %arg4[%c1, %c0_10, %c0_11] : memref<3x64x128xf32, #tpu.memory_space<vmem>>, vector<1x64x128xf32>
    %9 = vector.shape_cast %8 : vector<1x64x128xf32> to vector<64x128xf32>
    %cst_12 = arith.constant dense<0.000000e+00> : vector<32x128xf32>
    %10 = tpu.matmul %0, %9, %cst_12 {dimension_numbers = #tpu.dot_dimension_numbers<[1], [0], [0], [1], [0, 0, 1, 1], [], []>} : vector<32x64xf32>, vector<64x128xf32>, vector<32x128xf32> -> vector<32x128xf32>
    %11 = arith.addf %7, %10 : vector<32x128xf32>
    %c2 = arith.constant 2 : index
    %c0_13 = arith.constant 0 : index
    %c0_14 = arith.constant 0 : index
    %12 = vector.load %arg4[%c2, %c0_13, %c0_14] : memref<3x64x128xf32, #tpu.memory_space<vmem>>, vector<1x64x128xf32>
    %13 = vector.shape_cast %12 : vector<1x64x128xf32> to vector<64x128xf32>
    %cst_15 = arith.constant dense<0.000000e+00> : vector<32x128xf32>
    %14 = tpu.matmul %4, %13, %cst_15 {dimension_numbers = #tpu.dot_dimension_numbers<[1], [0], [0], [1], [0, 0, 1, 1], [], []>} : vector<32x64xf32>, vector<64x128xf32>, vector<32x128xf32> -> vector<32x128xf32>
    %15 = arith.addf %11, %14 : vector<32x128xf32>
    %c0_16 = arith.constant 0 : index
    %c0_17 = arith.constant 0 : index
    %16 = vector.load %arg5[%c0_16, %c0_17] : memref<1x128xf32, #tpu.memory_space<vmem>>, vector<1x128xf32>
    %17 = vector.broadcast %16 : vector<1x128xf32> to vector<32x128xf32>
    %18 = arith.addf %15, %17 : vector<32x128xf32>
    %cst_18 = arith.constant 0.000000e+00 : f32
    %19 = vector.broadcast %cst_18 : f32 to vector<32x128xf32>
    %20 = arith.maximumf %18, %19 : vector<32x128xf32>
    %c0_19 = arith.constant 0 : index
    %c0_20 = arith.constant 0 : index
    %21 = vector.load %arg6[%c0_19, %c0_20] : memref<128x128xf32, #tpu.memory_space<vmem>>, vector<128x128xf32>
    %cst_21 = arith.constant dense<0.000000e+00> : vector<32x128xf32>
    %22 = tpu.matmul %20, %21, %cst_21 {dimension_numbers = #tpu.dot_dimension_numbers<[1], [0], [0], [1], [0, 0, 1, 1], [], []>} : vector<32x128xf32>, vector<128x128xf32>, vector<32x128xf32> -> vector<32x128xf32>
    %cst_22 = arith.constant dense<0.000000e+00> : vector<128xf32>
    %23 = vector.multi_reduction <add>, %22, %cst_22 [0] : vector<32x128xf32> to vector<128xf32>
    %24 = vector.shape_cast %23 : vector<128xf32> to vector<1x128xf32>
    %25 = arith.mulf %20, %20 : vector<32x128xf32>
    %cst_23 = arith.constant dense<0.000000e+00> : vector<32x128xf32>
    %26 = tpu.matmul %25, %21, %cst_23 {dimension_numbers = #tpu.dot_dimension_numbers<[1], [0], [0], [1], [0, 0, 1, 1], [], []>} : vector<32x128xf32>, vector<128x128xf32>, vector<32x128xf32> -> vector<32x128xf32>
    %cst_24 = arith.constant dense<0.000000e+00> : vector<128xf32>
    %27 = vector.multi_reduction <add>, %26, %cst_24 [0] : vector<32x128xf32> to vector<128xf32>
    %28 = vector.shape_cast %27 : vector<128xf32> to vector<1x128xf32>
    %cst_25 = arith.constant 0.001953125 : f32
    %29 = vector.broadcast %cst_25 : f32 to vector<1x128xf32>
    %30 = arith.mulf %24, %29 : vector<1x128xf32>
    %cst_26 = arith.constant 0.001953125 : f32
    %31 = vector.broadcast %cst_26 : f32 to vector<1x128xf32>
    %32 = arith.mulf %28, %31 : vector<1x128xf32>
    %33 = arith.mulf %30, %30 : vector<1x128xf32>
    %34 = arith.subf %32, %33 : vector<1x128xf32>
    %35 = vector.broadcast %30 : vector<1x128xf32> to vector<32x128xf32>
    %36 = arith.subf %20, %35 : vector<32x128xf32>
    %c0_27 = arith.constant 0 : index
    %c0_28 = arith.constant 0 : index
    %37 = vector.load %arg7[%c0_27, %c0_28] : memref<1x128xf32, #tpu.memory_space<vmem>>, vector<1x128xf32>
    %cst_29 = arith.constant 9.99999974E-6 : f32
    %38 = vector.broadcast %cst_29 : f32 to vector<1x128xf32>
    %39 = arith.addf %34, %38 : vector<1x128xf32>
    %40 = math.rsqrt %39 : vector<1x128xf32>
    %41 = arith.mulf %37, %40 : vector<1x128xf32>
    %42 = vector.broadcast %41 : vector<1x128xf32> to vector<32x128xf32>
    %43 = arith.mulf %36, %42 : vector<32x128xf32>
    %c0_30 = arith.constant 0 : index
    %c0_31 = arith.constant 0 : index
    %44 = vector.load %arg8[%c0_30, %c0_31] : memref<1x128xf32, #tpu.memory_space<vmem>>, vector<1x128xf32>
    %45 = vector.broadcast %44 : vector<1x128xf32> to vector<32x128xf32>
    %46 = arith.addf %43, %45 : vector<32x128xf32>
    %cst_32 = arith.constant 0.000000e+00 : f32
    %47 = vector.broadcast %cst_32 : f32 to vector<32x128xf32>
    %48 = arith.maximumf %46, %47 : vector<32x128xf32>
    %c0_33 = arith.constant 0 : index
    %c0_34 = arith.constant 0 : index
    %49 = vector.load %arg2[%c0_33, %c0_34] : memref<32x32xf32, #tpu.memory_space<vmem>>, vector<32x32xf32>
    %cst_35 = arith.constant dense<0.000000e+00> : vector<32x128xf32>
    %50 = tpu.matmul %49, %48, %cst_35 {dimension_numbers = #tpu.dot_dimension_numbers<[1], [0], [0], [1], [0, 0, 1, 1], [], []>} : vector<32x32xf32>, vector<32x128xf32>, vector<32x128xf32> -> vector<32x128xf32>
    %c0_36 = arith.constant 0 : index
    %c0_37 = arith.constant 0 : index
    %51 = vector.load %arg3[%c0_36, %c0_37] : memref<32x32xf32, #tpu.memory_space<vmem>>, vector<32x32xf32>
    %cst_38 = arith.constant dense<0.000000e+00> : vector<32x128xf32>
    %52 = tpu.matmul %51, %48, %cst_38 {dimension_numbers = #tpu.dot_dimension_numbers<[1], [0], [0], [1], [0, 0, 1, 1], [], []>} : vector<32x32xf32>, vector<32x128xf32>, vector<32x128xf32> -> vector<32x128xf32>
    %c0_39 = arith.constant 0 : index
    %c0_40 = arith.constant 0 : index
    %c0_41 = arith.constant 0 : index
    %53 = vector.load %arg9[%c0_39, %c0_40, %c0_41] : memref<3x128x64xf32, #tpu.memory_space<vmem>>, vector<1x128x64xf32>
    %54 = vector.shape_cast %53 : vector<1x128x64xf32> to vector<128x64xf32>
    %cst_42 = arith.constant dense<0.000000e+00> : vector<32x64xf32>
    %55 = tpu.matmul %50, %54, %cst_42 {dimension_numbers = #tpu.dot_dimension_numbers<[1], [0], [0], [1], [0, 0, 1, 1], [], []>} : vector<32x128xf32>, vector<128x64xf32>, vector<32x64xf32> -> vector<32x64xf32>
    %c1_43 = arith.constant 1 : index
    %c0_44 = arith.constant 0 : index
    %c0_45 = arith.constant 0 : index
    %56 = vector.load %arg9[%c1_43, %c0_44, %c0_45] : memref<3x128x64xf32, #tpu.memory_space<vmem>>, vector<1x128x64xf32>
    %57 = vector.shape_cast %56 : vector<1x128x64xf32> to vector<128x64xf32>
    %cst_46 = arith.constant dense<0.000000e+00> : vector<32x64xf32>
    %58 = tpu.matmul %48, %57, %cst_46 {dimension_numbers = #tpu.dot_dimension_numbers<[1], [0], [0], [1], [0, 0, 1, 1], [], []>} : vector<32x128xf32>, vector<128x64xf32>, vector<32x64xf32> -> vector<32x64xf32>
    %59 = arith.addf %55, %58 : vector<32x64xf32>
    %c2_47 = arith.constant 2 : index
    %c0_48 = arith.constant 0 : index
    %c0_49 = arith.constant 0 : index
    %60 = vector.load %arg9[%c2_47, %c0_48, %c0_49] : memref<3x128x64xf32, #tpu.memory_space<vmem>>, vector<1x128x64xf32>
    %61 = vector.shape_cast %60 : vector<1x128x64xf32> to vector<128x64xf32>
    %cst_50 = arith.constant dense<0.000000e+00> : vector<32x64xf32>
    %62 = tpu.matmul %52, %61, %cst_50 {dimension_numbers = #tpu.dot_dimension_numbers<[1], [0], [0], [1], [0, 0, 1, 1], [], []>} : vector<32x128xf32>, vector<128x64xf32>, vector<32x64xf32> -> vector<32x64xf32>
    %63 = arith.addf %59, %62 : vector<32x64xf32>
    %c0_51 = arith.constant 0 : index
    %c0_52 = arith.constant 0 : index
    %64 = vector.load %arg10[%c0_51, %c0_52] : memref<1x64xf32, #tpu.memory_space<vmem>>, vector<1x64xf32>
    %65 = vector.broadcast %64 : vector<1x64xf32> to vector<32x64xf32>
    %66 = arith.addf %63, %65 : vector<32x64xf32>
    %c0_53 = arith.constant 0 : index
    %c0_54 = arith.constant 0 : index
    %67 = vector.load %arg11[%c0_53, %c0_54] : memref<64x64xf32, #tpu.memory_space<vmem>>, vector<64x64xf32>
    %cst_55 = arith.constant dense<0.000000e+00> : vector<32x64xf32>
    %68 = tpu.matmul %66, %67, %cst_55 {dimension_numbers = #tpu.dot_dimension_numbers<[1], [0], [0], [1], [0, 0, 1, 1], [], []>} : vector<32x64xf32>, vector<64x64xf32>, vector<32x64xf32> -> vector<32x64xf32>
    %cst_56 = arith.constant dense<0.000000e+00> : vector<64xf32>
    %69 = vector.multi_reduction <add>, %68, %cst_56 [0] : vector<32x64xf32> to vector<64xf32>
    %70 = vector.shape_cast %69 : vector<64xf32> to vector<1x64xf32>
    %71 = arith.mulf %66, %66 : vector<32x64xf32>
    %cst_57 = arith.constant dense<0.000000e+00> : vector<32x64xf32>
    %72 = tpu.matmul %71, %67, %cst_57 {dimension_numbers = #tpu.dot_dimension_numbers<[1], [0], [0], [1], [0, 0, 1, 1], [], []>} : vector<32x64xf32>, vector<64x64xf32>, vector<32x64xf32> -> vector<32x64xf32>
    %cst_58 = arith.constant dense<0.000000e+00> : vector<64xf32>
    %73 = vector.multi_reduction <add>, %72, %cst_58 [0] : vector<32x64xf32> to vector<64xf32>
    %74 = vector.shape_cast %73 : vector<64xf32> to vector<1x64xf32>
    %cst_59 = arith.constant 0.001953125 : f32
    %75 = vector.broadcast %cst_59 : f32 to vector<1x64xf32>
    %76 = arith.mulf %70, %75 : vector<1x64xf32>
    %cst_60 = arith.constant 0.001953125 : f32
    %77 = vector.broadcast %cst_60 : f32 to vector<1x64xf32>
    %78 = arith.mulf %74, %77 : vector<1x64xf32>
    %79 = arith.mulf %76, %76 : vector<1x64xf32>
    %80 = arith.subf %78, %79 : vector<1x64xf32>
    %81 = vector.broadcast %76 : vector<1x64xf32> to vector<32x64xf32>
    %82 = arith.subf %66, %81 : vector<32x64xf32>
    %c0_61 = arith.constant 0 : index
    %c0_62 = arith.constant 0 : index
    %83 = vector.load %arg12[%c0_61, %c0_62] : memref<1x64xf32, #tpu.memory_space<vmem>>, vector<1x64xf32>
    %cst_63 = arith.constant 9.99999974E-6 : f32
    %84 = vector.broadcast %cst_63 : f32 to vector<1x64xf32>
    %85 = arith.addf %80, %84 : vector<1x64xf32>
    %86 = math.rsqrt %85 : vector<1x64xf32>
    %87 = arith.mulf %83, %86 : vector<1x64xf32>
    %88 = vector.broadcast %87 : vector<1x64xf32> to vector<32x64xf32>
    %89 = arith.mulf %82, %88 : vector<32x64xf32>
    %c0_64 = arith.constant 0 : index
    %c0_65 = arith.constant 0 : index
    %90 = vector.load %arg13[%c0_64, %c0_65] : memref<1x64xf32, #tpu.memory_space<vmem>>, vector<1x64xf32>
    %91 = vector.broadcast %90 : vector<1x64xf32> to vector<32x64xf32>
    %92 = arith.addf %89, %91 : vector<32x64xf32>
    %cst_66 = arith.constant 0.000000e+00 : f32
    %93 = vector.broadcast %cst_66 : f32 to vector<32x64xf32>
    %94 = arith.maximumf %92, %93 : vector<32x64xf32>
    %c0_67 = arith.constant 0 : index
    %c0_68 = arith.constant 0 : index
    %95 = vector.load %arg2[%c0_67, %c0_68] : memref<32x32xf32, #tpu.memory_space<vmem>>, vector<32x32xf32>
    %cst_69 = arith.constant dense<0.000000e+00> : vector<32x64xf32>
    %96 = tpu.matmul %95, %94, %cst_69 {dimension_numbers = #tpu.dot_dimension_numbers<[1], [0], [0], [1], [0, 0, 1, 1], [], []>} : vector<32x32xf32>, vector<32x64xf32>, vector<32x64xf32> -> vector<32x64xf32>
    %c0_70 = arith.constant 0 : index
    %c0_71 = arith.constant 0 : index
    %97 = vector.load %arg3[%c0_70, %c0_71] : memref<32x32xf32, #tpu.memory_space<vmem>>, vector<32x32xf32>
    %cst_72 = arith.constant dense<0.000000e+00> : vector<32x64xf32>
    %98 = tpu.matmul %97, %94, %cst_72 {dimension_numbers = #tpu.dot_dimension_numbers<[1], [0], [0], [1], [0, 0, 1, 1], [], []>} : vector<32x32xf32>, vector<32x64xf32>, vector<32x64xf32> -> vector<32x64xf32>
    %c0_73 = arith.constant 0 : index
    %c0_74 = arith.constant 0 : index
    %c0_75 = arith.constant 0 : index
    %99 = vector.load %arg14[%c0_73, %c0_74, %c0_75] : memref<3x64x128xf32, #tpu.memory_space<vmem>>, vector<1x64x128xf32>
    %100 = vector.shape_cast %99 : vector<1x64x128xf32> to vector<64x128xf32>
    %cst_76 = arith.constant dense<0.000000e+00> : vector<32x128xf32>
    %101 = tpu.matmul %96, %100, %cst_76 {dimension_numbers = #tpu.dot_dimension_numbers<[1], [0], [0], [1], [0, 0, 1, 1], [], []>} : vector<32x64xf32>, vector<64x128xf32>, vector<32x128xf32> -> vector<32x128xf32>
    %c1_77 = arith.constant 1 : index
    %c0_78 = arith.constant 0 : index
    %c0_79 = arith.constant 0 : index
    %102 = vector.load %arg14[%c1_77, %c0_78, %c0_79] : memref<3x64x128xf32, #tpu.memory_space<vmem>>, vector<1x64x128xf32>
    %103 = vector.shape_cast %102 : vector<1x64x128xf32> to vector<64x128xf32>
    %cst_80 = arith.constant dense<0.000000e+00> : vector<32x128xf32>
    %104 = tpu.matmul %94, %103, %cst_80 {dimension_numbers = #tpu.dot_dimension_numbers<[1], [0], [0], [1], [0, 0, 1, 1], [], []>} : vector<32x64xf32>, vector<64x128xf32>, vector<32x128xf32> -> vector<32x128xf32>
    %105 = arith.addf %101, %104 : vector<32x128xf32>
    %c2_81 = arith.constant 2 : index
    %c0_82 = arith.constant 0 : index
    %c0_83 = arith.constant 0 : index
    %106 = vector.load %arg14[%c2_81, %c0_82, %c0_83] : memref<3x64x128xf32, #tpu.memory_space<vmem>>, vector<1x64x128xf32>
    %107 = vector.shape_cast %106 : vector<1x64x128xf32> to vector<64x128xf32>
    %cst_84 = arith.constant dense<0.000000e+00> : vector<32x128xf32>
    %108 = tpu.matmul %98, %107, %cst_84 {dimension_numbers = #tpu.dot_dimension_numbers<[1], [0], [0], [1], [0, 0, 1, 1], [], []>} : vector<32x64xf32>, vector<64x128xf32>, vector<32x128xf32> -> vector<32x128xf32>
    %109 = arith.addf %105, %108 : vector<32x128xf32>
    %c0_85 = arith.constant 0 : index
    %c0_86 = arith.constant 0 : index
    %110 = vector.load %arg15[%c0_85, %c0_86] : memref<1x128xf32, #tpu.memory_space<vmem>>, vector<1x128xf32>
    %111 = vector.broadcast %110 : vector<1x128xf32> to vector<32x128xf32>
    %112 = arith.addf %109, %111 : vector<32x128xf32>
    %c0_87 = arith.constant 0 : index
    %c0_88 = arith.constant 0 : index
    %113 = vector.load %arg16[%c0_87, %c0_88] : memref<128x128xf32, #tpu.memory_space<vmem>>, vector<128x128xf32>
    %cst_89 = arith.constant dense<0.000000e+00> : vector<32x128xf32>
    %114 = tpu.matmul %112, %113, %cst_89 {dimension_numbers = #tpu.dot_dimension_numbers<[1], [0], [0], [1], [0, 0, 1, 1], [], []>} : vector<32x128xf32>, vector<128x128xf32>, vector<32x128xf32> -> vector<32x128xf32>
    %cst_90 = arith.constant dense<0.000000e+00> : vector<128xf32>
    %115 = vector.multi_reduction <add>, %114, %cst_90 [0] : vector<32x128xf32> to vector<128xf32>
    %116 = vector.shape_cast %115 : vector<128xf32> to vector<1x128xf32>
    %117 = arith.mulf %112, %112 : vector<32x128xf32>
    %cst_91 = arith.constant dense<0.000000e+00> : vector<32x128xf32>
    %118 = tpu.matmul %117, %113, %cst_91 {dimension_numbers = #tpu.dot_dimension_numbers<[1], [0], [0], [1], [0, 0, 1, 1], [], []>} : vector<32x128xf32>, vector<128x128xf32>, vector<32x128xf32> -> vector<32x128xf32>
    %cst_92 = arith.constant dense<0.000000e+00> : vector<128xf32>
    %119 = vector.multi_reduction <add>, %118, %cst_92 [0] : vector<32x128xf32> to vector<128xf32>
    %120 = vector.shape_cast %119 : vector<128xf32> to vector<1x128xf32>
    %cst_93 = arith.constant 0.001953125 : f32
    %121 = vector.broadcast %cst_93 : f32 to vector<1x128xf32>
    %122 = arith.mulf %116, %121 : vector<1x128xf32>
    %cst_94 = arith.constant 0.001953125 : f32
    %123 = vector.broadcast %cst_94 : f32 to vector<1x128xf32>
    %124 = arith.mulf %120, %123 : vector<1x128xf32>
    %125 = arith.mulf %122, %122 : vector<1x128xf32>
    %126 = arith.subf %124, %125 : vector<1x128xf32>
    %127 = vector.broadcast %122 : vector<1x128xf32> to vector<32x128xf32>
    %128 = arith.subf %112, %127 : vector<32x128xf32>
    %c0_95 = arith.constant 0 : index
    %c0_96 = arith.constant 0 : index
    %129 = vector.load %arg17[%c0_95, %c0_96] : memref<1x128xf32, #tpu.memory_space<vmem>>, vector<1x128xf32>
    %cst_97 = arith.constant 9.99999974E-6 : f32
    %130 = vector.broadcast %cst_97 : f32 to vector<1x128xf32>
    %131 = arith.addf %126, %130 : vector<1x128xf32>
    %132 = math.rsqrt %131 : vector<1x128xf32>
    %133 = arith.mulf %129, %132 : vector<1x128xf32>
    %134 = vector.broadcast %133 : vector<1x128xf32> to vector<32x128xf32>
    %135 = arith.mulf %128, %134 : vector<32x128xf32>
    %c0_98 = arith.constant 0 : index
    %c0_99 = arith.constant 0 : index
    %136 = vector.load %arg18[%c0_98, %c0_99] : memref<1x128xf32, #tpu.memory_space<vmem>>, vector<1x128xf32>
    %137 = vector.broadcast %136 : vector<1x128xf32> to vector<32x128xf32>
    %138 = arith.addf %135, %137 : vector<32x128xf32>
    %cst_100 = arith.constant 0.000000e+00 : f32
    %139 = vector.broadcast %cst_100 : f32 to vector<32x128xf32>
    %140 = arith.maximumf %138, %139 : vector<32x128xf32>
    %c0_101 = arith.constant 0 : index
    %c0_102 = arith.constant 0 : index
    %141 = vector.load %arg2[%c0_101, %c0_102] : memref<32x32xf32, #tpu.memory_space<vmem>>, vector<32x32xf32>
    %cst_103 = arith.constant dense<0.000000e+00> : vector<32x128xf32>
    %142 = tpu.matmul %141, %140, %cst_103 {dimension_numbers = #tpu.dot_dimension_numbers<[1], [0], [0], [1], [0, 0, 1, 1], [], []>} : vector<32x32xf32>, vector<32x128xf32>, vector<32x128xf32> -> vector<32x128xf32>
    %c0_104 = arith.constant 0 : index
    %c0_105 = arith.constant 0 : index
    %143 = vector.load %arg3[%c0_104, %c0_105] : memref<32x32xf32, #tpu.memory_space<vmem>>, vector<32x32xf32>
    %cst_106 = arith.constant dense<0.000000e+00> : vector<32x128xf32>
    %144 = tpu.matmul %143, %140, %cst_106 {dimension_numbers = #tpu.dot_dimension_numbers<[1], [0], [0], [1], [0, 0, 1, 1], [], []>} : vector<32x32xf32>, vector<32x128xf32>, vector<32x128xf32> -> vector<32x128xf32>
    %c0_107 = arith.constant 0 : index
    %c0_108 = arith.constant 0 : index
    %c0_109 = arith.constant 0 : index
    %145 = vector.load %arg19[%c0_107, %c0_108, %c0_109] : memref<3x128x64xf32, #tpu.memory_space<vmem>>, vector<1x128x64xf32>
    %146 = vector.shape_cast %145 : vector<1x128x64xf32> to vector<128x64xf32>
    %cst_110 = arith.constant dense<0.000000e+00> : vector<32x64xf32>
    %147 = tpu.matmul %142, %146, %cst_110 {dimension_numbers = #tpu.dot_dimension_numbers<[1], [0], [0], [1], [0, 0, 1, 1], [], []>} : vector<32x128xf32>, vector<128x64xf32>, vector<32x64xf32> -> vector<32x64xf32>
    %c1_111 = arith.constant 1 : index
    %c0_112 = arith.constant 0 : index
    %c0_113 = arith.constant 0 : index
    %148 = vector.load %arg19[%c1_111, %c0_112, %c0_113] : memref<3x128x64xf32, #tpu.memory_space<vmem>>, vector<1x128x64xf32>
    %149 = vector.shape_cast %148 : vector<1x128x64xf32> to vector<128x64xf32>
    %cst_114 = arith.constant dense<0.000000e+00> : vector<32x64xf32>
    %150 = tpu.matmul %140, %149, %cst_114 {dimension_numbers = #tpu.dot_dimension_numbers<[1], [0], [0], [1], [0, 0, 1, 1], [], []>} : vector<32x128xf32>, vector<128x64xf32>, vector<32x64xf32> -> vector<32x64xf32>
    %151 = arith.addf %147, %150 : vector<32x64xf32>
    %c2_115 = arith.constant 2 : index
    %c0_116 = arith.constant 0 : index
    %c0_117 = arith.constant 0 : index
    %152 = vector.load %arg19[%c2_115, %c0_116, %c0_117] : memref<3x128x64xf32, #tpu.memory_space<vmem>>, vector<1x128x64xf32>
    %153 = vector.shape_cast %152 : vector<1x128x64xf32> to vector<128x64xf32>
    %cst_118 = arith.constant dense<0.000000e+00> : vector<32x64xf32>
    %154 = tpu.matmul %144, %153, %cst_118 {dimension_numbers = #tpu.dot_dimension_numbers<[1], [0], [0], [1], [0, 0, 1, 1], [], []>} : vector<32x128xf32>, vector<128x64xf32>, vector<32x64xf32> -> vector<32x64xf32>
    %155 = arith.addf %151, %154 : vector<32x64xf32>
    %c0_119 = arith.constant 0 : index
    %c0_120 = arith.constant 0 : index
    %156 = vector.load %arg20[%c0_119, %c0_120] : memref<1x64xf32, #tpu.memory_space<vmem>>, vector<1x64xf32>
    %157 = vector.broadcast %156 : vector<1x64xf32> to vector<32x64xf32>
    %158 = arith.addf %155, %157 : vector<32x64xf32>
    %c0_121 = arith.constant 0 : index
    %c0_122 = arith.constant 0 : index
    %159 = vector.load %arg21[%c0_121, %c0_122] : memref<64x64xf32, #tpu.memory_space<vmem>>, vector<64x64xf32>
    %cst_123 = arith.constant dense<0.000000e+00> : vector<32x64xf32>
    %160 = tpu.matmul %158, %159, %cst_123 {dimension_numbers = #tpu.dot_dimension_numbers<[1], [0], [0], [1], [0, 0, 1, 1], [], []>} : vector<32x64xf32>, vector<64x64xf32>, vector<32x64xf32> -> vector<32x64xf32>
    %cst_124 = arith.constant dense<0.000000e+00> : vector<64xf32>
    %161 = vector.multi_reduction <add>, %160, %cst_124 [0] : vector<32x64xf32> to vector<64xf32>
    %162 = vector.shape_cast %161 : vector<64xf32> to vector<1x64xf32>
    %163 = arith.mulf %158, %158 : vector<32x64xf32>
    %cst_125 = arith.constant dense<0.000000e+00> : vector<32x64xf32>
    %164 = tpu.matmul %163, %159, %cst_125 {dimension_numbers = #tpu.dot_dimension_numbers<[1], [0], [0], [1], [0, 0, 1, 1], [], []>} : vector<32x64xf32>, vector<64x64xf32>, vector<32x64xf32> -> vector<32x64xf32>
    %cst_126 = arith.constant dense<0.000000e+00> : vector<64xf32>
    %165 = vector.multi_reduction <add>, %164, %cst_126 [0] : vector<32x64xf32> to vector<64xf32>
    %166 = vector.shape_cast %165 : vector<64xf32> to vector<1x64xf32>
    %cst_127 = arith.constant 0.001953125 : f32
    %167 = vector.broadcast %cst_127 : f32 to vector<1x64xf32>
    %168 = arith.mulf %162, %167 : vector<1x64xf32>
    %cst_128 = arith.constant 0.001953125 : f32
    %169 = vector.broadcast %cst_128 : f32 to vector<1x64xf32>
    %170 = arith.mulf %166, %169 : vector<1x64xf32>
    %171 = arith.mulf %168, %168 : vector<1x64xf32>
    %172 = arith.subf %170, %171 : vector<1x64xf32>
    %173 = vector.broadcast %168 : vector<1x64xf32> to vector<32x64xf32>
    %174 = arith.subf %158, %173 : vector<32x64xf32>
    %c0_129 = arith.constant 0 : index
    %c0_130 = arith.constant 0 : index
    %175 = vector.load %arg22[%c0_129, %c0_130] : memref<1x64xf32, #tpu.memory_space<vmem>>, vector<1x64xf32>
    %cst_131 = arith.constant 9.99999974E-6 : f32
    %176 = vector.broadcast %cst_131 : f32 to vector<1x64xf32>
    %177 = arith.addf %172, %176 : vector<1x64xf32>
    %178 = math.rsqrt %177 : vector<1x64xf32>
    %179 = arith.mulf %175, %178 : vector<1x64xf32>
    %180 = vector.broadcast %179 : vector<1x64xf32> to vector<32x64xf32>
    %181 = arith.mulf %174, %180 : vector<32x64xf32>
    %c0_132 = arith.constant 0 : index
    %c0_133 = arith.constant 0 : index
    %182 = vector.load %arg23[%c0_132, %c0_133] : memref<1x64xf32, #tpu.memory_space<vmem>>, vector<1x64xf32>
    %183 = vector.broadcast %182 : vector<1x64xf32> to vector<32x64xf32>
    %184 = arith.addf %181, %183 : vector<32x64xf32>
    %cst_134 = arith.constant 0.000000e+00 : f32
    %185 = vector.broadcast %cst_134 : f32 to vector<32x64xf32>
    %186 = arith.maximumf %184, %185 : vector<32x64xf32>
    %c0_135 = arith.constant 0 : index
    %c0_136 = arith.constant 0 : index
    %187 = vector.load %arg2[%c0_135, %c0_136] : memref<32x32xf32, #tpu.memory_space<vmem>>, vector<32x32xf32>
    %cst_137 = arith.constant dense<0.000000e+00> : vector<32x64xf32>
    %188 = tpu.matmul %187, %186, %cst_137 {dimension_numbers = #tpu.dot_dimension_numbers<[1], [0], [0], [1], [0, 0, 1, 1], [], []>} : vector<32x32xf32>, vector<32x64xf32>, vector<32x64xf32> -> vector<32x64xf32>
    %c0_138 = arith.constant 0 : index
    %c0_139 = arith.constant 0 : index
    %189 = vector.load %arg3[%c0_138, %c0_139] : memref<32x32xf32, #tpu.memory_space<vmem>>, vector<32x32xf32>
    %cst_140 = arith.constant dense<0.000000e+00> : vector<32x64xf32>
    %190 = tpu.matmul %189, %186, %cst_140 {dimension_numbers = #tpu.dot_dimension_numbers<[1], [0], [0], [1], [0, 0, 1, 1], [], []>} : vector<32x32xf32>, vector<32x64xf32>, vector<32x64xf32> -> vector<32x64xf32>
    %c0_141 = arith.constant 0 : index
    %c0_142 = arith.constant 0 : index
    %c0_143 = arith.constant 0 : index
    %191 = vector.load %arg24[%c0_141, %c0_142, %c0_143] : memref<3x64x128xf32, #tpu.memory_space<vmem>>, vector<1x64x128xf32>
    %192 = vector.shape_cast %191 : vector<1x64x128xf32> to vector<64x128xf32>
    %cst_144 = arith.constant dense<0.000000e+00> : vector<32x128xf32>
    %193 = tpu.matmul %188, %192, %cst_144 {dimension_numbers = #tpu.dot_dimension_numbers<[1], [0], [0], [1], [0, 0, 1, 1], [], []>} : vector<32x64xf32>, vector<64x128xf32>, vector<32x128xf32> -> vector<32x128xf32>
    %c1_145 = arith.constant 1 : index
    %c0_146 = arith.constant 0 : index
    %c0_147 = arith.constant 0 : index
    %194 = vector.load %arg24[%c1_145, %c0_146, %c0_147] : memref<3x64x128xf32, #tpu.memory_space<vmem>>, vector<1x64x128xf32>
    %195 = vector.shape_cast %194 : vector<1x64x128xf32> to vector<64x128xf32>
    %cst_148 = arith.constant dense<0.000000e+00> : vector<32x128xf32>
    %196 = tpu.matmul %186, %195, %cst_148 {dimension_numbers = #tpu.dot_dimension_numbers<[1], [0], [0], [1], [0, 0, 1, 1], [], []>} : vector<32x64xf32>, vector<64x128xf32>, vector<32x128xf32> -> vector<32x128xf32>
    %197 = arith.addf %193, %196 : vector<32x128xf32>
    %c2_149 = arith.constant 2 : index
    %c0_150 = arith.constant 0 : index
    %c0_151 = arith.constant 0 : index
    %198 = vector.load %arg24[%c2_149, %c0_150, %c0_151] : memref<3x64x128xf32, #tpu.memory_space<vmem>>, vector<1x64x128xf32>
    %199 = vector.shape_cast %198 : vector<1x64x128xf32> to vector<64x128xf32>
    %cst_152 = arith.constant dense<0.000000e+00> : vector<32x128xf32>
    %200 = tpu.matmul %190, %199, %cst_152 {dimension_numbers = #tpu.dot_dimension_numbers<[1], [0], [0], [1], [0, 0, 1, 1], [], []>} : vector<32x64xf32>, vector<64x128xf32>, vector<32x128xf32> -> vector<32x128xf32>
    %201 = arith.addf %197, %200 : vector<32x128xf32>
    %c0_153 = arith.constant 0 : index
    %c0_154 = arith.constant 0 : index
    %202 = vector.load %arg25[%c0_153, %c0_154] : memref<1x128xf32, #tpu.memory_space<vmem>>, vector<1x128xf32>
    %203 = vector.broadcast %202 : vector<1x128xf32> to vector<32x128xf32>
    %204 = arith.addf %201, %203 : vector<32x128xf32>
    %c0_155 = arith.constant 0 : index
    %c0_156 = arith.constant 0 : index
    %205 = vector.load %arg2[%c0_155, %c0_156] : memref<32x32xf32, #tpu.memory_space<vmem>>, vector<32x32xf32>
    %cst_157 = arith.constant dense<0.000000e+00> : vector<32x128xf32>
    %206 = tpu.matmul %205, %204, %cst_157 {dimension_numbers = #tpu.dot_dimension_numbers<[1], [0], [0], [1], [0, 0, 1, 1], [], []>} : vector<32x32xf32>, vector<32x128xf32>, vector<32x128xf32> -> vector<32x128xf32>
    %c0_158 = arith.constant 0 : index
    %c0_159 = arith.constant 0 : index
    %207 = vector.load %arg3[%c0_158, %c0_159] : memref<32x32xf32, #tpu.memory_space<vmem>>, vector<32x32xf32>
    %cst_160 = arith.constant dense<0.000000e+00> : vector<32x128xf32>
    %208 = tpu.matmul %207, %204, %cst_160 {dimension_numbers = #tpu.dot_dimension_numbers<[1], [0], [0], [1], [0, 0, 1, 1], [], []>} : vector<32x32xf32>, vector<32x128xf32>, vector<32x128xf32> -> vector<32x128xf32>
    %c0_161 = arith.constant 0 : index
    %c0_162 = arith.constant 0 : index
    %c0_163 = arith.constant 0 : index
    %209 = vector.load %arg26[%c0_161, %c0_162, %c0_163] : memref<3x128x128xf32, #tpu.memory_space<vmem>>, vector<1x128x128xf32>
    %210 = vector.shape_cast %209 : vector<1x128x128xf32> to vector<128x128xf32>
    %cst_164 = arith.constant dense<0.000000e+00> : vector<32x128xf32>
    %211 = tpu.matmul %206, %210, %cst_164 {dimension_numbers = #tpu.dot_dimension_numbers<[1], [0], [0], [1], [0, 0, 1, 1], [], []>} : vector<32x128xf32>, vector<128x128xf32>, vector<32x128xf32> -> vector<32x128xf32>
    %c1_165 = arith.constant 1 : index
    %c0_166 = arith.constant 0 : index
    %c0_167 = arith.constant 0 : index
    %212 = vector.load %arg26[%c1_165, %c0_166, %c0_167] : memref<3x128x128xf32, #tpu.memory_space<vmem>>, vector<1x128x128xf32>
    %213 = vector.shape_cast %212 : vector<1x128x128xf32> to vector<128x128xf32>
    %cst_168 = arith.constant dense<0.000000e+00> : vector<32x128xf32>
    %214 = tpu.matmul %204, %213, %cst_168 {dimension_numbers = #tpu.dot_dimension_numbers<[1], [0], [0], [1], [0, 0, 1, 1], [], []>} : vector<32x128xf32>, vector<128x128xf32>, vector<32x128xf32> -> vector<32x128xf32>
    %215 = arith.addf %211, %214 : vector<32x128xf32>
    %c2_169 = arith.constant 2 : index
    %c0_170 = arith.constant 0 : index
    %c0_171 = arith.constant 0 : index
    %216 = vector.load %arg26[%c2_169, %c0_170, %c0_171] : memref<3x128x128xf32, #tpu.memory_space<vmem>>, vector<1x128x128xf32>
    %217 = vector.shape_cast %216 : vector<1x128x128xf32> to vector<128x128xf32>
    %cst_172 = arith.constant dense<0.000000e+00> : vector<32x128xf32>
    %218 = tpu.matmul %208, %217, %cst_172 {dimension_numbers = #tpu.dot_dimension_numbers<[1], [0], [0], [1], [0, 0, 1, 1], [], []>} : vector<32x128xf32>, vector<128x128xf32>, vector<32x128xf32> -> vector<32x128xf32>
    %219 = arith.addf %215, %218 : vector<32x128xf32>
    %c0_173 = arith.constant 0 : index
    %c0_174 = arith.constant 0 : index
    %220 = vector.load %arg27[%c0_173, %c0_174] : memref<1x128xf32, #tpu.memory_space<vmem>>, vector<1x128xf32>
    %221 = vector.broadcast %220 : vector<1x128xf32> to vector<32x128xf32>
    %222 = arith.addf %219, %221 : vector<32x128xf32>
    %c0_175 = arith.constant 0 : index
    %c0_176 = arith.constant 0 : index
    %223 = vector.load %arg28[%c0_175, %c0_176] : memref<32x128xf32, #tpu.memory_space<vmem>>, vector<32x128xf32>
    tpu.vector_store %arg28[%c0_175, %c0_176], %222 {strides = array<i32>} : memref<32x128xf32, #tpu.memory_space<vmem>>, vector<32x128xf32>,
    return
  }
  func.func @transform_0(%arg0: i32) -> (i32, i32) {
    %c0_i32 = arith.constant 0 : i32
    %c0_i32_0 = arith.constant 0 : i32
    %c0_i32_1 = arith.constant 0 : i32
    return %c0_i32, %c0_i32_0 : i32, i32
  }
  func.func @transform_1(%arg0: i32) -> (i32, i32) {
    %c0_i32 = arith.constant 0 : i32
    %c0_i32_0 = arith.constant 0 : i32
    %c0_i32_1 = arith.constant 0 : i32
    return %c0_i32, %c0_i32_0 : i32, i32
  }
  func.func @transform_2(%arg0: i32) -> (i32, i32) {
    %c0_i32 = arith.constant 0 : i32
    %c0_i32_0 = arith.constant 0 : i32
    %c0_i32_1 = arith.constant 0 : i32
    return %c0_i32, %c0_i32_0 : i32, i32
  }
  func.func @transform_3(%arg0: i32) -> (i32, i32, i32) {
    %c0_i32 = arith.constant 0 : i32
    %c0_i32_0 = arith.constant 0 : i32
    %c0_i32_1 = arith.constant 0 : i32
    %c0_i32_2 = arith.constant 0 : i32
    return %c0_i32, %c0_i32_0, %c0_i32_1 : i32, i32, i32
  }
  func.func @transform_4(%arg0: i32) -> (i32, i32) {
    %c0_i32 = arith.constant 0 : i32
    %c0_i32_0 = arith.constant 0 : i32
    %c0_i32_1 = arith.constant 0 : i32
    return %c0_i32, %c0_i32_0 : i32, i32
  }
  func.func @transform_5(%arg0: i32) -> (i32, i32) {
    %c0_i32 = arith.constant 0 : i32
    %c0_i32_0 = arith.constant 0 : i32
    %c0_i32_1 = arith.constant 0 : i32
    return %c0_i32, %c0_i32_0 : i32, i32
  }
  func.func @transform_6(%arg0: i32) -> (i32, i32) {
    %c0_i32 = arith.constant 0 : i32
    %c0_i32_0 = arith.constant 0 : i32
    %c0_i32_1 = arith.constant 0 : i32
    return %c0_i32, %c0_i32_0 : i32, i32
  }
  func.func @transform_7(%arg0: i32) -> (i32, i32) {
    %c0_i32 = arith.constant 0 : i32
    %c0_i32_0 = arith.constant 0 : i32
    %c0_i32_1 = arith.constant 0 : i32
    return %c0_i32, %c0_i32_0 : i32, i32
  }
  func.func @transform_8(%arg0: i32) -> (i32, i32, i32) {
    %c0_i32 = arith.constant 0 : i32
    %c0_i32_0 = arith.constant 0 : i32
    %c0_i32_1 = arith.constant 0 : i32
    %c0_i32_2 = arith.constant 0 : i32
    return %c0_i32, %c0_i32_0, %c0_i32_1 : i32, i32, i32
  }
  func.func @transform_9(%arg0: i32) -> (i32, i32) {
    %c0_i32 = arith.constant 0 : i32
    %c0_i32_0 = arith.constant 0 : i32
    %c0_i32_1 = arith.constant 0 : i32
    return %c0_i32, %c0_i32_0 : i32, i32
  }
  func.func @transform_10(%arg0: i32) -> (i32, i32) {
    %c0_i32 = arith.constant 0 : i32
    %c0_i32_0 = arith.constant 0 : i32
    %c0_i32_1 = arith.constant 0 : i32
    return %c0_i32, %c0_i32_0 : i32, i32
  }
  func.func @transform_11(%arg0: i32) -> (i32, i32) {
    %c0_i32 = arith.constant 0 : i32
    %c0_i32_0 = arith.constant 0 : i32
    %c0_i32_1 = arith.constant 0 : i32
    return %c0_i32, %c0_i32_0 : i32, i32
  }
  func.func @transform_12(%arg0: i32) -> (i32, i32) {
    %c0_i32 = arith.constant 0 : i32
    %c0_i32_0 = arith.constant 0 : i32
    %c0_i32_1 = arith.constant 0 : i32
    return %c0_i32, %c0_i32_0 : i32, i32
  }
  func.func @transform_13(%arg0: i32) -> (i32, i32, i32) {
    %c0_i32 = arith.constant 0 : i32
    %c0_i32_0 = arith.constant 0 : i32
    %c0_i32_1 = arith.constant 0 : i32
    %c0_i32_2 = arith.constant 0 : i32
    return %c0_i32, %c0_i32_0, %c0_i32_1 : i32, i32, i32
  }
  func.func @transform_14(%arg0: i32) -> (i32, i32) {
    %c0_i32 = arith.constant 0 : i32
    %c0_i32_0 = arith.constant 0 : i32
    %c0_i32_1 = arith.constant 0 : i32
    return %c0_i32, %c0_i32_0 : i32, i32
  }
  func.func @transform_15(%arg0: i32) -> (i32, i32) {
    %c0_i32 = arith.constant 0 : i32
    %c0_i32_0 = arith.constant 0 : i32
    %c0_i32_1 = arith.constant 0 : i32
    return %c0_i32, %c0_i32_0 : i32, i32
  }
  func.func @transform_16(%arg0: i32) -> (i32, i32) {
    %c0_i32 = arith.constant 0 : i32
    %c0_i32_0 = arith.constant 0 : i32
    %c0_i32_1 = arith.constant 0 : i32
    return %c0_i32, %c0_i32_0 : i32, i32
  }
  func.func @transform_17(%arg0: i32) -> (i32, i32) {
    %c0_i32 = arith.constant 0 : i32
    %c0_i32_0 = arith.constant 0 : i32
    %c0_i32_1 = arith.constant 0 : i32
    return %c0_i32, %c0_i32_0 : i32, i32
  }
  func.func @transform_18(%arg0: i32) -> (i32, i32, i32) {
    %c0_i32 = arith.constant 0 : i32
    %c0_i32_0 = arith.constant 0 : i32
    %c0_i32_1 = arith.constant 0 : i32
    %c0_i32_2 = arith.constant 0 : i32
    return %c0_i32, %c0_i32_0, %c0_i32_1 : i32, i32, i32
  }
  func.func @transform_19(%arg0: i32) -> (i32, i32) {
    %c0_i32 = arith.constant 0 : i32
    %c0_i32_0 = arith.constant 0 : i32
    %c0_i32_1 = arith.constant 0 : i32
    return %c0_i32, %c0_i32_0 : i32, i32
  }
  func.func @transform_20(%arg0: i32) -> (i32, i32) {
    %c0_i32 = arith.constant 0 : i32
    %c0_i32_0 = arith.constant 0 : i32
    %c0_i32_1 = arith.constant 0 : i32
    return %c0_i32, %c0_i32_0 : i32, i32
  }
  func.func @transform_21(%arg0: i32) -> (i32, i32) {
    %c0_i32 = arith.constant 0 : i32
    %c0_i32_0 = arith.constant 0 : i32
    %c0_i32_1 = arith.constant 0 : i32
    return %c0_i32, %c0_i32_0 : i32, i32
  }
  func.func @transform_22(%arg0: i32) -> (i32, i32) {
    %c0_i32 = arith.constant 0 : i32
    %c0_i32_0 = arith.constant 0 : i32
    %c0_i32_1 = arith.constant 0 : i32
    return %c0_i32, %c0_i32_0 : i32, i32
  }
  func.func @transform_23(%arg0: i32) -> (i32, i32, i32) {
    %c0_i32 = arith.constant 0 : i32
    %c0_i32_0 = arith.constant 0 : i32
    %c0_i32_1 = arith.constant 0 : i32
    %c0_i32_2 = arith.constant 0 : i32
    return %c0_i32, %c0_i32_0, %c0_i32_1 : i32, i32, i32
  }
  func.func @transform_24(%arg0: i32) -> (i32, i32) {
    %c0_i32 = arith.constant 0 : i32
    %c0_i32_0 = arith.constant 0 : i32
    %c0_i32_1 = arith.constant 0 : i32
    return %c0_i32, %c0_i32_0 : i32, i32
  }
  func.func @transform_25(%arg0: i32) -> (i32, i32, i32) {
    %c0_i32 = arith.constant 0 : i32
    %c0_i32_0 = arith.constant 0 : i32
    %c0_i32_1 = arith.constant 0 : i32
    %c0_i32_2 = arith.constant 0 : i32
    return %c0_i32, %c0_i32_0, %c0_i32_1 : i32, i32, i32
  }
  func.func @transform_26(%arg0: i32) -> (i32, i32) {
    %c0_i32 = arith.constant 0 : i32
    %c0_i32_0 = arith.constant 0 : i32
    %c0_i32_1 = arith.constant 0 : i32
    return %c0_i32, %c0_i32_0 : i32, i32
  }
  func.func @transform_27(%arg0: i32) -> (i32, i32) {
    %c0_i32 = arith.constant 0 : i32
    %c0_i32_0 = arith.constant 0 : i32
    %c0_i32_1 = arith.constant 0 : i32
    return %c0_i32, %c0_i32_0 : i32, i32
  }
}

</mosaic_0001>

<llo_original>
// kernel: zeroshot_forward.1
$region0: #{zeroshot_forward.1}
  #allocation0 [shape = 'u32[]', space=smem, size = 0x4, offset = 0x4, fixed_abs, tag = 'smem constant byte address 0x4 - core index']
  #allocation1 [shape = 'u32[144,128]{1,0:T(1,128)}', space=vmem, size = 0x12000, scoped, tag = 'internal scratch']
  %s0 = inlined_call_operand.vmem [shape: f32[32,64], index: 0, kind: input, shape index: {}]
  %s1 = inlined_call_operand.hbm [shape: f32[32,32], index: 1, kind: input, shape index: {}]
  %s2 = inlined_call_operand.hbm [shape: f32[32,32], index: 2, kind: input, shape index: {}]
  %s3 = inlined_call_operand.vmem [shape: f32[3,64,128], index: 3, kind: input, shape index: {}]
  %s4 = inlined_call_operand.vmem [shape: f32[1,128], index: 4, kind: input, shape index: {}]
  %s5 = inlined_call_operand.vmem [shape: f32[128,128], index: 5, kind: input, shape index: {}]
  %s6 = inlined_call_operand.vmem [shape: f32[1,128], index: 6, kind: input, shape index: {}]
  %s7 = inlined_call_operand.vmem [shape: f32[1,128], index: 7, kind: input, shape index: {}]
  %s8 = inlined_call_operand.vmem [shape: f32[3,128,64], index: 8, kind: input, shape index: {}]
  %s9 = inlined_call_operand.vmem [shape: f32[1,64], index: 9, kind: input, shape index: {}]
  %s10 = inlined_call_operand.vmem [shape: f32[64,64], index: 10, kind: input, shape index: {}]
  %s11 = inlined_call_operand.vmem [shape: f32[1,64], index: 11, kind: input, shape index: {}]
  %s12 = inlined_call_operand.hbm [shape: f32[1,64], index: 12, kind: input, shape index: {}]
  %s13 = inlined_call_operand.vmem [shape: f32[3,64,128], index: 13, kind: input, shape index: {}]
  %s14 = inlined_call_operand.vmem [shape: f32[1,128], index: 14, kind: input, shape index: {}]
  %s15 = inlined_call_operand.vmem [shape: f32[128,128], index: 15, kind: input, shape index: {}]
  %s16 = inlined_call_operand.vmem [shape: f32[1,128], index: 16, kind: input, shape index: {}]
  %s17 = inlined_call_operand.vmem [shape: f32[1,128], index: 17, kind: input, shape index: {}]
  %s18 = inlined_call_operand.vmem [shape: f32[3,128,64], index: 18, kind: input, shape index: {}]
  %s19 = inlined_call_operand.vmem [shape: f32[1,64], index: 19, kind: input, shape index: {}]
  %s20 = inlined_call_operand.vmem [shape: f32[64,64], index: 20, kind: input, shape index: {}]
  %s21 = inlined_call_operand.vmem [shape: f32[1,64], index: 21, kind: input, shape index: {}]
  %s22 = inlined_call_operand.vmem [shape: f32[1,64], index: 22, kind: input, shape index: {}]
  %s23 = inlined_call_operand.vmem [shape: f32[3,64,128], index: 23, kind: input, shape index: {}]
  %s24 = inlined_call_operand.vmem [shape: f32[1,128], index: 24, kind: input, shape index: {}]
  %s25 = inlined_call_operand.vmem [shape: f32[3,128,128], index: 25, kind: input, shape index: {}]
  %s26 = inlined_call_operand.vmem [shape: f32[1,128], index: 26, kind: input, shape index: {}]
  %s27 = inlined_call_operand.vmem [shape: f32[32,128], index: 27, kind: output, shape index: {}]
  %s28 = sld [smem:[#allocation0]]
  $region130: #{zeroshot_forward.1} parent=0
    _
  %s30 = ssub.s32 1, %s28
  %s31 = scalar_select 0, %s30, %s28
  $region1: #{zeroshot_forward.1} parent=0
    #allocation2 [shape = 'u8[16384]{0}', space=vmem, size = 0x4000, scoped, tag = 'input window, operand 1, single buffered']
    #allocation3 [shape = 's32[1]{0}', space=sflag, size = 0x4, scoped, tag = 'scoped memory for zeroshot_forward.1']
    #allocation4 [shape = 'u8[16384]{0}', space=vmem, size = 0x4000, scoped, tag = 'input window, operand 2, single buffered']
    #allocation5 [shape = 's32[1]{0}', space=sflag, size = 0x4, scoped, tag = 'scoped memory for zeroshot_forward.1']
    #allocation6 [shape = 'u8[512]{0}', space=vmem, size = 0x400, scoped, tag = 'input window, operand 12, single buffered']
    %32 = vsyncpa [#allocation3], 0
    %33 = vsyncpa [#allocation5], 0
    // Predicated region
    $region2: #{zeroshot_forward.1} parent=1 // pred_check
      _
    $region3: #{zeroshot_forward.1} parent=1 // pred_check_branch
      %35 = sbr.rel (0) target = $region5
    $region4: #{zeroshot_forward.1} parent=1 // pred_region
      _
    $region5: #{zeroshot_forward.1} parent=1 // pred_fallthru
      _
    // Predicated region
    $region6: #{zeroshot_forward.1} parent=1 // pred_check
      _
    $region7: #{zeroshot_forward.1} parent=1 // pred_check_branch
      %37 = sbr.rel (0) target = $region9
    $region8: #{zeroshot_forward.1} parent=1 // pred_region
      %s39 = ssub.s32 512, 512
      %40 = vsyncadd [#allocation3], %s39
      %s41 = sshll.u32 [#allocation2], 4
      %s42 = int_to_ptr.vmem [resolvable:$true] %s41
      %47 = dma.hbm_to_vmem [thread:$0]  %s1, 512, %s42, [#allocation3], 128, 128, 8
    $region9: #{zeroshot_forward.1} parent=1 // pred_fallthru
      _
    // Predicated region
    $region10: #{zeroshot_forward.1} parent=1 // pred_check
      _
    $region11: #{zeroshot_forward.1} parent=1 // pred_check_branch
      %49 = sbr.rel (0) target = $region13
    $region12: #{zeroshot_forward.1} parent=1 // pred_region
      %s51 = ssub.s32 512, 512
      %52 = vsyncadd [#allocation5], %s51
      %s53 = sshll.u32 [#allocation4], 4
      %s54 = int_to_ptr.vmem [resolvable:$true] %s53
      %59 = dma.hbm_to_vmem [thread:$0]  %s2, 512, %s54, [#allocation5], 128, 128, 8
    $region13: #{zeroshot_forward.1} parent=1 // pred_fallthru
      _
    // Predicated region
    $region14: #{zeroshot_forward.1} parent=1 // pred_check
      _
    $region15: #{zeroshot_forward.1} parent=1 // pred_check_branch
      %61 = sbr.rel (0) target = $region17
    $region16: #{zeroshot_forward.1} parent=1 // pred_region
      _
    $region17: #{zeroshot_forward.1} parent=1 // pred_fallthru
      _
    // Predicated region
    $region18: #{zeroshot_forward.1} parent=1 // pred_check
      _
    $region19: #{zeroshot_forward.1} parent=1 // pred_check_branch
      %63 = sbr.rel (0) target = $region21
    $region20: #{zeroshot_forward.1} parent=1 // pred_region
      _
    $region21: #{zeroshot_forward.1} parent=1 // pred_fallthru
      _
    // Predicated region
    $region22: #{zeroshot_forward.1} parent=1 // pred_check
      _
    $region23: #{zeroshot_forward.1} parent=1 // pred_check_branch
      %65 = sbr.rel (0) target = $region25
    $region24: #{zeroshot_forward.1} parent=1 // pred_region
      _
    $region25: #{zeroshot_forward.1} parent=1 // pred_fallthru
      _
    // Predicated region
    $region26: #{zeroshot_forward.1} parent=1 // pred_check
      _
    $region27: #{zeroshot_forward.1} parent=1 // pred_check_branch
      %67 = sbr.rel (0) target = $region29
    $region28: #{zeroshot_forward.1} parent=1 // pred_region
      _
    $region29: #{zeroshot_forward.1} parent=1 // pred_fallthru
      _
    // Predicated region
    $region30: #{zeroshot_forward.1} parent=1 // pred_check
      _
    $region31: #{zeroshot_forward.1} parent=1 // pred_check_branch
      %69 = sbr.rel (0) target = $region33
    $region32: #{zeroshot_forward.1} parent=1 // pred_region
      _
    $region33: #{zeroshot_forward.1} parent=1 // pred_fallthru
      _
    // Predicated region
    $region34: #{zeroshot_forward.1} parent=1 // pred_check
      _
    $region35: #{zeroshot_forward.1} parent=1 // pred_check_branch
      %71 = sbr.rel (0) target = $region37
    $region36: #{zeroshot_forward.1} parent=1 // pred_region
      _
    $region37: #{zeroshot_forward.1} parent=1 // pred_fallthru
      _
    // Predicated region
    $region38: #{zeroshot_forward.1} parent=1 // pred_check
      _
    $region39: #{zeroshot_forward.1} parent=1 // pred_check_branch
      %73 = sbr.rel (0) target = $region41
    $region40: #{zeroshot_forward.1} parent=1 // pred_region
      _
    $region41: #{zeroshot_forward.1} parent=1 // pred_fallthru
      _
    // Predicated region
    $region42: #{zeroshot_forward.1} parent=1 // pred_check
      _
    $region43: #{zeroshot_forward.1} parent=1 // pred_check_branch
      %75 = sbr.rel (0) target = $region45
    $region44: #{zeroshot_forward.1} parent=1 // pred_region
      _
    $region45: #{zeroshot_forward.1} parent=1 // pred_fallthru
      _
    // Predicated region
    $region46: #{zeroshot_forward.1} parent=1 // pred_check
      _
    $region47: #{zeroshot_forward.1} parent=1 // pred_check_branch
      %77 = sbr.rel (0) target = $region49
    $region48: #{zeroshot_forward.1} parent=1 // pred_region
      _
    $region49: #{zeroshot_forward.1} parent=1 // pred_fallthru
      _
    // Predicated region
    $region50: #{zeroshot_forward.1} parent=1 // pred_check
      _
    $region51: #{zeroshot_forward.1} parent=1 // pred_check_branch
      %79 = sbr.rel (0) target = $region53
    $region52: #{zeroshot_forward.1} parent=1 // pred_region
      %s81 = ssub.s32 16, 16
      %82 = vsyncadd [#allocation5], %s81
      %s84 = sshll.u32 [#allocation6], 4
      %s85 = int_to_ptr.vmem [resolvable:$true] %s84
      %87 = dma.hbm_to_vmem [thread:$0]  %s12, 16, %s85, [#allocation5]
    $region53: #{zeroshot_forward.1} parent=1 // pred_fallthru
      _
    // Predicated region
    $region54: #{zeroshot_forward.1} parent=1 // pred_check
      _
    $region55: #{zeroshot_forward.1} parent=1 // pred_check_branch
      %89 = sbr.rel (0) target = $region57
    $region56: #{zeroshot_forward.1} parent=1 // pred_region
      _
    $region57: #{zeroshot_forward.1} parent=1 // pred_fallthru
      _
    // Predicated region
    $region58: #{zeroshot_forward.1} parent=1 // pred_check
      _
    $region59: #{zeroshot_forward.1} parent=1 // pred_check_branch
      %91 = sbr.rel (0) target = $region61
    $region60: #{zeroshot_forward.1} parent=1 // pred_region
      _
    $region61: #{zeroshot_forward.1} parent=1 // pred_fallthru
      _
    // Predicated region
    $region62: #{zeroshot_forward.1} parent=1 // pred_check
      _
    $region63: #{zeroshot_forward.1} parent=1 // pred_check_branch
      %93 = sbr.rel (0) target = $region65
    $region64: #{zeroshot_forward.1} parent=1 // pred_region
      _
    $region65: #{zeroshot_forward.1} parent=1 // pred_fallthru
      _
    // Predicated region
    $region66: #{zeroshot_forward.1} parent=1 // pred_check
      _
    $region67: #{zeroshot_forward.1} parent=1 // pred_check_branch
      %95 = sbr.rel (0) target = $region69
    $region68: #{zeroshot_forward.1} parent=1 // pred_region
      _
    $region69: #{zeroshot_forward.1} parent=1 // pred_fallthru
      _
    // Predicated region
    $region70: #{zeroshot_forward.1} parent=1 // pred_check
      _
    $region71: #{zeroshot_forward.1} parent=1 // pred_check_branch
      %97 = sbr.rel (0) target = $region73
    $region72: #{zeroshot_forward.1} parent=1 // pred_region
      _
    $region73: #{zeroshot_forward.1} parent=1 // pred_fallthru
      _
    // Predicated region
    $region74: #{zeroshot_forward.1} parent=1 // pred_check
      _
    $region75: #{zeroshot_forward.1} parent=1 // pred_check_branch
      %99 = sbr.rel (0) target = $region77
    $region76: #{zeroshot_forward.1} parent=1 // pred_region
      _
    $region77: #{zeroshot_forward.1} parent=1 // pred_fallthru
      _
    // Predicated region
    $region78: #{zeroshot_forward.1} parent=1 // pred_check
      _
    $region79: #{zeroshot_forward.1} parent=1 // pred_check_branch
      %101 = sbr.rel (0) target = $region81
    $region80: #{zeroshot_forward.1} parent=1 // pred_region
      _
    $region81: #{zeroshot_forward.1} parent=1 // pred_fallthru
      _
    // Predicated region
    $region82: #{zeroshot_forward.1} parent=1 // pred_check
      _
    $region83: #{zeroshot_forward.1} parent=1 // pred_check_branch
      %103 = sbr.rel (0) target = $region85
    $region84: #{zeroshot_forward.1} parent=1 // pred_region
      _
    $region85: #{zeroshot_forward.1} parent=1 // pred_fallthru
      _
    // Predicated region
    $region86: #{zeroshot_forward.1} parent=1 // pred_check
      _
    $region87: #{zeroshot_forward.1} parent=1 // pred_check_branch
      %105 = sbr.rel (0) target = $region89
    $region88: #{zeroshot_forward.1} parent=1 // pred_region
      _
    $region89: #{zeroshot_forward.1} parent=1 // pred_fallthru
      _
    // Predicated region
    $region90: #{zeroshot_forward.1} parent=1 // pred_check
      _
    $region91: #{zeroshot_forward.1} parent=1 // pred_check_branch
      %107 = sbr.rel (0) target = $region93
    $region92: #{zeroshot_forward.1} parent=1 // pred_region
      _
    $region93: #{zeroshot_forward.1} parent=1 // pred_fallthru
      _
    // Predicated region
    $region94: #{zeroshot_forward.1} parent=1 // pred_check
      _
    $region95: #{zeroshot_forward.1} parent=1 // pred_check_branch
      %109 = sbr.rel (0) target = $region97
    $region96: #{zeroshot_forward.1} parent=1 // pred_region
      _
    $region97: #{zeroshot_forward.1} parent=1 // pred_fallthru
      _
    // Predicated region
    $region98: #{zeroshot_forward.1} parent=1 // pred_check
      _
    $region99: #{zeroshot_forward.1} parent=1 // pred_check_branch
      %111 = sbr.rel (0) target = $region101
    $region100: #{zeroshot_forward.1} parent=1 // pred_region
      _
    $region101: #{zeroshot_forward.1} parent=1 // pred_fallthru
      _
    // Predicated region
    $region102: #{zeroshot_forward.1} parent=1 // pred_check
      _
    $region103: #{zeroshot_forward.1} parent=1 // pred_check_branch
      %113 = sbr.rel (0) target = $region105
    $region104: #{zeroshot_forward.1} parent=1 // pred_region
      _
    $region105: #{zeroshot_forward.1} parent=1 // pred_fallthru
      _
    // Predicated region
    $region106: #{zeroshot_forward.1} parent=1 // pred_check
      _
    $region107: #{zeroshot_forward.1} parent=1 // pred_check_branch
      %115 = sbr.rel (0) target = $region109
    $region108: #{zeroshot_forward.1} parent=1 // pred_region
      _
    $region109: #{zeroshot_forward.1} parent=1 // pred_fallthru
      _
    // Predicated region
    $region110: #{zeroshot_forward.1} parent=1 // pred_check
      _
    $region111: #{zeroshot_forward.1} parent=1 // pred_check_branch
      %117 = sbr.rel (0) target = $region113
    $region112: #{zeroshot_forward.1} parent=1 // pred_region
      %118 = dma.done [#allocation3], 512
    $region113: #{zeroshot_forward.1} parent=1 // pred_fallthru
      _
    // Predicated region
    $region114: #{zeroshot_forward.1} parent=1 // pred_check
      _
    $region115: #{zeroshot_forward.1} parent=1 // pred_check_branch
      %120 = sbr.rel (0) target = $region117
    $region116: #{zeroshot_forward.1} parent=1 // pred_region
      %121 = dma.done [#allocation5], 512
    $region117: #{zeroshot_forward.1} parent=1 // pred_fallthru
      _
    // Predicated region
    $region118: #{zeroshot_forward.1} parent=1 // pred_check
      _
    $region119: #{zeroshot_forward.1} parent=1 // pred_check_branch
      %123 = sbr.rel (0) target = $region121
    $region120: #{zeroshot_forward.1} parent=1 // pred_region
      %124 = dma.done [#allocation5], 16
    $region121: #{zeroshot_forward.1} parent=1 // pred_fallthru
      _
    %v125 = vld [vmem:[%s0] sm:$0xff]
    %v126 = vld [vmem:[%s0 + $0x8] sm:$0xff]
    %v127 = vld [vmem:[%s0 + $0x10] sm:$0xff]
    %v128 = vld [vmem:[%s0 + $0x18] sm:$0xff]
    %v129 = vld [vmem:[#allocation2] sm:$0xff]
    %v130 = vld [vmem:[#allocation2 + $0x8] sm:$0xff]
    %v131 = vld [vmem:[#allocation2 + $0x10] sm:$0xff]
    %v132 = vld [vmem:[#allocation2 + $0x18] sm:$0xff]
    %vm133 = vcmask 261120
    %v135 = vsel %vm133, %v129, 0
    %v138 = vsel %vm133, %v130, 0
    %v141 = vsel %vm133, %v131, 0
    %v144 = vsel %vm133, %v132, 0
    %146 = vmatprep.subr.mxu0 0.0
    %147 = vmatpush1.msra.mxu0 %v125
    %148 = vmatprep.subr.mxu0 0.0
    %149 = vmatpush1.msra.mxu0 %v126
    %150 = vmatprep.subr.mxu0 0.0
    %151 = vmatpush1.msra.mxu0 %v127
    %152 = vmatprep.subr.mxu0 0.0
    %153 = vmatpush1.msra.mxu0 %v128
    %154 = vmatprep.subr.mxu0 0.0
    %155 = vmatpush1.msra.mxu0 0.0
    %156 = vmatprep.subr.mxu0 0.0
    %157 = vmatpush1.msra.mxu0 0.0
    %158 = vmatprep.subr.mxu0 0.0
    %159 = vmatpush1.msra.mxu0 0.0
    %160 = vmatprep.subr.mxu0 0.0
    %161 = vmatpush1.msra.mxu0 0.0
    %162 = vmatprep.subr.mxu0 0.0
    %163 = vmatpush1.msra.mxu0 0.0
    %164 = vmatprep.subr.mxu0 0.0
    %165 = vmatpush1.msra.mxu0 0.0
    %166 = vmatprep.subr.mxu0 0.0
    %167 = vmatpush1.msra.mxu0 0.0
    %168 = vmatprep.subr.mxu0 0.0
    %169 = vmatpush1.msra.mxu0 0.0
    %170 = vmatprep.subr.mxu0 0.0
    %171 = vmatpush1.msra.mxu0 0.0
    %172 = vmatprep.subr.mxu0 0.0
    %173 = vmatpush1.msra.mxu0 0.0
    %174 = vmatprep.subr.mxu0 0.0
    %175 = vmatpush1.msra.mxu0 0.0
    %176 = vmatprep.subr.mxu0 0.0
    %177 = vmatpush1.msra.mxu0 0.0
    %178 = vmatprep.subr.mxu0 0.0
    %179 = vmatpush1.msra.mxu0 0.0
    %180 = vmatprep.subr.mxu0 0.0
    %181 = vmatpush1.msra.mxu0 0.0
    %182 = vmatprep.subr.mxu0 0.0
    %183 = vmatpush1.msra.mxu0 0.0
    %184 = vmatprep.subr.mxu0 0.0
    %185 = vmatpush1.msra.mxu0 0.0
    %186 = vmatprep.subr.mxu0 0.0
    %187 = vmatpush1.msra.mxu0 0.0
    %188 = vmatprep.subr.mxu0 0.0
    %189 = vmatpush1.msra.mxu0 0.0
    %190 = vmatprep.subr.mxu0 0.0
    %191 = vmatpush1.msra.mxu0 0.0
    %192 = vmatprep.subr.mxu0 0.0
    %193 = vmatpush1.msra.mxu0 0.0
    %194 = vmatprep.subr.mxu0 0.0
    %195 = vmatpush1.msra.mxu0 0.0
    %196 = vmatprep.subr.mxu0 0.0
    %197 = vmatpush1.msra.mxu0 0.0
    %198 = vmatprep.subr.mxu0 0.0
    %199 = vmatpush1.msra.mxu0 0.0
    %200 = vmatprep.subr.mxu0 0.0
    %201 = vmatpush1.msra.mxu0 0.0
    %202 = vmatprep.subr.mxu0 0.0
    %203 = vmatpush1.msra.mxu0 0.0
    %204 = vmatprep.subr.mxu0 0.0
    %205 = vmatpush1.msra.mxu0 0.0
    %206 = vmatprep.subr.mxu0 0.0
    %207 = vmatpush1.msra.mxu0 0.0
    %208 = vmatprep.subr.mxu0 0.0
    %209 = vmatpush1.msra.mxu0 0.0
    %210 = vmatprep.mubr.f32.mxu0 0.0
    %211 = vmatmul.mubr.f32.gmra.mrb[0].mxu0 %v135
    %v212 = vpop.f32.mrb[0].mxu0
    %v213 = vadd.f32 0.0, %v212
    %v214 = vpop.f32.mrb[0].mxu0
    %215 = vmatprep.mubr.f32.mxu0 0.0
    %216 = vmatmul.mubr.f32.gmra.mrb[0].mxu0 %v138
    %v217 = vpop.f32.mrb[0].mxu0
    %v218 = vadd.f32 0.0, %v217
    %v219 = vpop.f32.mrb[0].mxu0
    %220 = vmatprep.mubr.f32.mxu0 0.0
    %221 = vmatmul.mubr.f32.gmra.mrb[0].mxu0 %v141
    %v222 = vpop.f32.mrb[0].mxu0
    %v223 = vadd.f32 0.0, %v222
    %v224 = vpop.f32.mrb[0].mxu0
    %225 = vmatprep.mubr.f32.mxu0 0.0
    %226 = vmatmul.mubr.f32.gmra.mrb[0].mxu0 %v144
    %v227 = vpop.f32.mrb[0].mxu0
    %v228 = vadd.f32 0.0, %v227
    %v229 = vpop.f32.mrb[0].mxu0
    %230 = vdwg.mxu0
    %v231 = vld [vmem:[#allocation4] sm:$0xff]
    %v232 = vld [vmem:[#allocation4 + $0x8] sm:$0xff]
    %v233 = vld [vmem:[#allocation4 + $0x10] sm:$0xff]
    %v234 = vld [vmem:[#allocation4 + $0x18] sm:$0xff]
    %v236 = vsel %vm133, %v231, 0
    %v239 = vsel %vm133, %v232, 0
    %v242 = vsel %vm133, %v233, 0
    %v245 = vsel %vm133, %v234, 0
    %247 = vmatprep.subr.mxu0 0.0
    %248 = vmatpush1.msra.mxu0 %v125
    %249 = vmatprep.subr.mxu0 0.0
    %250 = vmatpush1.msra.mxu0 %v126
    %251 = vmatprep.subr.mxu0 0.0
    %252 = vmatpush1.msra.mxu0 %v127
    %253 = vmatprep.subr.mxu0 0.0
    %254 = vmatpush1.msra.mxu0 %v128
    %255 = vmatprep.subr.mxu0 0.0
    %256 = vmatpush1.msra.mxu0 0.0
    %257 = vmatprep.subr.mxu0 0.0
    %258 = vmatpush1.msra.mxu0 0.0
    %259 = vmatprep.subr.mxu0 0.0
    %260 = vmatpush1.msra.mxu0 0.0
    %261 = vmatprep.subr.mxu0 0.0
    %262 = vmatpush1.msra.mxu0 0.0
    %263 = vmatprep.subr.mxu0 0.0
    %264 = vmatpush1.msra.mxu0 0.0
    %265 = vmatprep.subr.mxu0 0.0
    %266 = vmatpush1.msra.mxu0 0.0
    %267 = vmatprep.subr.mxu0 0.0
    %268 = vmatpush1.msra.mxu0 0.0
    %269 = vmatprep.subr.mxu0 0.0
    %270 = vmatpush1.msra.mxu0 0.0
    %271 = vmatprep.subr.mxu0 0.0
    %272 = vmatpush1.msra.mxu0 0.0
    %273 = vmatprep.subr.mxu0 0.0
    %274 = vmatpush1.msra.mxu0 0.0
    %275 = vmatprep.subr.mxu0 0.0
    %276 = vmatpush1.msra.mxu0 0.0
    %277 = vmatprep.subr.mxu0 0.0
    %278 = vmatpush1.msra.mxu0 0.0
    %279 = vmatprep.subr.mxu0 0.0
    %280 = vmatpush1.msra.mxu0 0.0
    %281 = vmatprep.subr.mxu0 0.0
    %282 = vmatpush1.msra.mxu0 0.0
    %283 = vmatprep.subr.mxu0 0.0
    %284 = vmatpush1.msra.mxu0 0.0
    %285 = vmatprep.subr.mxu0 0.0
    %286 = vmatpush1.msra.mxu0 0.0
    %287 = vmatprep.subr.mxu0 0.0
    %288 = vmatpush1.msra.mxu0 0.0
    %289 = vmatprep.subr.mxu0 0.0
    %290 = vmatpush1.msra.mxu0 0.0
    %291 = vmatprep.subr.mxu0 0.0
    %292 = vmatpush1.msra.mxu0 0.0
    %293 = vmatprep.subr.mxu0 0.0
    %294 = vmatpush1.msra.mxu0 0.0
    %295 = vmatprep.subr.mxu0 0.0
    %296 = vmatpush1.msra.mxu0 0.0
    %297 = vmatprep.subr.mxu0 0.0
    %298 = vmatpush1.msra.mxu0 0.0
    %299 = vmatprep.subr.mxu0 0.0
    %300 = vmatpush1.msra.mxu0 0.0
    %301 = vmatprep.subr.mxu0 0.0
    %302 = vmatpush1.msra.mxu0 0.0
    %303 = vmatprep.subr.mxu0 0.0
    %304 = vmatpush1.msra.mxu0 0.0
    %305 = vmatprep.subr.mxu0 0.0
    %306 = vmatpush1.msra.mxu0 0.0
    %307 = vmatprep.subr.mxu0 0.0
    %308 = vmatpush1.msra.mxu0 0.0
    %309 = vmatprep.subr.mxu0 0.0
    %310 = vmatpush1.msra.mxu0 0.0
    %311 = vmatprep.mubr.f32.mxu0 0.0
    %312 = vmatmul.mubr.f32.gmra.mrb[0].mxu0 %v236
    %v313 = vpop.f32.mrb[0].mxu0
    %v314 = vadd.f32 0.0, %v313
    %v315 = vpop.f32.mrb[0].mxu0
    %316 = vmatprep.mubr.f32.mxu0 0.0
    %317 = vmatmul.mubr.f32.gmra.mrb[0].mxu0 %v239
    %v318 = vpop.f32.mrb[0].mxu0
    %v319 = vadd.f32 0.0, %v318
    %v320 = vpop.f32.mrb[0].mxu0
    %321 = vmatprep.mubr.f32.mxu0 0.0
    %322 = vmatmul.mubr.f32.gmra.mrb[0].mxu0 %v242
    %v323 = vpop.f32.mrb[0].mxu0
    %v324 = vadd.f32 0.0, %v323
    %v325 = vpop.f32.mrb[0].mxu0
    %326 = vmatprep.mubr.f32.mxu0 0.0
    %327 = vmatmul.mubr.f32.gmra.mrb[0].mxu0 %v245
    %v328 = vpop.f32.mrb[0].mxu0
    %v329 = vadd.f32 0.0, %v328
    %v330 = vpop.f32.mrb[0].mxu0
    %331 = vdwg.mxu0
    %v332 = vld [vmem:[%s3] sm:$0xff]
    %v333 = vld [vmem:[%s3 + $0x8] sm:$0xff]
    %v334 = vld [vmem:[%s3 + $0x10] sm:$0xff]
    %v335 = vld [vmem:[%s3 + $0x18] sm:$0xff]
    %v336 = vld [vmem:[%s3 + $0x20] sm:$0xff]
    %v337 = vld [vmem:[%s3 + $0x28] sm:$0xff]
    %v338 = vld [vmem:[%s3 + $0x30] sm:$0xff]
    %v339 = vld [vmem:[%s3 + $0x38] sm:$0xff]
    %s340 = scalar_lea.vmem %s3, 64
    %v341 = vld [vmem:[%s340] sm:$0xff]
    %v342 = vld [vmem:[%s340 + $0x8] sm:$0xff]
    %v343 = vld [vmem:[%s340 + $0x10] sm:$0xff]
    %v344 = vld [vmem:[%s340 + $0x18] sm:$0xff]
    %v345 = vld [vmem:[%s340 + $0x20] sm:$0xff]
    %v346 = vld [vmem:[%s340 + $0x28] sm:$0xff]
    %v347 = vld [vmem:[%s340 + $0x30] sm:$0xff]
    %v348 = vld [vmem:[%s340 + $0x38] sm:$0xff]
    %vm349 = vcmask 523264
    %v351 = vsel %vm349, %v125, 0
    %v354 = vsel %vm349, %v126, 0
    %v357 = vsel %vm349, %v127, 0
    %v360 = vsel %vm349, %v128, 0
    %362 = vmatprep.subr.mxu0 0.0
    %363 = vmatpush1.msra.mxu0 %v341
    %364 = vmatprep.subr.mxu0 0.0
    %365 = vmatpush1.msra.mxu0 %v342
    %366 = vmatprep.subr.mxu0 0.0
    %367 = vmatpush1.msra.mxu0 %v343
    %368 = vmatprep.subr.mxu0 0.0
    %369 = vmatpush1.msra.mxu0 %v344
    %370 = vmatprep.subr.mxu0 0.0
    %371 = vmatpush1.msra.mxu0 %v345
    %372 = vmatprep.subr.mxu0 0.0
    %373 = vmatpush1.msra.mxu0 %v346
    %374 = vmatprep.subr.mxu0 0.0
    %375 = vmatpush1.msra.mxu0 %v347
    %376 = vmatprep.subr.mxu0 0.0
    %377 = vmatpush1.msra.mxu0 %v348
    %378 = vmatprep.subr.mxu0 0.0
    %379 = vmatpush1.msra.mxu0 0.0
    %380 = vmatprep.subr.mxu0 0.0
    %381 = vmatpush1.msra.mxu0 0.0
    %382 = vmatprep.subr.mxu0 0.0
    %383 = vmatpush1.msra.mxu0 0.0
    %384 = vmatprep.subr.mxu0 0.0
    %385 = vmatpush1.msra.mxu0 0.0
    %386 = vmatprep.subr.mxu0 0.0
    %387 = vmatpush1.msra.mxu0 0.0
    %388 = vmatprep.subr.mxu0 0.0
    %389 = vmatpush1.msra.mxu0 0.0
    %390 = vmatprep.subr.mxu0 0.0
    %391 = vmatpush1.msra.mxu0 0.0
    %392 = vmatprep.subr.mxu0 0.0
    %393 = vmatpush1.msra.mxu0 0.0
    %394 = vmatprep.subr.mxu0 0.0
    %395 = vmatpush1.msra.mxu0 0.0
    %396 = vmatprep.subr.mxu0 0.0
    %397 = vmatpush1.msra.mxu0 0.0
    %398 = vmatprep.subr.mxu0 0.0
    %399 = vmatpush1.msra.mxu0 0.0
    %400 = vmatprep.subr.mxu0 0.0
    %401 = vmatpush1.msra.mxu0 0.0
    %402 = vmatprep.subr.mxu0 0.0
    %403 = vmatpush1.msra.mxu0 0.0
    %404 = vmatprep.subr.mxu0 0.0
    %405 = vmatpush1.msra.mxu0 0.0
    %406 = vmatprep.subr.mxu0 0.0
    %407 = vmatpush1.msra.mxu0 0.0
    %408 = vmatprep.subr.mxu0 0.0
    %409 = vmatpush1.msra.mxu0 0.0
    %410 = vmatprep.subr.mxu0 0.0
    %411 = vmatpush1.msra.mxu0 0.0
    %412 = vmatprep.subr.mxu0 0.0
    %413 = vmatpush1.msra.mxu0 0.0
    %414 = vmatprep.subr.mxu0 0.0
    %415 = vmatpush1.msra.mxu0 0.0
    %416 = vmatprep.subr.mxu0 0.0
    %417 = vmatpush1.msra.mxu0 0.0
    %418 = vmatprep.subr.mxu0 0.0
    %419 = vmatpush1.msra.mxu0 0.0
    %420 = vmatprep.subr.mxu0 0.0
    %421 = vmatpush1.msra.mxu0 0.0
    %422 = vmatprep.subr.mxu0 0.0
    %423 = vmatpush1.msra.mxu0 0.0
    %424 = vmatprep.subr.mxu0 0.0
    %425 = vmatpush1.msra.mxu0 0.0
    %426 = vmatprep.mubr.f32.mxu0 0.0
    %427 = vmatmul.mubr.f32.gmra.mrb[0].mxu0 %v351
    %v428 = vpop.f32.mrb[0].mxu0
    %v429 = vadd.f32 0.0, %v428
    %v430 = vpop.f32.mrb[0].mxu0
    %431 = vmatprep.mubr.f32.mxu0 0.0
    %432 = vmatmul.mubr.f32.gmra.mrb[0].mxu0 %v354
    %v433 = vpop.f32.mrb[0].mxu0
    %v434 = vadd.f32 0.0, %v433
    %v435 = vpop.f32.mrb[0].mxu0
    %436 = vmatprep.mubr.f32.mxu0 0.0
    %437 = vmatmul.mubr.f32.gmra.mrb[0].mxu0 %v357
    %v438 = vpop.f32.mrb[0].mxu0
    %v439 = vadd.f32 0.0, %v438
    %v440 = vpop.f32.mrb[0].mxu0
    %441 = vmatprep.mubr.f32.mxu0 0.0
    %442 = vmatmul.mubr.f32.gmra.mrb[0].mxu0 %v360
    %v443 = vpop.f32.mrb[0].mxu0
    %v444 = vadd.f32 0.0, %v443
    %v445 = vpop.f32.mrb[0].mxu0
    %446 = vdwg.mxu0
    %v448 = vsel %vm349, %v213, 0
    %v451 = vsel %vm349, %v218, 0
    %v454 = vsel %vm349, %v223, 0
    %v457 = vsel %vm349, %v228, 0
    %459 = vmatprep.subr.mxu0 0.0
    %460 = vmatpush1.msra.mxu0 %v332
    %461 = vmatprep.subr.mxu0 0.0
    %462 = vmatpush1.msra.mxu0 %v333
    %463 = vmatprep.subr.mxu0 0.0
    %464 = vmatpush1.msra.mxu0 %v334
    %465 = vmatprep.subr.mxu0 0.0
    %466 = vmatpush1.msra.mxu0 %v335
    %467 = vmatprep.subr.mxu0 0.0
    %468 = vmatpush1.msra.mxu0 %v336
    %469 = vmatprep.subr.mxu0 0.0
    %470 = vmatpush1.msra.mxu0 %v337
    %471 = vmatprep.subr.mxu0 0.0
    %472 = vmatpush1.msra.mxu0 %v338
    %473 = vmatprep.subr.mxu0 0.0
    %474 = vmatpush1.msra.mxu0 %v339
    %475 = vmatprep.subr.mxu0 0.0
    %476 = vmatpush1.msra.mxu0 0.0
    %477 = vmatprep.subr.mxu0 0.0
    %478 = vmatpush1.msra.mxu0 0.0
    %479 = vmatprep.subr.mxu0 0.0
    %480 = vmatpush1.msra.mxu0 0.0
    %481 = vmatprep.subr.mxu0 0.0
    %482 = vmatpush1.msra.mxu0 0.0
    %483 = vmatprep.subr.mxu0 0.0
    %484 = vmatpush1.msra.mxu0 0.0
    %485 = vmatprep.subr.mxu0 0.0
    %486 = vmatpush1.msra.mxu0 0.0
    %487 = vmatprep.subr.mxu0 0.0
    %488 = vmatpush1.msra.mxu0 0.0
    %489 = vmatprep.subr.mxu0 0.0
    %490 = vmatpush1.msra.mxu0 0.0
    %491 = vmatprep.subr.mxu0 0.0
    %492 = vmatpush1.msra.mxu0 0.0
    %493 = vmatprep.subr.mxu0 0.0
    %494 = vmatpush1.msra.mxu0 0.0
    %495 = vmatprep.subr.mxu0 0.0
    %496 = vmatpush1.msra.mxu0 0.0
    %497 = vmatprep.subr.mxu0 0.0
    %498 = vmatpush1.msra.mxu0 0.0
    %499 = vmatprep.subr.mxu0 0.0
    %500 = vmatpush1.msra.mxu0 0.0
    %501 = vmatprep.subr.mxu0 0.0
    %502 = vmatpush1.msra.mxu0 0.0
    %503 = vmatprep.subr.mxu0 0.0
    %504 = vmatpush1.msra.mxu0 0.0
    %505 = vmatprep.subr.mxu0 0.0
    %506 = vmatpush1.msra.mxu0 0.0
    %507 = vmatprep.subr.mxu0 0.0
    %508 = vmatpush1.msra.mxu0 0.0
    %509 = vmatprep.subr.mxu0 0.0
    %510 = vmatpush1.msra.mxu0 0.0
    %511 = vmatprep.subr.mxu0 0.0
    %512 = vmatpush1.msra.mxu0 0.0
    %513 = vmatprep.subr.mxu0 0.0
    %514 = vmatpush1.msra.mxu0 0.0
    %515 = vmatprep.subr.mxu0 0.0
    %516 = vmatpush1.msra.mxu0 0.0
    %517 = vmatprep.subr.mxu0 0.0
    %518 = vmatpush1.msra.mxu0 0.0
    %519 = vmatprep.subr.mxu0 0.0
    %520 = vmatpush1.msra.mxu0 0.0
    %521 = vmatprep.subr.mxu0 0.0
    %522 = vmatpush1.msra.mxu0 0.0
    %523 = vmatprep.mubr.f32.mxu0 0.0
    %524 = vmatmul.mubr.f32.gmra.mrb[0].mxu0 %v448
    %v525 = vpop.f32.mrb[0].mxu0
    %v526 = vadd.f32 %v429, %v525
    %v527 = vpop.f32.mrb[0].mxu0
    %528 = vmatprep.mubr.f32.mxu0 0.0
    %529 = vmatmul.mubr.f32.gmra.mrb[0].mxu0 %v451
    %v530 = vpop.f32.mrb[0].mxu0
    %v531 = vadd.f32 %v434, %v530
    %v532 = vpop.f32.mrb[0].mxu0
    %533 = vmatprep.mubr.f32.mxu0 0.0
    %534 = vmatmul.mubr.f32.gmra.mrb[0].mxu0 %v454
    %v535 = vpop.f32.mrb[0].mxu0
    %v536 = vadd.f32 %v439, %v535
    %v537 = vpop.f32.mrb[0].mxu0
    %538 = vmatprep.mubr.f32.mxu0 0.0
    %539 = vmatmul.mubr.f32.gmra.mrb[0].mxu0 %v457
    %v540 = vpop.f32.mrb[0].mxu0
    %v541 = vadd.f32 %v444, %v540
    %v542 = vpop.f32.mrb[0].mxu0
    %543 = vdwg.mxu0
    %s544 = scalar_lea.vmem %s3, 128
    %v545 = vld [vmem:[%s544] sm:$0xff]
    %v546 = vld [vmem:[%s544 + $0x8] sm:$0xff]
    %v547 = vld [vmem:[%s544 + $0x10] sm:$0xff]
    %v548 = vld [vmem:[%s544 + $0x18] sm:$0xff]
    %v549 = vld [vmem:[%s544 + $0x20] sm:$0xff]
    %v550 = vld [vmem:[%s544 + $0x28] sm:$0xff]
    %v551 = vld [vmem:[%s544 + $0x30] sm:$0xff]
    %v552 = vld [vmem:[%s544 + $0x38] sm:$0xff]
    %v554 = vsel %vm349, %v314, 0
    %v557 = vsel %vm349, %v319, 0
    %v560 = vsel %vm349, %v324, 0
    %v563 = vsel %vm349, %v329, 0
    %565 = vmatprep.subr.mxu0 0.0
    %566 = vmatpush1.msra.mxu0 %v545
    %567 = vmatprep.subr.mxu0 0.0
    %568 = vmatpush1.msra.mxu0 %v546
    %569 = vmatprep.subr.mxu0 0.0
    %570 = vmatpush1.msra.mxu0 %v547
    %571 = vmatprep.subr.mxu0 0.0
    %572 = vmatpush1.msra.mxu0 %v548
    %573 = vmatprep.subr.mxu0 0.0
    %574 = vmatpush1.msra.mxu0 %v549
    %575 = vmatprep.subr.mxu0 0.0
    %576 = vmatpush1.msra.mxu0 %v550
    %577 = vmatprep.subr.mxu0 0.0
    %578 = vmatpush1.msra.mxu0 %v551
    %579 = vmatprep.subr.mxu0 0.0
    %580 = vmatpush1.msra.mxu0 %v552
    %581 = vmatprep.subr.mxu0 0.0
    %582 = vmatpush1.msra.mxu0 0.0
    %583 = vmatprep.subr.mxu0 0.0
    %584 = vmatpush1.msra.mxu0 0.0
    %585 = vmatprep.subr.mxu0 0.0
    %586 = vmatpush1.msra.mxu0 0.0
    %587 = vmatprep.subr.mxu0 0.0
    %588 = vmatpush1.msra.mxu0 0.0
    %589 = vmatprep.subr.mxu0 0.0
    %590 = vmatpush1.msra.mxu0 0.0
    %591 = vmatprep.subr.mxu0 0.0
    %592 = vmatpush1.msra.mxu0 0.0
    %593 = vmatprep.subr.mxu0 0.0
    %594 = vmatpush1.msra.mxu0 0.0
    %595 = vmatprep.subr.mxu0 0.0
    %596 = vmatpush1.msra.mxu0 0.0
    %597 = vmatprep.subr.mxu0 0.0
    %598 = vmatpush1.msra.mxu0 0.0
    %599 = vmatprep.subr.mxu0 0.0
    %600 = vmatpush1.msra.mxu0 0.0
    %601 = vmatprep.subr.mxu0 0.0
    %602 = vmatpush1.msra.mxu0 0.0
    %603 = vmatprep.subr.mxu0 0.0
    %604 = vmatpush1.msra.mxu0 0.0
    %605 = vmatprep.subr.mxu0 0.0
    %606 = vmatpush1.msra.mxu0 0.0
    %607 = vmatprep.subr.mxu0 0.0
    %608 = vmatpush1.msra.mxu0 0.0
    %609 = vmatprep.subr.mxu0 0.0
    %610 = vmatpush1.msra.mxu0 0.0
    %611 = vmatprep.subr.mxu0 0.0
    %612 = vmatpush1.msra.mxu0 0.0
    %613 = vmatprep.subr.mxu0 0.0
    %614 = vmatpush1.msra.mxu0 0.0
    %615 = vmatprep.subr.mxu0 0.0
    %616 = vmatpush1.msra.mxu0 0.0
    %617 = vmatprep.subr.mxu0 0.0
    %618 = vmatpush1.msra.mxu0 0.0
    %619 = vmatprep.subr.mxu0 0.0
    %620 = vmatpush1.msra.mxu0 0.0
    %621 = vmatprep.subr.mxu0 0.0
    %622 = vmatpush1.msra.mxu0 0.0
    %623 = vmatprep.subr.mxu0 0.0
    %624 = vmatpush1.msra.mxu0 0.0
    %625 = vmatprep.subr.mxu0 0.0
    %626 = vmatpush1.msra.mxu0 0.0
    %627 = vmatprep.subr.mxu0 0.0
    %628 = vmatpush1.msra.mxu0 0.0
    %629 = vmatprep.mubr.f32.mxu0 0.0
    %630 = vmatmul.mubr.f32.gmra.mrb[0].mxu0 %v554
    %v631 = vpop.f32.mrb[0].mxu0
    %v632 = vadd.f32 0.0, %v631
    %v633 = vpop.f32.mrb[0].mxu0
    %634 = vmatprep.mubr.f32.mxu0 0.0
    %635 = vmatmul.mubr.f32.gmra.mrb[0].mxu0 %v557
    %v636 = vpop.f32.mrb[0].mxu0
    %v637 = vadd.f32 0.0, %v636
    %v638 = vpop.f32.mrb[0].mxu0
    %639 = vmatprep.mubr.f32.mxu0 0.0
    %640 = vmatmul.mubr.f32.gmra.mrb[0].mxu0 %v560
    %v641 = vpop.f32.mrb[0].mxu0
    %v642 = vadd.f32 0.0, %v641
    %v643 = vpop.f32.mrb[0].mxu0
    %644 = vmatprep.mubr.f32.mxu0 0.0
    %645 = vmatmul.mubr.f32.gmra.mrb[0].mxu0 %v563
    %v646 = vpop.f32.mrb[0].mxu0
    %v647 = vadd.f32 0.0, %v646
    %v648 = vpop.f32.mrb[0].mxu0
    %649 = vdwg.mxu0
    %v650 = vadd.f32 %v526, %v632
    %v651 = vadd.f32 %v531, %v637
    %v652 = vadd.f32 %v536, %v642
    %v653 = vadd.f32 %v541, %v647
    %v654 = vld [vmem:[%s4] sm:$0x1]
    %v656 = vlaneseq
    %v657 = vshrl.u32 %v656, 7
    %v658 = vsub.s32 0, %v657
    %v659 = vrot.slane %v654, %v658
    %v661 = vadd.f32 %v650, %v659
    %v662 = vadd.f32 %v651, %v659
    %v663 = vadd.f32 %v652, %v659
    %v664 = vadd.f32 %v653, %v659
    %v665 = vmax.f32 %v661, 0.0
    %v666 = vmax.f32 %v662, 0.0
    %v667 = vmax.f32 %v663, 0.0
    %v668 = vmax.f32 %v664, 0.0
    %v669 = vld [vmem:[%s5] sm:$0xff]
    %v670 = vld [vmem:[%s5 + $0x8] sm:$0xff]
    %v671 = vld [vmem:[%s5 + $0x10] sm:$0xff]
    %v672 = vld [vmem:[%s5 + $0x18] sm:$0xff]
    %v673 = vld [vmem:[%s5 + $0x20] sm:$0xff]
    %v674 = vld [vmem:[%s5 + $0x28] sm:$0xff]
    %v675 = vld [vmem:[%s5 + $0x30] sm:$0xff]
    %v676 = vld [vmem:[%s5 + $0x38] sm:$0xff]
    %v677 = vld [vmem:[%s5 + $0x40] sm:$0xff]
    %v678 = vld [vmem:[%s5 + $0x48] sm:$0xff]
    %v679 = vld [vmem:[%s5 + $0x50] sm:$0xff]
    %v680 = vld [vmem:[%s5 + $0x58] sm:$0xff]
    %v681 = vld [vmem:[%s5 + $0x60] sm:$0xff]
    %v682 = vld [vmem:[%s5 + $0x68] sm:$0xff]
    %v683 = vld [vmem:[%s5 + $0x70] sm:$0xff]
    %v684 = vld [vmem:[%s5 + $0x78] sm:$0xff]
    %685 = vmatprep.subr.mxu0 0.0
    %686 = vmatpush1.msra.mxu0 %v669
    %687 = vmatprep.subr.mxu0 0.0
    %688 = vmatpush1.msra.mxu0 %v670
    %689 = vmatprep.subr.mxu0 0.0
    %690 = vmatpush1.msra.mxu0 %v671
    %691 = vmatprep.subr.mxu0 0.0
    %692 = vmatpush1.msra.mxu0 %v672
    %693 = vmatprep.subr.mxu0 0.0
    %694 = vmatpush1.msra.mxu0 %v673
    %695 = vmatprep.subr.mxu0 0.0
    %696 = vmatpush1.msra.mxu0 %v674
    %697 = vmatprep.subr.mxu0 0.0
    %698 = vmatpush1.msra.mxu0 %v675
    %699 = vmatprep.subr.mxu0 0.0
    %700 = vmatpush1.msra.mxu0 %v676
    %701 = vmatprep.subr.mxu0 0.0
    %702 = vmatpush1.msra.mxu0 %v677
    %703 = vmatprep.subr.mxu0 0.0
    %704 = vmatpush1.msra.mxu0 %v678
    %705 = vmatprep.subr.mxu0 0.0
    %706 = vmatpush1.msra.mxu0 %v679
    %707 = vmatprep.subr.mxu0 0.0
    %708 = vmatpush1.msra.mxu0 %v680
    %709 = vmatprep.subr.mxu0 0.0
    %710 = vmatpush1.msra.mxu0 %v681
    %711 = vmatprep.subr.mxu0 0.0
    %712 = vmatpush1.msra.mxu0 %v682
    %713 = vmatprep.subr.mxu0 0.0
    %714 = vmatpush1.msra.mxu0 %v683
    %715 = vmatprep.subr.mxu0 0.0
    %716 = vmatpush1.msra.mxu0 %v684
    %717 = vmatprep.subr.mxu0 0.0
    %718 = vmatpush1.msra.mxu0 0.0
    %719 = vmatprep.subr.mxu0 0.0
    %720 = vmatpush1.msra.mxu0 0.0
    %721 = vmatprep.subr.mxu0 0.0
    %722 = vmatpush1.msra.mxu0 0.0
    %723 = vmatprep.subr.mxu0 0.0
    %724 = vmatpush1.msra.mxu0 0.0
    %725 = vmatprep.subr.mxu0 0.0
    %726 = vmatpush1.msra.mxu0 0.0
    %727 = vmatprep.subr.mxu0 0.0
    %728 = vmatpush1.msra.mxu0 0.0
    %729 = vmatprep.subr.mxu0 0.0
    %730 = vmatpush1.msra.mxu0 0.0
    %731 = vmatprep.subr.mxu0 0.0
    %732 = vmatpush1.msra.mxu0 0.0
    %733 = vmatprep.subr.mxu0 0.0
    %734 = vmatpush1.msra.mxu0 0.0
    %735 = vmatprep.subr.mxu0 0.0
    %736 = vmatpush1.msra.mxu0 0.0
    %737 = vmatprep.subr.mxu0 0.0
    %738 = vmatpush1.msra.mxu0 0.0
    %739 = vmatprep.subr.mxu0 0.0
    %740 = vmatpush1.msra.mxu0 0.0
    %741 = vmatprep.subr.mxu0 0.0
    %742 = vmatpush1.msra.mxu0 0.0
    %743 = vmatprep.subr.mxu0 0.0
    %744 = vmatpush1.msra.mxu0 0.0
    %745 = vmatprep.subr.mxu0 0.0
    %746 = vmatpush1.msra.mxu0 0.0
    %747 = vmatprep.subr.mxu0 0.0
    %748 = vmatpush1.msra.mxu0 0.0
    %749 = vmatprep.mubr.f32.mxu0 0.0
    %750 = vmatmul.mubr.f32.gmra.mrb[0].mxu0 %v665
    %v751 = vpop.f32.mrb[0].mxu0
    %v752 = vadd.f32 0.0, %v751
    %v753 = vpop.f32.mrb[0].mxu0
    %754 = vmatprep.mubr.f32.mxu0 0.0
    %755 = vmatmul.mubr.f32.gmra.mrb[0].mxu0 %v666
    %v756 = vpop.f32.mrb[0].mxu0
    %v757 = vadd.f32 0.0, %v756
    %v758 = vpop.f32.mrb[0].mxu0
    %759 = vmatprep.mubr.f32.mxu0 0.0
    %760 = vmatmul.mubr.f32.gmra.mrb[0].mxu0 %v667
    %v761 = vpop.f32.mrb[0].mxu0
    %v762 = vadd.f32 0.0, %v761
    %v763 = vpop.f32.mrb[0].mxu0
    %764 = vmatprep.mubr.f32.mxu0 0.0
    %765 = vmatmul.mubr.f32.gmra.mrb[0].mxu0 %v668
    %v766 = vpop.f32.mrb[0].mxu0
    %v767 = vadd.f32 0.0, %v766
    %v768 = vpop.f32.mrb[0].mxu0
    %769 = vdwg.mxu0
    %v770 = vadd.f32 %v752, %v757
    %v771 = vadd.f32 %v770, %v762
    %v772 = vadd.f32 %v771, %v767
    %v773 = vrot.slane %v772, 4
    %v774 = vadd.f32 %v772, %v773
    %v775 = vrot.slane %v774, 2
    %v776 = vadd.f32 %v774, %v775
    %v777 = vrot.slane %v776, 1
    %v778 = vadd.f32 %v776, %v777
    %v779 = vmul.f32 %v665, %v665
    %v780 = vmul.f32 %v666, %v666
    %v781 = vmul.f32 %v667, %v667
    %v782 = vmul.f32 %v668, %v668
    %783 = vmatprep.subr.mxu0 0.0
    %784 = vmatpush1.msra.mxu0 %v669
    %785 = vmatprep.subr.mxu0 0.0
    %786 = vmatpush1.msra.mxu0 %v670
    %787 = vmatprep.subr.mxu0 0.0
    %788 = vmatpush1.msra.mxu0 %v671
    %789 = vmatprep.subr.mxu0 0.0
    %790 = vmatpush1.msra.mxu0 %v672
    %791 = vmatprep.subr.mxu0 0.0
    %792 = vmatpush1.msra.mxu0 %v673
    %793 = vmatprep.subr.mxu0 0.0
    %794 = vmatpush1.msra.mxu0 %v674
    %795 = vmatprep.subr.mxu0 0.0
    %796 = vmatpush1.msra.mxu0 %v675
    %797 = vmatprep.subr.mxu0 0.0
    %798 = vmatpush1.msra.mxu0 %v676
    %799 = vmatprep.subr.mxu0 0.0
    %800 = vmatpush1.msra.mxu0 %v677
    %801 = vmatprep.subr.mxu0 0.0
    %802 = vmatpush1.msra.mxu0 %v678
    %803 = vmatprep.subr.mxu0 0.0
    %804 = vmatpush1.msra.mxu0 %v679
    %805 = vmatprep.subr.mxu0 0.0
    %806 = vmatpush1.msra.mxu0 %v680
    %807 = vmatprep.subr.mxu0 0.0
    %808 = vmatpush1.msra.mxu0 %v681
    %809 = vmatprep.subr.mxu0 0.0
    %810 = vmatpush1.msra.mxu0 %v682
    %811 = vmatprep.subr.mxu0 0.0
    %812 = vmatpush1.msra.mxu0 %v683
    %813 = vmatprep.subr.mxu0 0.0
    %814 = vmatpush1.msra.mxu0 %v684
    %815 = vmatprep.subr.mxu0 0.0
    %816 = vmatpush1.msra.mxu0 0.0
    %817 = vmatprep.subr.mxu0 0.0
    %818 = vmatpush1.msra.mxu0 0.0
    %819 = vmatprep.subr.mxu0 0.0
    %820 = vmatpush1.msra.mxu0 0.0
    %821 = vmatprep.subr.mxu0 0.0
    %822 = vmatpush1.msra.mxu0 0.0
    %823 = vmatprep.subr.mxu0 0.0
    %824 = vmatpush1.msra.mxu0 0.0
    %825 = vmatprep.subr.mxu0 0.0
    %826 = vmatpush1.msra.mxu0 0.0
    %827 = vmatprep.subr.mxu0 0.0
    %828 = vmatpush1.msra.mxu0 0.0
    %829 = vmatprep.subr.mxu0 0.0
    %830 = vmatpush1.msra.mxu0 0.0
    %831 = vmatprep.subr.mxu0 0.0
    %832 = vmatpush1.msra.mxu0 0.0
    %833 = vmatprep.subr.mxu0 0.0
    %834 = vmatpush1.msra.mxu0 0.0
    %835 = vmatprep.subr.mxu0 0.0
    %836 = vmatpush1.msra.mxu0 0.0
    %837 = vmatprep.subr.mxu0 0.0
    %838 = vmatpush1.msra.mxu0 0.0
    %839 = vmatprep.subr.mxu0 0.0
    %840 = vmatpush1.msra.mxu0 0.0
    %841 = vmatprep.subr.mxu0 0.0
    %842 = vmatpush1.msra.mxu0 0.0
    %843 = vmatprep.subr.mxu0 0.0
    %844 = vmatpush1.msra.mxu0 0.0
    %845 = vmatprep.subr.mxu0 0.0
    %846 = vmatpush1.msra.mxu0 0.0
    %847 = vmatprep.mubr.f32.mxu0 0.0
    %848 = vmatmul.mubr.f32.gmra.mrb[0].mxu0 %v779
    %v849 = vpop.f32.mrb[0].mxu0
    %v850 = vadd.f32 0.0, %v849
    %v851 = vpop.f32.mrb[0].mxu0
    %852 = vmatprep.mubr.f32.mxu0 0.0
    %853 = vmatmul.mubr.f32.gmra.mrb[0].mxu0 %v780
    %v854 = vpop.f32.mrb[0].mxu0
    %v855 = vadd.f32 0.0, %v854
    %v856 = vpop.f32.mrb[0].mxu0
    %857 = vmatprep.mubr.f32.mxu0 0.0
    %858 = vmatmul.mubr.f32.gmra.mrb[0].mxu0 %v781
    %v859 = vpop.f32.mrb[0].mxu0
    %v860 = vadd.f32 0.0, %v859
    %v861 = vpop.f32.mrb[0].mxu0
    %862 = vmatprep.mubr.f32.mxu0 0.0
    %863 = vmatmul.mubr.f32.gmra.mrb[0].mxu0 %v782
    %v864 = vpop.f32.mrb[0].mxu0
    %v865 = vadd.f32 0.0, %v864
    %v866 = vpop.f32.mrb[0].mxu0
    %867 = vdwg.mxu0
    %v868 = vadd.f32 %v850, %v855
    %v869 = vadd.f32 %v868, %v860
    %v870 = vadd.f32 %v869, %v865
    %v871 = vrot.slane %v870, 4
    %v872 = vadd.f32 %v870, %v871
    %v873 = vrot.slane %v872, 2
    %v874 = vadd.f32 %v872, %v873
    %v875 = vrot.slane %v874, 1
    %v876 = vadd.f32 %v874, %v875
    %v877 = vmul.f32 %v778, 0.001953125
    %v878 = vmul.f32 %v876, 0.001953125
    %v879 = vmul.f32 %v877, %v877
    %v880 = vsub.f32 %v878, %v879
    %v881 = vsub.f32 %v665, %v877
    %v882 = vsub.f32 %v666, %v877
    %v883 = vsub.f32 %v667, %v877
    %v884 = vsub.f32 %v668, %v877
    %v885 = vld [vmem:[%s6] sm:$0x1]
    %v886 = vadd.f32 %v880, 1e-05
    %v887 = vrsqrt.pop %v886
    %v888 = vmul.f32 %v885, %v887
    %v890 = vlaneseq
    %v891 = vshrl.u32 %v890, 7
    %v892 = vsub.s32 0, %v891
    %v893 = vrot.slane %v888, %v892
    %v895 = vmul.f32 %v881, %v893
    %v896 = vmul.f32 %v882, %v893
    %v897 = vmul.f32 %v883, %v893
    %v898 = vmul.f32 %v884, %v893
    %v899 = vld [vmem:[%s7] sm:$0x1]
    %v901 = vlaneseq
    %v902 = vshrl.u32 %v901, 7
    %v903 = vsub.s32 0, %v902
    %v904 = vrot.slane %v899, %v903
    %v906 = vadd.f32 %v895, %v904
    %v907 = vadd.f32 %v896, %v904
    %v908 = vadd.f32 %v897, %v904
    %v909 = vadd.f32 %v898, %v904
    %v910 = vmax.f32 %v906, 0.0
    %v911 = vmax.f32 %v907, 0.0
    %v912 = vmax.f32 %v908, 0.0
    %v913 = vmax.f32 %v909, 0.0
    %914 = vmatprep.subr.mxu0 0.0
    %915 = vmatpush1.msra.mxu0 %v910
    %916 = vmatprep.subr.mxu0 0.0
    %917 = vmatpush1.msra.mxu0 %v911
    %918 = vmatprep.subr.mxu0 0.0
    %919 = vmatpush1.msra.mxu0 %v912
    %920 = vmatprep.subr.mxu0 0.0
    %921 = vmatpush1.msra.mxu0 %v913
    %922 = vmatprep.subr.mxu0 0.0
    %923 = vmatpush1.msra.mxu0 0.0
    %924 = vmatprep.subr.mxu0 0.0
    %925 = vmatpush1.msra.mxu0 0.0
    %926 = vmatprep.subr.mxu0 0.0
    %927 = vmatpush1.msra.mxu0 0.0
    %928 = vmatprep.subr.mxu0 0.0
    %929 = vmatpush1.msra.mxu0 0.0
    %930 = vmatprep.subr.mxu0 0.0
    %931 = vmatpush1.msra.mxu0 0.0
    %932 = vmatprep.subr.mxu0 0.0
    %933 = vmatpush1.msra.mxu0 0.0
    %934 = vmatprep.subr.mxu0 0.0
    %935 = vmatpush1.msra.mxu0 0.0
    %936 = vmatprep.subr.mxu0 0.0
    %937 = vmatpush1.msra.mxu0 0.0
    %938 = vmatprep.subr.mxu0 0.0
    %939 = vmatpush1.msra.mxu0 0.0
    %940 = vmatprep.subr.mxu0 0.0
    %941 = vmatpush1.msra.mxu0 0.0
    %942 = vmatprep.subr.mxu0 0.0
    %943 = vmatpush1.msra.mxu0 0.0
    %944 = vmatprep.subr.mxu0 0.0
    %945 = vmatpush1.msra.mxu0 0.0
    %946 = vmatprep.subr.mxu0 0.0
    %947 = vmatpush1.msra.mxu0 0.0
    %948 = vmatprep.subr.mxu0 0.0
    %949 = vmatpush1.msra.mxu0 0.0
    %950 = vmatprep.subr.mxu0 0.0
    %951 = vmatpush1.msra.mxu0 0.0
    %952 = vmatprep.subr.mxu0 0.0
    %953 = vmatpush1.msra.mxu0 0.0
    %954 = vmatprep.subr.mxu0 0.0
    %955 = vmatpush1.msra.mxu0 0.0
    %956 = vmatprep.subr.mxu0 0.0
    %957 = vmatpush1.msra.mxu0 0.0
    %958 = vmatprep.subr.mxu0 0.0
    %959 = vmatpush1.msra.mxu0 0.0
    %960 = vmatprep.subr.mxu0 0.0
    %961 = vmatpush1.msra.mxu0 0.0
    %962 = vmatprep.subr.mxu0 0.0
    %963 = vmatpush1.msra.mxu0 0.0
    %964 = vmatprep.subr.mxu0 0.0
    %965 = vmatpush1.msra.mxu0 0.0
    %966 = vmatprep.subr.mxu0 0.0
    %967 = vmatpush1.msra.mxu0 0.0
    %968 = vmatprep.subr.mxu0 0.0
    %969 = vmatpush1.msra.mxu0 0.0
    %970 = vmatprep.subr.mxu0 0.0
    %971 = vmatpush1.msra.mxu0 0.0
    %972 = vmatprep.subr.mxu0 0.0
    %973 = vmatpush1.msra.mxu0 0.0
    %974 = vmatprep.subr.mxu0 0.0
    %975 = vmatpush1.msra.mxu0 0.0
    %976 = vmatprep.subr.mxu0 0.0
    %977 = vmatpush1.msra.mxu0 0.0
    %978 = vmatprep.mubr.f32.mxu0 0.0
    %979 = vmatmul.mubr.f32.gmra.mrb[0].mxu0 %v135
    %v980 = vpop.f32.mrb[0].mxu0
    %v981 = vadd.f32 0.0, %v980
    %v982 = vpop.f32.mrb[0].mxu0
    %983 = vmatprep.mubr.f32.mxu0 0.0
    %984 = vmatmul.mubr.f32.gmra.mrb[0].mxu0 %v138
    %v985 = vpop.f32.mrb[0].mxu0
    %v986 = vadd.f32 0.0, %v985
    %v987 = vpop.f32.mrb[0].mxu0
    %988 = vmatprep.mubr.f32.mxu0 0.0
    %989 = vmatmul.mubr.f32.gmra.mrb[0].mxu0 %v141
    %v990 = vpop.f32.mrb[0].mxu0
    %v991 = vadd.f32 0.0, %v990
    %v992 = vpop.f32.mrb[0].mxu0
    %993 = vmatprep.mubr.f32.mxu0 0.0
    %994 = vmatmul.mubr.f32.gmra.mrb[0].mxu0 %v144
    %v995 = vpop.f32.mrb[0].mxu0
    %v996 = vadd.f32 0.0, %v995
    %v997 = vpop.f32.mrb[0].mxu0
    %998 = vdwg.mxu0
    %999 = vmatprep.subr.mxu0 0.0
    %1000 = vmatpush1.msra.mxu0 %v910
    %1001 = vmatprep.subr.mxu0 0.0
    %1002 = vmatpush1.msra.mxu0 %v911
    %1003 = vmatprep.subr.mxu0 0.0
    %1004 = vmatpush1.msra.mxu0 %v912
    %1005 = vmatprep.subr.mxu0 0.0
    %1006 = vmatpush1.msra.mxu0 %v913
    %1007 = vmatprep.subr.mxu0 0.0
    %1008 = vmatpush1.msra.mxu0 0.0
    %1009 = vmatprep.subr.mxu0 0.0
    %1010 = vmatpush1.msra.mxu0 0.0
    %1011 = vmatprep.subr.mxu0 0.0
    %1012 = vmatpush1.msra.mxu0 0.0
    %1013 = vmatprep.subr.mxu0 0.0
    %1014 = vmatpush1.msra.mxu0 0.0
    %1015 = vmatprep.subr.mxu0 0.0
    %1016 = vmatpush1.msra.mxu0 0.0
    %1017 = vmatprep.subr.mxu0 0.0
    %1018 = vmatpush1.msra.mxu0 0.0
    %1019 = vmatprep.subr.mxu0 0.0
    %1020 = vmatpush1.msra.mxu0 0.0
    %1021 = vmatprep.subr.mxu0 0.0
    %1022 = vmatpush1.msra.mxu0 0.0
    %1023 = vmatprep.subr.mxu0 0.0
    %1024 = vmatpush1.msra.mxu0 0.0
    %1025 = vmatprep.subr.mxu0 0.0
    %1026 = vmatpush1.msra.mxu0 0.0
    %1027 = vmatprep.subr.mxu0 0.0
    %1028 = vmatpush1.msra.mxu0 0.0
    %1029 = vmatprep.subr.mxu0 0.0
    %1030 = vmatpush1.msra.mxu0 0.0
    %1031 = vmatprep.subr.mxu0 0.0
    %1032 = vmatpush1.msra.mxu0 0.0
    %1033 = vmatprep.subr.mxu0 0.0
    %1034 = vmatpush1.msra.mxu0 0.0
    %1035 = vmatprep.subr.mxu0 0.0
    %1036 = vmatpush1.msra.mxu0 0.0
    %1037 = vmatprep.subr.mxu0 0.0
    %1038 = vmatpush1.msra.mxu0 0.0
    %1039 = vmatprep.subr.mxu0 0.0
    %1040 = vmatpush1.msra.mxu0 0.0
    %1041 = vmatprep.subr.mxu0 0.0
    %1042 = vmatpush1.msra.mxu0 0.0
    %1043 = vmatprep.subr.mxu0 0.0
    %1044 = vmatpush1.msra.mxu0 0.0
    %1045 = vmatprep.subr.mxu0 0.0
    %1046 = vmatpush1.msra.mxu0 0.0
    %1047 = vmatprep.subr.mxu0 0.0
    %1048 = vmatpush1.msra.mxu0 0.0
    %1049 = vmatprep.subr.mxu0 0.0
    %1050 = vmatpush1.msra.mxu0 0.0
    %1051 = vmatprep.subr.mxu0 0.0
    %1052 = vmatpush1.msra.mxu0 0.0
    %1053 = vmatprep.subr.mxu0 0.0
    %1054 = vmatpush1.msra.mxu0 0.0
    %1055 = vmatprep.subr.mxu0 0.0
    %1056 = vmatpush1.msra.mxu0 0.0
    %1057 = vmatprep.subr.mxu0 0.0
    %1058 = vmatpush1.msra.mxu0 0.0
    %1059 = vmatprep.subr.mxu0 0.0
    %1060 = vmatpush1.msra.mxu0 0.0
    %1061 = vmatprep.subr.mxu0 0.0
    %1062 = vmatpush1.msra.mxu0 0.0
    %1063 = vmatprep.mubr.f32.mxu0 0.0
    %1064 = vmatmul.mubr.f32.gmra.mrb[0].mxu0 %v236
    %v1065 = vpop.f32.mrb[0].mxu0
    %v1066 = vadd.f32 0.0, %v1065
    %v1067 = vpop.f32.mrb[0].mxu0
    %1068 = vmatprep.mubr.f32.mxu0 0.0
    %1069 = vmatmul.mubr.f32.gmra.mrb[0].mxu0 %v239
    %v1070 = vpop.f32.mrb[0].mxu0
    %v1071 = vadd.f32 0.0, %v1070
    %v1072 = vpop.f32.mrb[0].mxu0
    %1073 = vmatprep.mubr.f32.mxu0 0.0
    %1074 = vmatmul.mubr.f32.gmra.mrb[0].mxu0 %v242
    %v1075 = vpop.f32.mrb[0].mxu0
    %v1076 = vadd.f32 0.0, %v1075
    %v1077 = vpop.f32.mrb[0].mxu0
    %1078 = vmatprep.mubr.f32.mxu0 0.0
    %1079 = vmatmul.mubr.f32.gmra.mrb[0].mxu0 %v245
    %v1080 = vpop.f32.mrb[0].mxu0
    %v1081 = vadd.f32 0.0, %v1080
    %v1082 = vpop.f32.mrb[0].mxu0
    %1083 = vdwg.mxu0
    %v1084 = vld [vmem:[%s8] sm:$0xff]
    %v1085 = vld [vmem:[%s8 + $0x8] sm:$0xff]
    %v1086 = vld [vmem:[%s8 + $0x10] sm:$0xff]
    %v1087 = vld [vmem:[%s8 + $0x18] sm:$0xff]
    %v1088 = vld [vmem:[%s8 + $0x20] sm:$0xff]
    %v1089 = vld [vmem:[%s8 + $0x28] sm:$0xff]
    %v1090 = vld [vmem:[%s8 + $0x30] sm:$0xff]
    %v1091 = vld [vmem:[%s8 + $0x38] sm:$0xff]
    %v1092 = vld [vmem:[%s8 + $0x40] sm:$0xff]
    %v1093 = vld [vmem:[%s8 + $0x48] sm:$0xff]
    %v1094 = vld [vmem:[%s8 + $0x50] sm:$0xff]
    %v1095 = vld [vmem:[%s8 + $0x58] sm:$0xff]
    %v1096 = vld [vmem:[%s8 + $0x60] sm:$0xff]
    %v1097 = vld [vmem:[%s8 + $0x68] sm:$0xff]
    %v1098 = vld [vmem:[%s8 + $0x70] sm:$0xff]
    %v1099 = vld [vmem:[%s8 + $0x78] sm:$0xff]
    %s1100 = scalar_lea.vmem %s8, 128
    %v1101 = vld [vmem:[%s1100] sm:$0xff]
    %v1102 = vld [vmem:[%s1100 + $0x8] sm:$0xff]
    %v1103 = vld [vmem:[%s1100 + $0x10] sm:$0xff]
    %v1104 = vld [vmem:[%s1100 + $0x18] sm:$0xff]
    %v1105 = vld [vmem:[%s1100 + $0x20] sm:$0xff]
    %v1106 = vld [vmem:[%s1100 + $0x28] sm:$0xff]
    %v1107 = vld [vmem:[%s1100 + $0x30] sm:$0xff]
    %v1108 = vld [vmem:[%s1100 + $0x38] sm:$0xff]
    %v1109 = vld [vmem:[%s1100 + $0x40] sm:$0xff]
    %v1110 = vld [vmem:[%s1100 + $0x48] sm:$0xff]
    %v1111 = vld [vmem:[%s1100 + $0x50] sm:$0xff]
    %v1112 = vld [vmem:[%s1100 + $0x58] sm:$0xff]
    %v1113 = vld [vmem:[%s1100 + $0x60] sm:$0xff]
    %v1114 = vld [vmem:[%s1100 + $0x68] sm:$0xff]
    %v1115 = vld [vmem:[%s1100 + $0x70] sm:$0xff]
    %v1116 = vld [vmem:[%s1100 + $0x78] sm:$0xff]
    %1117 = vmatprep.subr.mxu0 0.0
    %1118 = vmatpush1.msra.mxu0 %v1101
    %1119 = vmatprep.subr.mxu0 0.0
    %1120 = vmatpush1.msra.mxu0 %v1102
    %1121 = vmatprep.subr.mxu0 0.0
    %1122 = vmatpush1.msra.mxu0 %v1103
    %1123 = vmatprep.subr.mxu0 0.0
    %1124 = vmatpush1.msra.mxu0 %v1104
    %1125 = vmatprep.subr.mxu0 0.0
    %1126 = vmatpush1.msra.mxu0 %v1105
    %1127 = vmatprep.subr.mxu0 0.0
    %1128 = vmatpush1.msra.mxu0 %v1106
    %1129 = vmatprep.subr.mxu0 0.0
    %1130 = vmatpush1.msra.mxu0 %v1107
    %1131 = vmatprep.subr.mxu0 0.0
    %1132 = vmatpush1.msra.mxu0 %v1108
    %1133 = vmatprep.subr.mxu0 0.0
    %1134 = vmatpush1.msra.mxu0 %v1109
    %1135 = vmatprep.subr.mxu0 0.0
    %1136 = vmatpush1.msra.mxu0 %v1110
    %1137 = vmatprep.subr.mxu0 0.0
    %1138 = vmatpush1.msra.mxu0 %v1111
    %1139 = vmatprep.subr.mxu0 0.0
    %1140 = vmatpush1.msra.mxu0 %v1112
    %1141 = vmatprep.subr.mxu0 0.0
    %1142 = vmatpush1.msra.mxu0 %v1113
    %1143 = vmatprep.subr.mxu0 0.0
    %1144 = vmatpush1.msra.mxu0 %v1114
    %1145 = vmatprep.subr.mxu0 0.0
    %1146 = vmatpush1.msra.mxu0 %v1115
    %1147 = vmatprep.subr.mxu0 0.0
    %1148 = vmatpush1.msra.mxu0 %v1116
    %1149 = vmatprep.subr.mxu0 0.0
    %1150 = vmatpush1.msra.mxu0 0.0
    %1151 = vmatprep.subr.mxu0 0.0
    %1152 = vmatpush1.msra.mxu0 0.0
    %1153 = vmatprep.subr.mxu0 0.0
    %1154 = vmatpush1.msra.mxu0 0.0
    %1155 = vmatprep.subr.mxu0 0.0
    %1156 = vmatpush1.msra.mxu0 0.0
    %1157 = vmatprep.subr.mxu0 0.0
    %1158 = vmatpush1.msra.mxu0 0.0
    %1159 = vmatprep.subr.mxu0 0.0
    %1160 = vmatpush1.msra.mxu0 0.0
    %1161 = vmatprep.subr.mxu0 0.0
    %1162 = vmatpush1.msra.mxu0 0.0
    %1163 = vmatprep.subr.mxu0 0.0
    %1164 = vmatpush1.msra.mxu0 0.0
    %1165 = vmatprep.subr.mxu0 0.0
    %1166 = vmatpush1.msra.mxu0 0.0
    %1167 = vmatprep.subr.mxu0 0.0
    %1168 = vmatpush1.msra.mxu0 0.0
    %1169 = vmatprep.subr.mxu0 0.0
    %1170 = vmatpush1.msra.mxu0 0.0
    %1171 = vmatprep.subr.mxu0 0.0
    %1172 = vmatpush1.msra.mxu0 0.0
    %1173 = vmatprep.subr.mxu0 0.0
    %1174 = vmatpush1.msra.mxu0 0.0
    %1175 = vmatprep.subr.mxu0 0.0
    %1176 = vmatpush1.msra.mxu0 0.0
    %1177 = vmatprep.subr.mxu0 0.0
    %1178 = vmatpush1.msra.mxu0 0.0
    %1179 = vmatprep.subr.mxu0 0.0
    %1180 = vmatpush1.msra.mxu0 0.0
    %1181 = vmatprep.mubr.f32.mxu0 0.0
    %1182 = vmatmul.mubr.f32.gmra.mrb[0].mxu0 %v910
    %v1183 = vpop.f32.mrb[0].mxu0
    %v1184 = vadd.f32 0.0, %v1183
    %v1185 = vpop.f32.mrb[0].mxu0
    %1186 = vmatprep.mubr.f32.mxu0 0.0
    %1187 = vmatmul.mubr.f32.gmra.mrb[0].mxu0 %v911
    %v1188 = vpop.f32.mrb[0].mxu0
    %v1189 = vadd.f32 0.0, %v1188
    %v1190 = vpop.f32.mrb[0].mxu0
    %1191 = vmatprep.mubr.f32.mxu0 0.0
    %1192 = vmatmul.mubr.f32.gmra.mrb[0].mxu0 %v912
    %v1193 = vpop.f32.mrb[0].mxu0
    %v1194 = vadd.f32 0.0, %v1193
    %v1195 = vpop.f32.mrb[0].mxu0
    %1196 = vmatprep.mubr.f32.mxu0 0.0
    %1197 = vmatmul.mubr.f32.gmra.mrb[0].mxu0 %v913
    %v1198 = vpop.f32.mrb[0].mxu0
    %v1199 = vadd.f32 0.0, %v1198
    %v1200 = vpop.f32.mrb[0].mxu0
    %1201 = vdwg.mxu0
    %1202 = vmatprep.subr.mxu0 0.0
    %1203 = vmatpush1.msra.mxu0 %v1084
    %1204 = vmatprep.subr.mxu0 0.0
    %1205 = vmatpush1.msra.mxu0 %v1085
    %1206 = vmatprep.subr.mxu0 0.0
    %1207 = vmatpush1.msra.mxu0 %v1086
    %1208 = vmatprep.subr.mxu0 0.0
    %1209 = vmatpush1.msra.mxu0 %v1087
    %1210 = vmatprep.subr.mxu0 0.0
    %1211 = vmatpush1.msra.mxu0 %v1088
    %1212 = vmatprep.subr.mxu0 0.0
    %1213 = vmatpush1.msra.mxu0 %v1089
    %1214 = vmatprep.subr.mxu0 0.0
    %1215 = vmatpush1.msra.mxu0 %v1090
    %1216 = vmatprep.subr.mxu0 0.0
    %1217 = vmatpush1.msra.mxu0 %v1091
    %1218 = vmatprep.subr.mxu0 0.0
    %1219 = vmatpush1.msra.mxu0 %v1092
    %1220 = vmatprep.subr.mxu0 0.0
    %1221 = vmatpush1.msra.mxu0 %v1093
    %1222 = vmatprep.subr.mxu0 0.0
    %1223 = vmatpush1.msra.mxu0 %v1094
    %1224 = vmatprep.subr.mxu0 0.0
    %1225 = vmatpush1.msra.mxu0 %v1095
    %1226 = vmatprep.subr.mxu0 0.0
    %1227 = vmatpush1.msra.mxu0 %v1096
    %1228 = vmatprep.subr.mxu0 0.0
    %1229 = vmatpush1.msra.mxu0 %v1097
    %1230 = vmatprep.subr.mxu0 0.0
    %1231 = vmatpush1.msra.mxu0 %v1098
    %1232 = vmatprep.subr.mxu0 0.0
    %1233 = vmatpush1.msra.mxu0 %v1099
    %1234 = vmatprep.subr.mxu0 0.0
    %1235 = vmatpush1.msra.mxu0 0.0
    %1236 = vmatprep.subr.mxu0 0.0
    %1237 = vmatpush1.msra.mxu0 0.0
    %1238 = vmatprep.subr.mxu0 0.0
    %1239 = vmatpush1.msra.mxu0 0.0
    %1240 = vmatprep.subr.mxu0 0.0
    %1241 = vmatpush1.msra.mxu0 0.0
    %1242 = vmatprep.subr.mxu0 0.0
    %1243 = vmatpush1.msra.mxu0 0.0
    %1244 = vmatprep.subr.mxu0 0.0
    %1245 = vmatpush1.msra.mxu0 0.0
    %1246 = vmatprep.subr.mxu0 0.0
    %1247 = vmatpush1.msra.mxu0 0.0
    %1248 = vmatprep.subr.mxu0 0.0
    %1249 = vmatpush1.msra.mxu0 0.0
    %1250 = vmatprep.subr.mxu0 0.0
    %1251 = vmatpush1.msra.mxu0 0.0
    %1252 = vmatprep.subr.mxu0 0.0
    %1253 = vmatpush1.msra.mxu0 0.0
    %1254 = vmatprep.subr.mxu0 0.0
    %1255 = vmatpush1.msra.mxu0 0.0
    %1256 = vmatprep.subr.mxu0 0.0
    %1257 = vmatpush1.msra.mxu0 0.0
    %1258 = vmatprep.subr.mxu0 0.0
    %1259 = vmatpush1.msra.mxu0 0.0
    %1260 = vmatprep.subr.mxu0 0.0
    %1261 = vmatpush1.msra.mxu0 0.0
    %1262 = vmatprep.subr.mxu0 0.0
    %1263 = vmatpush1.msra.mxu0 0.0
    %1264 = vmatprep.subr.mxu0 0.0
    %1265 = vmatpush1.msra.mxu0 0.0
    %1266 = vmatprep.mubr.f32.mxu0 0.0
    %1267 = vmatmul.mubr.f32.gmra.mrb[0].mxu0 %v981
    %v1268 = vpop.f32.mrb[0].mxu0
    %v1269 = vadd.f32 %v1184, %v1268
    %v1270 = vpop.f32.mrb[0].mxu0
    %1271 = vmatprep.mubr.f32.mxu0 0.0
    %1272 = vmatmul.mubr.f32.gmra.mrb[0].mxu0 %v986
    %v1273 = vpop.f32.mrb[0].mxu0
    %v1274 = vadd.f32 %v1189, %v1273
    %v1275 = vpop.f32.mrb[0].mxu0
    %1276 = vmatprep.mubr.f32.mxu0 0.0
    %1277 = vmatmul.mubr.f32.gmra.mrb[0].mxu0 %v991
    %v1278 = vpop.f32.mrb[0].mxu0
    %v1279 = vadd.f32 %v1194, %v1278
    %v1280 = vpop.f32.mrb[0].mxu0
    %1281 = vmatprep.mubr.f32.mxu0 0.0
    %1282 = vmatmul.mubr.f32.gmra.mrb[0].mxu0 %v996
    %v1283 = vpop.f32.mrb[0].mxu0
    %v1284 = vadd.f32 %v1199, %v1283
    %v1285 = vpop.f32.mrb[0].mxu0
    %1286 = vdwg.mxu0
    %s1287 = scalar_lea.vmem %s8, 256
    %v1288 = vld [vmem:[%s1287] sm:$0xff]
    %v1289 = vld [vmem:[%s1287 + $0x8] sm:$0xff]
    %v1290 = vld [vmem:[%s1287 + $0x10] sm:$0xff]
    %v1291 = vld [vmem:[%s1287 + $0x18] sm:$0xff]
    %v1292 = vld [vmem:[%s1287 + $0x20] sm:$0xff]
    %v1293 = vld [vmem:[%s1287 + $0x28] sm:$0xff]
    %v1294 = vld [vmem:[%s1287 + $0x30] sm:$0xff]
    %v1295 = vld [vmem:[%s1287 + $0x38] sm:$0xff]
    %v1296 = vld [vmem:[%s1287 + $0x40] sm:$0xff]
    %v1297 = vld [vmem:[%s1287 + $0x48] sm:$0xff]
    %v1298 = vld [vmem:[%s1287 + $0x50] sm:$0xff]
    %v1299 = vld [vmem:[%s1287 + $0x58] sm:$0xff]
    %v1300 = vld [vmem:[%s1287 + $0x60] sm:$0xff]
    %v1301 = vld [vmem:[%s1287 + $0x68] sm:$0xff]
    %v1302 = vld [vmem:[%s1287 + $0x70] sm:$0xff]
    %v1303 = vld [vmem:[%s1287 + $0x78] sm:$0xff]
    %1304 = vmatprep.subr.mxu0 0.0
    %1305 = vmatpush1.msra.mxu0 %v1288
    %1306 = vmatprep.subr.mxu0 0.0
    %1307 = vmatpush1.msra.mxu0 %v1289
    %1308 = vmatprep.subr.mxu0 0.0
    %1309 = vmatpush1.msra.mxu0 %v1290
    %1310 = vmatprep.subr.mxu0 0.0
    %1311 = vmatpush1.msra.mxu0 %v1291
    %1312 = vmatprep.subr.mxu0 0.0
    %1313 = vmatpush1.msra.mxu0 %v1292
    %1314 = vmatprep.subr.mxu0 0.0
    %1315 = vmatpush1.msra.mxu0 %v1293
    %1316 = vmatprep.subr.mxu0 0.0
    %1317 = vmatpush1.msra.mxu0 %v1294
    %1318 = vmatprep.subr.mxu0 0.0
    %1319 = vmatpush1.msra.mxu0 %v1295
    %1320 = vmatprep.subr.mxu0 0.0
    %1321 = vmatpush1.msra.mxu0 %v1296
    %1322 = vmatprep.subr.mxu0 0.0
    %1323 = vmatpush1.msra.mxu0 %v1297
    %1324 = vmatprep.subr.mxu0 0.0
    %1325 = vmatpush1.msra.mxu0 %v1298
    %1326 = vmatprep.subr.mxu0 0.0
    %1327 = vmatpush1.msra.mxu0 %v1299
    %1328 = vmatprep.subr.mxu0 0.0
    %1329 = vmatpush1.msra.mxu0 %v1300
    %1330 = vmatprep.subr.mxu0 0.0
    %1331 = vmatpush1.msra.mxu0 %v1301
    %1332 = vmatprep.subr.mxu0 0.0
    %1333 = vmatpush1.msra.mxu0 %v1302
    %1334 = vmatprep.subr.mxu0 0.0
    %1335 = vmatpush1.msra.mxu0 %v1303
    %1336 = vmatprep.subr.mxu0 0.0
    %1337 = vmatpush1.msra.mxu0 0.0
    %1338 = vmatprep.subr.mxu0 0.0
    %1339 = vmatpush1.msra.mxu0 0.0
    %1340 = vmatprep.subr.mxu0 0.0
    %1341 = vmatpush1.msra.mxu0 0.0
    %1342 = vmatprep.subr.mxu0 0.0
    %1343 = vmatpush1.msra.mxu0 0.0
    %1344 = vmatprep.subr.mxu0 0.0
    %1345 = vmatpush1.msra.mxu0 0.0
    %1346 = vmatprep.subr.mxu0 0.0
    %1347 = vmatpush1.msra.mxu0 0.0
    %1348 = vmatprep.subr.mxu0 0.0
    %1349 = vmatpush1.msra.mxu0 0.0
    %1350 = vmatprep.subr.mxu0 0.0
    %1351 = vmatpush1.msra.mxu0 0.0
    %1352 = vmatprep.subr.mxu0 0.0
    %1353 = vmatpush1.msra.mxu0 0.0
    %1354 = vmatprep.subr.mxu0 0.0
    %1355 = vmatpush1.msra.mxu0 0.0
    %1356 = vmatprep.subr.mxu0 0.0
    %1357 = vmatpush1.msra.mxu0 0.0
    %1358 = vmatprep.subr.mxu0 0.0
    %1359 = vmatpush1.msra.mxu0 0.0
    %1360 = vmatprep.subr.mxu0 0.0
    %1361 = vmatpush1.msra.mxu0 0.0
    %1362 = vmatprep.subr.mxu0 0.0
    %1363 = vmatpush1.msra.mxu0 0.0
    %1364 = vmatprep.subr.mxu0 0.0
    %1365 = vmatpush1.msra.mxu0 0.0
    %1366 = vmatprep.subr.mxu0 0.0
    %1367 = vmatpush1.msra.mxu0 0.0
    %1368 = vmatprep.mubr.f32.mxu0 0.0
    %1369 = vmatmul.mubr.f32.gmra.mrb[0].mxu0 %v1066
    %v1370 = vpop.f32.mrb[0].mxu0
    %v1371 = vadd.f32 0.0, %v1370
    %v1372 = vpop.f32.mrb[0].mxu0
    %1373 = vmatprep.mubr.f32.mxu0 0.0
    %1374 = vmatmul.mubr.f32.gmra.mrb[0].mxu0 %v1071
    %v1375 = vpop.f32.mrb[0].mxu0
    %v1376 = vadd.f32 0.0, %v1375
    %v1377 = vpop.f32.mrb[0].mxu0
    %1378 = vmatprep.mubr.f32.mxu0 0.0
    %1379 = vmatmul.mubr.f32.gmra.mrb[0].mxu0 %v1076
    %v1380 = vpop.f32.mrb[0].mxu0
    %v1381 = vadd.f32 0.0, %v1380
    %v1382 = vpop.f32.mrb[0].mxu0
    %1383 = vmatprep.mubr.f32.mxu0 0.0
    %1384 = vmatmul.mubr.f32.gmra.mrb[0].mxu0 %v1081
    %v1385 = vpop.f32.mrb[0].mxu0
    %v1386 = vadd.f32 0.0, %v1385
    %v1387 = vpop.f32.mrb[0].mxu0
    %1388 = vdwg.mxu0
    %v1389 = vadd.f32 %v1269, %v1371
    %v1390 = vadd.f32 %v1274, %v1376
    %v1391 = vadd.f32 %v1279, %v1381
    %v1392 = vadd.f32 %v1284, %v1386
    %v1393 = vld [vmem:[%s9] sm:$0x1]
    %v1395 = vlaneseq
    %v1396 = vshrl.u32 %v1395, 7
    %v1397 = vsub.s32 0, %v1396
    %v1398 = vrot.slane %v1393, %v1397
    %v1400 = vadd.f32 %v1389, %v1398
    %v1401 = vadd.f32 %v1390, %v1398
    %v1402 = vadd.f32 %v1391, %v1398
    %v1403 = vadd.f32 %v1392, %v1398
    %v1404 = vld [vmem:[%s10] sm:$0xff]
    %v1405 = vld [vmem:[%s10 + $0x8] sm:$0xff]
    %v1406 = vld [vmem:[%s10 + $0x10] sm:$0xff]
    %v1407 = vld [vmem:[%s10 + $0x18] sm:$0xff]
    %v1408 = vld [vmem:[%s10 + $0x20] sm:$0xff]
    %v1409 = vld [vmem:[%s10 + $0x28] sm:$0xff]
    %v1410 = vld [vmem:[%s10 + $0x30] sm:$0xff]
    %v1411 = vld [vmem:[%s10 + $0x38] sm:$0xff]
    %v1413 = vsel %vm349, %v1400, 0
    %v1416 = vsel %vm349, %v1401, 0
    %v1419 = vsel %vm349, %v1402, 0
    %v1422 = vsel %vm349, %v1403, 0
    %1424 = vmatprep.subr.mxu0 0.0
    %1425 = vmatpush1.msra.mxu0 %v1404
    %1426 = vmatprep.subr.mxu0 0.0
    %1427 = vmatpush1.msra.mxu0 %v1405
    %1428 = vmatprep.subr.mxu0 0.0
    %1429 = vmatpush1.msra.mxu0 %v1406
    %1430 = vmatprep.subr.mxu0 0.0
    %1431 = vmatpush1.msra.mxu0 %v1407
    %1432 = vmatprep.subr.mxu0 0.0
    %1433 = vmatpush1.msra.mxu0 %v1408
    %1434 = vmatprep.subr.mxu0 0.0
    %1435 = vmatpush1.msra.mxu0 %v1409
    %1436 = vmatprep.subr.mxu0 0.0
    %1437 = vmatpush1.msra.mxu0 %v1410
    %1438 = vmatprep.subr.mxu0 0.0
    %1439 = vmatpush1.msra.mxu0 %v1411
    %1440 = vmatprep.subr.mxu0 0.0
    %1441 = vmatpush1.msra.mxu0 0.0
    %1442 = vmatprep.subr.mxu0 0.0
    %1443 = vmatpush1.msra.mxu0 0.0
    %1444 = vmatprep.subr.mxu0 0.0
    %1445 = vmatpush1.msra.mxu0 0.0
    %1446 = vmatprep.subr.mxu0 0.0
    %1447 = vmatpush1.msra.mxu0 0.0
    %1448 = vmatprep.subr.mxu0 0.0
    %1449 = vmatpush1.msra.mxu0 0.0
    %1450 = vmatprep.subr.mxu0 0.0
    %1451 = vmatpush1.msra.mxu0 0.0
    %1452 = vmatprep.subr.mxu0 0.0
    %1453 = vmatpush1.msra.mxu0 0.0
    %1454 = vmatprep.subr.mxu0 0.0
    %1455 = vmatpush1.msra.mxu0 0.0
    %1456 = vmatprep.subr.mxu0 0.0
    %1457 = vmatpush1.msra.mxu0 0.0
    %1458 = vmatprep.subr.mxu0 0.0
    %1459 = vmatpush1.msra.mxu0 0.0
    %1460 = vmatprep.subr.mxu0 0.0
    %1461 = vmatpush1.msra.mxu0 0.0
    %1462 = vmatprep.subr.mxu0 0.0
    %1463 = vmatpush1.msra.mxu0 0.0
    %1464 = vmatprep.subr.mxu0 0.0
    %1465 = vmatpush1.msra.mxu0 0.0
    %1466 = vmatprep.subr.mxu0 0.0
    %1467 = vmatpush1.msra.mxu0 0.0
    %1468 = vmatprep.subr.mxu0 0.0
    %1469 = vmatpush1.msra.mxu0 0.0
    %1470 = vmatprep.subr.mxu0 0.0
    %1471 = vmatpush1.msra.mxu0 0.0
    %1472 = vmatprep.subr.mxu0 0.0
    %1473 = vmatpush1.msra.mxu0 0.0
    %1474 = vmatprep.subr.mxu0 0.0
    %1475 = vmatpush1.msra.mxu0 0.0
    %1476 = vmatprep.subr.mxu0 0.0
    %1477 = vmatpush1.msra.mxu0 0.0
    %1478 = vmatprep.subr.mxu0 0.0
    %1479 = vmatpush1.msra.mxu0 0.0
    %1480 = vmatprep.subr.mxu0 0.0
    %1481 = vmatpush1.msra.mxu0 0.0
    %1482 = vmatprep.subr.mxu0 0.0
    %1483 = vmatpush1.msra.mxu0 0.0
    %1484 = vmatprep.subr.mxu0 0.0
    %1485 = vmatpush1.msra.mxu0 0.0
    %1486 = vmatprep.subr.mxu0 0.0
    %1487 = vmatpush1.msra.mxu0 0.0
    %1488 = vmatprep.mubr.f32.mxu0 0.0
    %1489 = vmatmul.mubr.f32.gmra.mrb[0].mxu0 %v1413
    %v1490 = vpop.f32.mrb[0].mxu0
    %v1491 = vadd.f32 0.0, %v1490
    %v1492 = vpop.f32.mrb[0].mxu0
    %1493 = vmatprep.mubr.f32.mxu0 0.0
    %1494 = vmatmul.mubr.f32.gmra.mrb[0].mxu0 %v1416
    %v1495 = vpop.f32.mrb[0].mxu0
    %v1496 = vadd.f32 0.0, %v1495
    %v1497 = vpop.f32.mrb[0].mxu0
    %1498 = vmatprep.mubr.f32.mxu0 0.0
    %1499 = vmatmul.mubr.f32.gmra.mrb[0].mxu0 %v1419
    %v1500 = vpop.f32.mrb[0].mxu0
    %v1501 = vadd.f32 0.0, %v1500
    %v1502 = vpop.f32.mrb[0].mxu0
    %1503 = vmatprep.mubr.f32.mxu0 0.0
    %1504 = vmatmul.mubr.f32.gmra.mrb[0].mxu0 %v1422
    %v1505 = vpop.f32.mrb[0].mxu0
    %v1506 = vadd.f32 0.0, %v1505
    %v1507 = vpop.f32.mrb[0].mxu0
    %1508 = vdwg.mxu0
    %v1509 = vsel %vm349, %v1491, 0.0
    %v1510 = vsel %vm349, %v1496, 0.0
    %v1511 = vadd.f32 %v1509, %v1510
    %v1512 = vsel %vm349, %v1501, 0.0
    %v1513 = vadd.f32 %v1511, %v1512
    %v1514 = vsel %vm349, %v1506, 0.0
    %v1515 = vadd.f32 %v1513, %v1514
    %v1516 = vrot.slane %v1515, 4
    %v1517 = vadd.f32 %v1515, %v1516
    %v1518 = vrot.slane %v1517, 2
    %v1519 = vadd.f32 %v1517, %v1518
    %v1520 = vrot.slane %v1519, 1
    %v1521 = vadd.f32 %v1519, %v1520
    %v1522 = vmul.f32 %v1400, %v1400
    %v1523 = vmul.f32 %v1401, %v1401
    %v1524 = vmul.f32 %v1402, %v1402
    %v1525 = vmul.f32 %v1403, %v1403
    %v1527 = vsel %vm349, %v1522, 0
    %v1530 = vsel %vm349, %v1523, 0
    %v1533 = vsel %vm349, %v1524, 0
    %v1536 = vsel %vm349, %v1525, 0
    %1538 = vmatprep.subr.mxu0 0.0
    %1539 = vmatpush1.msra.mxu0 %v1404
    %1540 = vmatprep.subr.mxu0 0.0
    %1541 = vmatpush1.msra.mxu0 %v1405
    %1542 = vmatprep.subr.mxu0 0.0
    %1543 = vmatpush1.msra.mxu0 %v1406
    %1544 = vmatprep.subr.mxu0 0.0
    %1545 = vmatpush1.msra.mxu0 %v1407
    %1546 = vmatprep.subr.mxu0 0.0
    %1547 = vmatpush1.msra.mxu0 %v1408
    %1548 = vmatprep.subr.mxu0 0.0
    %1549 = vmatpush1.msra.mxu0 %v1409
    %1550 = vmatprep.subr.mxu0 0.0
    %1551 = vmatpush1.msra.mxu0 %v1410
    %1552 = vmatprep.subr.mxu0 0.0
    %1553 = vmatpush1.msra.mxu0 %v1411
    %1554 = vmatprep.subr.mxu0 0.0
    %1555 = vmatpush1.msra.mxu0 0.0
    %1556 = vmatprep.subr.mxu0 0.0
    %1557 = vmatpush1.msra.mxu0 0.0
    %1558 = vmatprep.subr.mxu0 0.0
    %1559 = vmatpush1.msra.mxu0 0.0
    %1560 = vmatprep.subr.mxu0 0.0
    %1561 = vmatpush1.msra.mxu0 0.0
    %1562 = vmatprep.subr.mxu0 0.0
    %1563 = vmatpush1.msra.mxu0 0.0
    %1564 = vmatprep.subr.mxu0 0.0
    %1565 = vmatpush1.msra.mxu0 0.0
    %1566 = vmatprep.subr.mxu0 0.0
    %1567 = vmatpush1.msra.mxu0 0.0
    %1568 = vmatprep.subr.mxu0 0.0
    %1569 = vmatpush1.msra.mxu0 0.0
    %1570 = vmatprep.subr.mxu0 0.0
    %1571 = vmatpush1.msra.mxu0 0.0
    %1572 = vmatprep.subr.mxu0 0.0
    %1573 = vmatpush1.msra.mxu0 0.0
    %1574 = vmatprep.subr.mxu0 0.0
    %1575 = vmatpush1.msra.mxu0 0.0
    %1576 = vmatprep.subr.mxu0 0.0
    %1577 = vmatpush1.msra.mxu0 0.0
    %1578 = vmatprep.subr.mxu0 0.0
    %1579 = vmatpush1.msra.mxu0 0.0
    %1580 = vmatprep.subr.mxu0 0.0
    %1581 = vmatpush1.msra.mxu0 0.0
    %1582 = vmatprep.subr.mxu0 0.0
    %1583 = vmatpush1.msra.mxu0 0.0
    %1584 = vmatprep.subr.mxu0 0.0
    %1585 = vmatpush1.msra.mxu0 0.0
    %1586 = vmatprep.subr.mxu0 0.0
    %1587 = vmatpush1.msra.mxu0 0.0
    %1588 = vmatprep.subr.mxu0 0.0
    %1589 = vmatpush1.msra.mxu0 0.0
    %1590 = vmatprep.subr.mxu0 0.0
    %1591 = vmatpush1.msra.mxu0 0.0
    %1592 = vmatprep.subr.mxu0 0.0
    %1593 = vmatpush1.msra.mxu0 0.0
    %1594 = vmatprep.subr.mxu0 0.0
    %1595 = vmatpush1.msra.mxu0 0.0
    %1596 = vmatprep.subr.mxu0 0.0
    %1597 = vmatpush1.msra.mxu0 0.0
    %1598 = vmatprep.subr.mxu0 0.0
    %1599 = vmatpush1.msra.mxu0 0.0
    %1600 = vmatprep.subr.mxu0 0.0
    %1601 = vmatpush1.msra.mxu0 0.0
    %1602 = vmatprep.mubr.f32.mxu0 0.0
    %1603 = vmatmul.mubr.f32.gmra.mrb[0].mxu0 %v1527
    %v1604 = vpop.f32.mrb[0].mxu0
    %v1605 = vadd.f32 0.0, %v1604
    %v1606 = vpop.f32.mrb[0].mxu0
    %1607 = vmatprep.mubr.f32.mxu0 0.0
    %1608 = vmatmul.mubr.f32.gmra.mrb[0].mxu0 %v1530
    %v1609 = vpop.f32.mrb[0].mxu0
    %v1610 = vadd.f32 0.0, %v1609
    %v1611 = vpop.f32.mrb[0].mxu0
    %1612 = vmatprep.mubr.f32.mxu0 0.0
    %1613 = vmatmul.mubr.f32.gmra.mrb[0].mxu0 %v1533
    %v1614 = vpop.f32.mrb[0].mxu0
    %v1615 = vadd.f32 0.0, %v1614
    %v1616 = vpop.f32.mrb[0].mxu0
    %1617 = vmatprep.mubr.f32.mxu0 0.0
    %1618 = vmatmul.mubr.f32.gmra.mrb[0].mxu0 %v1536
    %v1619 = vpop.f32.mrb[0].mxu0
    %v1620 = vadd.f32 0.0, %v1619
    %v1621 = vpop.f32.mrb[0].mxu0
    %1622 = vdwg.mxu0
    %v1623 = vsel %vm349, %v1605, 0.0
    %v1624 = vsel %vm349, %v1610, 0.0
    %v1625 = vadd.f32 %v1623, %v1624
    %v1626 = vsel %vm349, %v1615, 0.0
    %v1627 = vadd.f32 %v1625, %v1626
    %v1628 = vsel %vm349, %v1620, 0.0
    %v1629 = vadd.f32 %v1627, %v1628
    %v1630 = vrot.slane %v1629, 4
    %v1631 = vadd.f32 %v1629, %v1630
    %v1632 = vrot.slane %v1631, 2
    %v1633 = vadd.f32 %v1631, %v1632
    %v1634 = vrot.slane %v1633, 1
    %v1635 = vadd.f32 %v1633, %v1634
    %v1636 = vmul.f32 %v1521, 0.001953125
    %v1637 = vmul.f32 %v1635, 0.001953125
    %v1638 = vmul.f32 %v1636, %v1636
    %v1639 = vsub.f32 %v1637, %v1638
    %v1640 = vsub.f32 %v1400, %v1636
    %v1641 = vsub.f32 %v1401, %v1636
    %v1642 = vsub.f32 %v1402, %v1636
    %v1643 = vsub.f32 %v1403, %v1636
    %v1644 = vld [vmem:[%s11] sm:$0x1]
    %v1645 = vadd.f32 %v1639, 1e-05
    %v1646 = vrsqrt.pop %v1645
    %v1647 = vmul.f32 %v1644, %v1646
    %v1649 = vlaneseq
    %v1650 = vshrl.u32 %v1649, 7
    %v1651 = vsub.s32 0, %v1650
    %v1652 = vrot.slane %v1647, %v1651
    %v1654 = vmul.f32 %v1640, %v1652
    %v1655 = vmul.f32 %v1641, %v1652
    %v1656 = vmul.f32 %v1642, %v1652
    %v1657 = vmul.f32 %v1643, %v1652
    %v1658 = vld [vmem:[#allocation6] sm:$0x1]
    %v1660 = vlaneseq
    %v1661 = vshrl.u32 %v1660, 7
    %v1662 = vsub.s32 0, %v1661
    %v1663 = vrot.slane %v1658, %v1662
    %v1665 = vadd.f32 %v1654, %v1663
    %v1666 = vadd.f32 %v1655, %v1663
    %v1667 = vadd.f32 %v1656, %v1663
    %v1668 = vadd.f32 %v1657, %v1663
    %v1669 = vmax.f32 %v1665, 0.0
    %v1670 = vmax.f32 %v1666, 0.0
    %v1671 = vmax.f32 %v1667, 0.0
    %v1672 = vmax.f32 %v1668, 0.0
    %1673 = vmatprep.subr.mxu0 0.0
    %1674 = vmatpush1.msra.mxu0 %v1669
    %1675 = vmatprep.subr.mxu0 0.0
    %1676 = vmatpush1.msra.mxu0 %v1670
    %1677 = vmatprep.subr.mxu0 0.0
    %1678 = vmatpush1.msra.mxu0 %v1671
    %1679 = vmatprep.subr.mxu0 0.0
    %1680 = vmatpush1.msra.mxu0 %v1672
    %1681 = vmatprep.subr.mxu0 0.0
    %1682 = vmatpush1.msra.mxu0 0.0
    %1683 = vmatprep.subr.mxu0 0.0
    %1684 = vmatpush1.msra.mxu0 0.0
    %1685 = vmatprep.subr.mxu0 0.0
    %1686 = vmatpush1.msra.mxu0 0.0
    %1687 = vmatprep.subr.mxu0 0.0
    %1688 = vmatpush1.msra.mxu0 0.0
    %1689 = vmatprep.subr.mxu0 0.0
    %1690 = vmatpush1.msra.mxu0 0.0
    %1691 = vmatprep.subr.mxu0 0.0
    %1692 = vmatpush1.msra.mxu0 0.0
    %1693 = vmatprep.subr.mxu0 0.0
    %1694 = vmatpush1.msra.mxu0 0.0
    %1695 = vmatprep.subr.mxu0 0.0
    %1696 = vmatpush1.msra.mxu0 0.0
    %1697 = vmatprep.subr.mxu0 0.0
    %1698 = vmatpush1.msra.mxu0 0.0
    %1699 = vmatprep.subr.mxu0 0.0
    %1700 = vmatpush1.msra.mxu0 0.0
    %1701 = vmatprep.subr.mxu0 0.0
    %1702 = vmatpush1.msra.mxu0 0.0
    %1703 = vmatprep.subr.mxu0 0.0
    %1704 = vmatpush1.msra.mxu0 0.0
    %1705 = vmatprep.subr.mxu0 0.0
    %1706 = vmatpush1.msra.mxu0 0.0
    %1707 = vmatprep.subr.mxu0 0.0
    %1708 = vmatpush1.msra.mxu0 0.0
    %1709 = vmatprep.subr.mxu0 0.0
    %1710 = vmatpush1.msra.mxu0 0.0
    %1711 = vmatprep.subr.mxu0 0.0
    %1712 = vmatpush1.msra.mxu0 0.0
    %1713 = vmatprep.subr.mxu0 0.0
    %1714 = vmatpush1.msra.mxu0 0.0
    %1715 = vmatprep.subr.mxu0 0.0
    %1716 = vmatpush1.msra.mxu0 0.0
    %1717 = vmatprep.subr.mxu0 0.0
    %1718 = vmatpush1.msra.mxu0 0.0
    %1719 = vmatprep.subr.mxu0 0.0
    %1720 = vmatpush1.msra.mxu0 0.0
    %1721 = vmatprep.subr.mxu0 0.0
    %1722 = vmatpush1.msra.mxu0 0.0
    %1723 = vmatprep.subr.mxu0 0.0
    %1724 = vmatpush1.msra.mxu0 0.0
    %1725 = vmatprep.subr.mxu0 0.0
    %1726 = vmatpush1.msra.mxu0 0.0
    %1727 = vmatprep.subr.mxu0 0.0
    %1728 = vmatpush1.msra.mxu0 0.0
    %1729 = vmatprep.subr.mxu0 0.0
    %1730 = vmatpush1.msra.mxu0 0.0
    %1731 = vmatprep.subr.mxu0 0.0
    %1732 = vmatpush1.msra.mxu0 0.0
    %1733 = vmatprep.subr.mxu0 0.0
    %1734 = vmatpush1.msra.mxu0 0.0
    %1735 = vmatprep.subr.mxu0 0.0
    %1736 = vmatpush1.msra.mxu0 0.0
    %1737 = vmatprep.mubr.f32.mxu0 0.0
    %1738 = vmatmul.mubr.f32.gmra.mrb[0].mxu0 %v135
    %v1739 = vpop.f32.mrb[0].mxu0
    %v1740 = vadd.f32 0.0, %v1739
    %v1741 = vpop.f32.mrb[0].mxu0
    %1742 = vmatprep.mubr.f32.mxu0 0.0
    %1743 = vmatmul.mubr.f32.gmra.mrb[0].mxu0 %v138
    %v1744 = vpop.f32.mrb[0].mxu0
    %v1745 = vadd.f32 0.0, %v1744
    %v1746 = vpop.f32.mrb[0].mxu0
    %1747 = vmatprep.mubr.f32.mxu0 0.0
    %1748 = vmatmul.mubr.f32.gmra.mrb[0].mxu0 %v141
    %v1749 = vpop.f32.mrb[0].mxu0
    %v1750 = vadd.f32 0.0, %v1749
    %v1751 = vpop.f32.mrb[0].mxu0
    %1752 = vmatprep.mubr.f32.mxu0 0.0
    %1753 = vmatmul.mubr.f32.gmra.mrb[0].mxu0 %v144
    %v1754 = vpop.f32.mrb[0].mxu0
    %v1755 = vadd.f32 0.0, %v1754
    %v1756 = vpop.f32.mrb[0].mxu0
    %1757 = vdwg.mxu0
    %1758 = vmatprep.subr.mxu0 0.0
    %1759 = vmatpush1.msra.mxu0 %v1669
    %1760 = vmatprep.subr.mxu0 0.0
    %1761 = vmatpush1.msra.mxu0 %v1670
    %1762 = vmatprep.subr.mxu0 0.0
    %1763 = vmatpush1.msra.mxu0 %v1671
    %1764 = vmatprep.subr.mxu0 0.0
    %1765 = vmatpush1.msra.mxu0 %v1672
    %1766 = vmatprep.subr.mxu0 0.0
    %1767 = vmatpush1.msra.mxu0 0.0
    %1768 = vmatprep.subr.mxu0 0.0
    %1769 = vmatpush1.msra.mxu0 0.0
    %1770 = vmatprep.subr.mxu0 0.0
    %1771 = vmatpush1.msra.mxu0 0.0
    %1772 = vmatprep.subr.mxu0 0.0
    %1773 = vmatpush1.msra.mxu0 0.0
    %1774 = vmatprep.subr.mxu0 0.0
    %1775 = vmatpush1.msra.mxu0 0.0
    %1776 = vmatprep.subr.mxu0 0.0
    %1777 = vmatpush1.msra.mxu0 0.0
    %1778 = vmatprep.subr.mxu0 0.0
    %1779 = vmatpush1.msra.mxu0 0.0
    %1780 = vmatprep.subr.mxu0 0.0
    %1781 = vmatpush1.msra.mxu0 0.0
    %1782 = vmatprep.subr.mxu0 0.0
    %1783 = vmatpush1.msra.mxu0 0.0
    %1784 = vmatprep.subr.mxu0 0.0
    %1785 = vmatpush1.msra.mxu0 0.0
    %1786 = vmatprep.subr.mxu0 0.0
    %1787 = vmatpush1.msra.mxu0 0.0
    %1788 = vmatprep.subr.mxu0 0.0
    %1789 = vmatpush1.msra.mxu0 0.0
    %1790 = vmatprep.subr.mxu0 0.0
    %1791 = vmatpush1.msra.mxu0 0.0
    %1792 = vmatprep.subr.mxu0 0.0
    %1793 = vmatpush1.msra.mxu0 0.0
    %1794 = vmatprep.subr.mxu0 0.0
    %1795 = vmatpush1.msra.mxu0 0.0
    %1796 = vmatprep.subr.mxu0 0.0
    %1797 = vmatpush1.msra.mxu0 0.0
    %1798 = vmatprep.subr.mxu0 0.0
    %1799 = vmatpush1.msra.mxu0 0.0
    %1800 = vmatprep.subr.mxu0 0.0
    %1801 = vmatpush1.msra.mxu0 0.0
    %1802 = vmatprep.subr.mxu0 0.0
    %1803 = vmatpush1.msra.mxu0 0.0
    %1804 = vmatprep.subr.mxu0 0.0
    %1805 = vmatpush1.msra.mxu0 0.0
    %1806 = vmatprep.subr.mxu0 0.0
    %1807 = vmatpush1.msra.mxu0 0.0
    %1808 = vmatprep.subr.mxu0 0.0
    %1809 = vmatpush1.msra.mxu0 0.0
    %1810 = vmatprep.subr.mxu0 0.0
    %1811 = vmatpush1.msra.mxu0 0.0
    %1812 = vmatprep.subr.mxu0 0.0
    %1813 = vmatpush1.msra.mxu0 0.0
    %1814 = vmatprep.subr.mxu0 0.0
    %1815 = vmatpush1.msra.mxu0 0.0
    %1816 = vmatprep.subr.mxu0 0.0
    %1817 = vmatpush1.msra.mxu0 0.0
    %1818 = vmatprep.subr.mxu0 0.0
    %1819 = vmatpush1.msra.mxu0 0.0
    %1820 = vmatprep.subr.mxu0 0.0
    %1821 = vmatpush1.msra.mxu0 0.0
    %1822 = vmatprep.mubr.f32.mxu0 0.0
    %1823 = vmatmul.mubr.f32.gmra.mrb[0].mxu0 %v236
    %v1824 = vpop.f32.mrb[0].mxu0
    %v1825 = vadd.f32 0.0, %v1824
    %v1826 = vpop.f32.mrb[0].mxu0
    %1827 = vmatprep.mubr.f32.mxu0 0.0
    %1828 = vmatmul.mubr.f32.gmra.mrb[0].mxu0 %v239
    %v1829 = vpop.f32.mrb[0].mxu0
    %v1830 = vadd.f32 0.0, %v1829
    %v1831 = vpop.f32.mrb[0].mxu0
    %1832 = vmatprep.mubr.f32.mxu0 0.0
    %1833 = vmatmul.mubr.f32.gmra.mrb[0].mxu0 %v242
    %v1834 = vpop.f32.mrb[0].mxu0
    %v1835 = vadd.f32 0.0, %v1834
    %v1836 = vpop.f32.mrb[0].mxu0
    %1837 = vmatprep.mubr.f32.mxu0 0.0
    %1838 = vmatmul.mubr.f32.gmra.mrb[0].mxu0 %v245
    %v1839 = vpop.f32.mrb[0].mxu0
    %v1840 = vadd.f32 0.0, %v1839
    %v1841 = vpop.f32.mrb[0].mxu0
    %1842 = vdwg.mxu0
    %v1843 = vld [vmem:[%s13] sm:$0xff]
    %v1844 = vld [vmem:[%s13 + $0x8] sm:$0xff]
    %v1845 = vld [vmem:[%s13 + $0x10] sm:$0xff]
    %v1846 = vld [vmem:[%s13 + $0x18] sm:$0xff]
    %v1847 = vld [vmem:[%s13 + $0x20] sm:$0xff]
    %v1848 = vld [vmem:[%s13 + $0x28] sm:$0xff]
    %v1849 = vld [vmem:[%s13 + $0x30] sm:$0xff]
    %v1850 = vld [vmem:[%s13 + $0x38] sm:$0xff]
    %s1851 = scalar_lea.vmem %s13, 64
    %v1852 = vld [vmem:[%s1851] sm:$0xff]
    %v1853 = vld [vmem:[%s1851 + $0x8] sm:$0xff]
    %v1854 = vld [vmem:[%s1851 + $0x10] sm:$0xff]
    %v1855 = vld [vmem:[%s1851 + $0x18] sm:$0xff]
    %v1856 = vld [vmem:[%s1851 + $0x20] sm:$0xff]
    %v1857 = vld [vmem:[%s1851 + $0x28] sm:$0xff]
    %v1858 = vld [vmem:[%s1851 + $0x30] sm:$0xff]
    %v1859 = vld [vmem:[%s1851 + $0x38] sm:$0xff]
    %v1861 = vsel %vm349, %v1669, 0
    %v1864 = vsel %vm349, %v1670, 0
    %v1867 = vsel %vm349, %v1671, 0
    %v1870 = vsel %vm349, %v1672, 0
    %1872 = vmatprep.subr.mxu0 0.0
    %1873 = vmatpush1.msra.mxu0 %v1852
    %1874 = vmatprep.subr.mxu0 0.0
    %1875 = vmatpush1.msra.mxu0 %v1853
    %1876 = vmatprep.subr.mxu0 0.0
    %1877 = vmatpush1.msra.mxu0 %v1854
    %1878 = vmatprep.subr.mxu0 0.0
    %1879 = vmatpush1.msra.mxu0 %v1855
    %1880 = vmatprep.subr.mxu0 0.0
    %1881 = vmatpush1.msra.mxu0 %v1856
    %1882 = vmatprep.subr.mxu0 0.0
    %1883 = vmatpush1.msra.mxu0 %v1857
    %1884 = vmatprep.subr.mxu0 0.0
    %1885 = vmatpush1.msra.mxu0 %v1858
    %1886 = vmatprep.subr.mxu0 0.0
    %1887 = vmatpush1.msra.mxu0 %v1859
    %1888 = vmatprep.subr.mxu0 0.0
    %1889 = vmatpush1.msra.mxu0 0.0
    %1890 = vmatprep.subr.mxu0 0.0
    %1891 = vmatpush1.msra.mxu0 0.0
    %1892 = vmatprep.subr.mxu0 0.0
    %1893 = vmatpush1.msra.mxu0 0.0
    %1894 = vmatprep.subr.mxu0 0.0
    %1895 = vmatpush1.msra.mxu0 0.0
    %1896 = vmatprep.subr.mxu0 0.0
    %1897 = vmatpush1.msra.mxu0 0.0
    %1898 = vmatprep.subr.mxu0 0.0
    %1899 = vmatpush1.msra.mxu0 0.0
    %1900 = vmatprep.subr.mxu0 0.0
    %1901 = vmatpush1.msra.mxu0 0.0
    %1902 = vmatprep.subr.mxu0 0.0
    %1903 = vmatpush1.msra.mxu0 0.0
    %1904 = vmatprep.subr.mxu0 0.0
    %1905 = vmatpush1.msra.mxu0 0.0
    %1906 = vmatprep.subr.mxu0 0.0
    %1907 = vmatpush1.msra.mxu0 0.0
    %1908 = vmatprep.subr.mxu0 0.0
    %1909 = vmatpush1.msra.mxu0 0.0
    %1910 = vmatprep.subr.mxu0 0.0
    %1911 = vmatpush1.msra.mxu0 0.0
    %1912 = vmatprep.subr.mxu0 0.0
    %1913 = vmatpush1.msra.mxu0 0.0
    %1914 = vmatprep.subr.mxu0 0.0
    %1915 = vmatpush1.msra.mxu0 0.0
    %1916 = vmatprep.subr.mxu0 0.0
    %1917 = vmatpush1.msra.mxu0 0.0
    %1918 = vmatprep.subr.mxu0 0.0
    %1919 = vmatpush1.msra.mxu0 0.0
    %1920 = vmatprep.subr.mxu0 0.0
    %1921 = vmatpush1.msra.mxu0 0.0
    %1922 = vmatprep.subr.mxu0 0.0
    %1923 = vmatpush1.msra.mxu0 0.0
    %1924 = vmatprep.subr.mxu0 0.0
    %1925 = vmatpush1.msra.mxu0 0.0
    %1926 = vmatprep.subr.mxu0 0.0
    %1927 = vmatpush1.msra.mxu0 0.0
    %1928 = vmatprep.subr.mxu0 0.0
    %1929 = vmatpush1.msra.mxu0 0.0
    %1930 = vmatprep.subr.mxu0 0.0
    %1931 = vmatpush1.msra.mxu0 0.0
    %1932 = vmatprep.subr.mxu0 0.0
    %1933 = vmatpush1.msra.mxu0 0.0
    %1934 = vmatprep.subr.mxu0 0.0
    %1935 = vmatpush1.msra.mxu0 0.0
    %1936 = vmatprep.mubr.f32.mxu0 0.0
    %1937 = vmatmul.mubr.f32.gmra.mrb[0].mxu0 %v1861
    %v1938 = vpop.f32.mrb[0].mxu0
    %v1939 = vadd.f32 0.0, %v1938
    %v1940 = vpop.f32.mrb[0].mxu0
    %1941 = vmatprep.mubr.f32.mxu0 0.0
    %1942 = vmatmul.mubr.f32.gmra.mrb[0].mxu0 %v1864
    %v1943 = vpop.f32.mrb[0].mxu0
    %v1944 = vadd.f32 0.0, %v1943
    %v1945 = vpop.f32.mrb[0].mxu0
    %1946 = vmatprep.mubr.f32.mxu0 0.0
    %1947 = vmatmul.mubr.f32.gmra.mrb[0].mxu0 %v1867
    %v1948 = vpop.f32.mrb[0].mxu0
    %v1949 = vadd.f32 0.0, %v1948
    %v1950 = vpop.f32.mrb[0].mxu0
    %1951 = vmatprep.mubr.f32.mxu0 0.0
    %1952 = vmatmul.mubr.f32.gmra.mrb[0].mxu0 %v1870
    %v1953 = vpop.f32.mrb[0].mxu0
    %v1954 = vadd.f32 0.0, %v1953
    %v1955 = vpop.f32.mrb[0].mxu0
    %1956 = vdwg.mxu0
    %v1958 = vsel %vm349, %v1740, 0
    %v1961 = vsel %vm349, %v1745, 0
    %v1964 = vsel %vm349, %v1750, 0
    %v1967 = vsel %vm349, %v1755, 0
    %1969 = vmatprep.subr.mxu0 0.0
    %1970 = vmatpush1.msra.mxu0 %v1843
    %1971 = vmatprep.subr.mxu0 0.0
    %1972 = vmatpush1.msra.mxu0 %v1844
    %1973 = vmatprep.subr.mxu0 0.0
    %1974 = vmatpush1.msra.mxu0 %v1845
    %1975 = vmatprep.subr.mxu0 0.0
    %1976 = vmatpush1.msra.mxu0 %v1846
    %1977 = vmatprep.subr.mxu0 0.0
    %1978 = vmatpush1.msra.mxu0 %v1847
    %1979 = vmatprep.subr.mxu0 0.0
    %1980 = vmatpush1.msra.mxu0 %v1848
    %1981 = vmatprep.subr.mxu0 0.0
    %1982 = vmatpush1.msra.mxu0 %v1849
    %1983 = vmatprep.subr.mxu0 0.0
    %1984 = vmatpush1.msra.mxu0 %v1850
    %1985 = vmatprep.subr.mxu0 0.0
    %1986 = vmatpush1.msra.mxu0 0.0
    %1987 = vmatprep.subr.mxu0 0.0
    %1988 = vmatpush1.msra.mxu0 0.0
    %1989 = vmatprep.subr.mxu0 0.0
    %1990 = vmatpush1.msra.mxu0 0.0
    %1991 = vmatprep.subr.mxu0 0.0
    %1992 = vmatpush1.msra.mxu0 0.0
    %1993 = vmatprep.subr.mxu0 0.0
    %1994 = vmatpush1.msra.mxu0 0.0
    %1995 = vmatprep.subr.mxu0 0.0
    %1996 = vmatpush1.msra.mxu0 0.0
    %1997 = vmatprep.subr.mxu0 0.0
    %1998 = vmatpush1.msra.mxu0 0.0
    %1999 = vmatprep.subr.mxu0 0.0
    %2000 = vmatpush1.msra.mxu0 0.0
    %2001 = vmatprep.subr.mxu0 0.0
    %2002 = vmatpush1.msra.mxu0 0.0
    %2003 = vmatprep.subr.mxu0 0.0
    %2004 = vmatpush1.msra.mxu0 0.0
    %2005 = vmatprep.subr.mxu0 0.0
    %2006 = vmatpush1.msra.mxu0 0.0
    %2007 = vmatprep.subr.mxu0 0.0
    %2008 = vmatpush1.msra.mxu0 0.0
    %2009 = vmatprep.subr.mxu0 0.0
    %2010 = vmatpush1.msra.mxu0 0.0
    %2011 = vmatprep.subr.mxu0 0.0
    %2012 = vmatpush1.msra.mxu0 0.0
    %2013 = vmatprep.subr.mxu0 0.0
    %2014 = vmatpush1.msra.mxu0 0.0
    %2015 = vmatprep.subr.mxu0 0.0
    %2016 = vmatpush1.msra.mxu0 0.0
    %2017 = vmatprep.subr.mxu0 0.0
    %2018 = vmatpush1.msra.mxu0 0.0
    %2019 = vmatprep.subr.mxu0 0.0
    %2020 = vmatpush1.msra.mxu0 0.0
    %2021 = vmatprep.subr.mxu0 0.0
    %2022 = vmatpush1.msra.mxu0 0.0
    %2023 = vmatprep.subr.mxu0 0.0
    %2024 = vmatpush1.msra.mxu0 0.0
    %2025 = vmatprep.subr.mxu0 0.0
    %2026 = vmatpush1.msra.mxu0 0.0
    %2027 = vmatprep.subr.mxu0 0.0
    %2028 = vmatpush1.msra.mxu0 0.0
    %2029 = vmatprep.subr.mxu0 0.0
    %2030 = vmatpush1.msra.mxu0 0.0
    %2031 = vmatprep.subr.mxu0 0.0
    %2032 = vmatpush1.msra.mxu0 0.0
    %2033 = vmatprep.mubr.f32.mxu0 0.0
    %2034 = vmatmul.mubr.f32.gmra.mrb[0].mxu0 %v1958
    %v2035 = vpop.f32.mrb[0].mxu0
    %v2036 = vadd.f32 %v1939, %v2035
    %v2037 = vpop.f32.mrb[0].mxu0
    %2038 = vmatprep.mubr.f32.mxu0 0.0
    %2039 = vmatmul.mubr.f32.gmra.mrb[0].mxu0 %v1961
    %v2040 = vpop.f32.mrb[0].mxu0
    %v2041 = vadd.f32 %v1944, %v2040
    %v2042 = vpop.f32.mrb[0].mxu0
    %2043 = vmatprep.mubr.f32.mxu0 0.0
    %2044 = vmatmul.mubr.f32.gmra.mrb[0].mxu0 %v1964
    %v2045 = vpop.f32.mrb[0].mxu0
    %v2046 = vadd.f32 %v1949, %v2045
    %v2047 = vpop.f32.mrb[0].mxu0
    %2048 = vmatprep.mubr.f32.mxu0 0.0
    %2049 = vmatmul.mubr.f32.gmra.mrb[0].mxu0 %v1967
    %v2050 = vpop.f32.mrb[0].mxu0
    %v2051 = vadd.f32 %v1954, %v2050
    %v2052 = vpop.f32.mrb[0].mxu0
    %2053 = vdwg.mxu0
    %s2054 = scalar_lea.vmem %s13, 128
    %v2055 = vld [vmem:[%s2054] sm:$0xff]
    %v2056 = vld [vmem:[%s2054 + $0x8] sm:$0xff]
    %v2057 = vld [vmem:[%s2054 + $0x10] sm:$0xff]
    %v2058 = vld [vmem:[%s2054 + $0x18] sm:$0xff]
    %v2059 = vld [vmem:[%s2054 + $0x20] sm:$0xff]
    %v2060 = vld [vmem:[%s2054 + $0x28] sm:$0xff]
    %v2061 = vld [vmem:[%s2054 + $0x30] sm:$0xff]
    %v2062 = vld [vmem:[%s2054 + $0x38] sm:$0xff]
    %v2064 = vsel %vm349, %v1825, 0
    %v2067 = vsel %vm349, %v1830, 0
    %v2070 = vsel %vm349, %v1835, 0
    %v2073 = vsel %vm349, %v1840, 0
    %2075 = vmatprep.subr.mxu0 0.0
    %2076 = vmatpush1.msra.mxu0 %v2055
    %2077 = vmatprep.subr.mxu0 0.0
    %2078 = vmatpush1.msra.mxu0 %v2056
    %2079 = vmatprep.subr.mxu0 0.0
    %2080 = vmatpush1.msra.mxu0 %v2057
    %2081 = vmatprep.subr.mxu0 0.0
    %2082 = vmatpush1.msra.mxu0 %v2058
    %2083 = vmatprep.subr.mxu0 0.0
    %2084 = vmatpush1.msra.mxu0 %v2059
    %2085 = vmatprep.subr.mxu0 0.0
    %2086 = vmatpush1.msra.mxu0 %v2060
    %2087 = vmatprep.subr.mxu0 0.0
    %2088 = vmatpush1.msra.mxu0 %v2061
    %2089 = vmatprep.subr.mxu0 0.0
    %2090 = vmatpush1.msra.mxu0 %v2062
    %2091 = vmatprep.subr.mxu0 0.0
    %2092 = vmatpush1.msra.mxu0 0.0
    %2093 = vmatprep.subr.mxu0 0.0
    %2094 = vmatpush1.msra.mxu0 0.0
    %2095 = vmatprep.subr.mxu0 0.0
    %2096 = vmatpush1.msra.mxu0 0.0
    %2097 = vmatprep.subr.mxu0 0.0
    %2098 = vmatpush1.msra.mxu0 0.0
    %2099 = vmatprep.subr.mxu0 0.0
    %2100 = vmatpush1.msra.mxu0 0.0
    %2101 = vmatprep.subr.mxu0 0.0
    %2102 = vmatpush1.msra.mxu0 0.0
    %2103 = vmatprep.subr.mxu0 0.0
    %2104 = vmatpush1.msra.mxu0 0.0
    %2105 = vmatprep.subr.mxu0 0.0
    %2106 = vmatpush1.msra.mxu0 0.0
    %2107 = vmatprep.subr.mxu0 0.0
    %2108 = vmatpush1.msra.mxu0 0.0
    %2109 = vmatprep.subr.mxu0 0.0
    %2110 = vmatpush1.msra.mxu0 0.0
    %2111 = vmatprep.subr.mxu0 0.0
    %2112 = vmatpush1.msra.mxu0 0.0
    %2113 = vmatprep.subr.mxu0 0.0
    %2114 = vmatpush1.msra.mxu0 0.0
    %2115 = vmatprep.subr.mxu0 0.0
    %2116 = vmatpush1.msra.mxu0 0.0
    %2117 = vmatprep.subr.mxu0 0.0
    %2118 = vmatpush1.msra.mxu0 0.0
    %2119 = vmatprep.subr.mxu0 0.0
    %2120 = vmatpush1.msra.mxu0 0.0
    %2121 = vmatprep.subr.mxu0 0.0
    %2122 = vmatpush1.msra.mxu0 0.0
    %2123 = vmatprep.subr.mxu0 0.0
    %2124 = vmatpush1.msra.mxu0 0.0
    %2125 = vmatprep.subr.mxu0 0.0
    %2126 = vmatpush1.msra.mxu0 0.0
    %2127 = vmatprep.subr.mxu0 0.0
    %2128 = vmatpush1.msra.mxu0 0.0
    %2129 = vmatprep.subr.mxu0 0.0
    %2130 = vmatpush1.msra.mxu0 0.0
    %2131 = vmatprep.subr.mxu0 0.0
    %2132 = vmatpush1.msra.mxu0 0.0
    %2133 = vmatprep.subr.mxu0 0.0
    %2134 = vmatpush1.msra.mxu0 0.0
    %2135 = vmatprep.subr.mxu0 0.0
    %2136 = vmatpush1.msra.mxu0 0.0
    %2137 = vmatprep.subr.mxu0 0.0
    %2138 = vmatpush1.msra.mxu0 0.0
    %2139 = vmatprep.mubr.f32.mxu0 0.0
    %2140 = vmatmul.mubr.f32.gmra.mrb[0].mxu0 %v2064
    %v2141 = vpop.f32.mrb[0].mxu0
    %v2142 = vadd.f32 0.0, %v2141
    %v2143 = vpop.f32.mrb[0].mxu0
    %2144 = vmatprep.mubr.f32.mxu0 0.0
    %2145 = vmatmul.mubr.f32.gmra.mrb[0].mxu0 %v2067
    %v2146 = vpop.f32.mrb[0].mxu0
    %v2147 = vadd.f32 0.0, %v2146
    %v2148 = vpop.f32.mrb[0].mxu0
    %2149 = vmatprep.mubr.f32.mxu0 0.0
    %2150 = vmatmul.mubr.f32.gmra.mrb[0].mxu0 %v2070
    %v2151 = vpop.f32.mrb[0].mxu0
    %v2152 = vadd.f32 0.0, %v2151
    %v2153 = vpop.f32.mrb[0].mxu0
    %2154 = vmatprep.mubr.f32.mxu0 0.0
    %2155 = vmatmul.mubr.f32.gmra.mrb[0].mxu0 %v2073
    %v2156 = vpop.f32.mrb[0].mxu0
    %v2157 = vadd.f32 0.0, %v2156
    %v2158 = vpop.f32.mrb[0].mxu0
    %2159 = vdwg.mxu0
    %v2160 = vadd.f32 %v2036, %v2142
    %v2161 = vadd.f32 %v2041, %v2147
    %v2162 = vadd.f32 %v2046, %v2152
    %v2163 = vadd.f32 %v2051, %v2157
    %v2164 = vld [vmem:[%s14] sm:$0x1]
    %v2166 = vlaneseq
    %v2167 = vshrl.u32 %v2166, 7
    %v2168 = vsub.s32 0, %v2167
    %v2169 = vrot.slane %v2164, %v2168
    %v2171 = vadd.f32 %v2160, %v2169
    %v2172 = vadd.f32 %v2161, %v2169
    %v2173 = vadd.f32 %v2162, %v2169
    %v2174 = vadd.f32 %v2163, %v2169
    %v2175 = vld [vmem:[%s15] sm:$0xff]
    %v2176 = vld [vmem:[%s15 + $0x8] sm:$0xff]
    %v2177 = vld [vmem:[%s15 + $0x10] sm:$0xff]
    %v2178 = vld [vmem:[%s15 + $0x18] sm:$0xff]
    %v2179 = vld [vmem:[%s15 + $0x20] sm:$0xff]
    %v2180 = vld [vmem:[%s15 + $0x28] sm:$0xff]
    %v2181 = vld [vmem:[%s15 + $0x30] sm:$0xff]
    %v2182 = vld [vmem:[%s15 + $0x38] sm:$0xff]
    %v2183 = vld [vmem:[%s15 + $0x40] sm:$0xff]
    %v2184 = vld [vmem:[%s15 + $0x48] sm:$0xff]
    %v2185 = vld [vmem:[%s15 + $0x50] sm:$0xff]
    %v2186 = vld [vmem:[%s15 + $0x58] sm:$0xff]
    %v2187 = vld [vmem:[%s15 + $0x60] sm:$0xff]
    %v2188 = vld [vmem:[%s15 + $0x68] sm:$0xff]
    %v2189 = vld [vmem:[%s15 + $0x70] sm:$0xff]
    %v2190 = vld [vmem:[%s15 + $0x78] sm:$0xff]
    %2191 = vmatprep.subr.mxu0 0.0
    %2192 = vmatpush1.msra.mxu0 %v2175
    %2193 = vmatprep.subr.mxu0 0.0
    %2194 = vmatpush1.msra.mxu0 %v2176
    %2195 = vmatprep.subr.mxu0 0.0
    %2196 = vmatpush1.msra.mxu0 %v2177
    %2197 = vmatprep.subr.mxu0 0.0
    %2198 = vmatpush1.msra.mxu0 %v2178
    %2199 = vmatprep.subr.mxu0 0.0
    %2200 = vmatpush1.msra.mxu0 %v2179
    %2201 = vmatprep.subr.mxu0 0.0
    %2202 = vmatpush1.msra.mxu0 %v2180
    %2203 = vmatprep.subr.mxu0 0.0
    %2204 = vmatpush1.msra.mxu0 %v2181
    %2205 = vmatprep.subr.mxu0 0.0
    %2206 = vmatpush1.msra.mxu0 %v2182
    %2207 = vmatprep.subr.mxu0 0.0
    %2208 = vmatpush1.msra.mxu0 %v2183
    %2209 = vmatprep.subr.mxu0 0.0
    %2210 = vmatpush1.msra.mxu0 %v2184
    %2211 = vmatprep.subr.mxu0 0.0
    %2212 = vmatpush1.msra.mxu0 %v2185
    %2213 = vmatprep.subr.mxu0 0.0
    %2214 = vmatpush1.msra.mxu0 %v2186
    %2215 = vmatprep.subr.mxu0 0.0
    %2216 = vmatpush1.msra.mxu0 %v2187
    %2217 = vmatprep.subr.mxu0 0.0
    %2218 = vmatpush1.msra.mxu0 %v2188
    %2219 = vmatprep.subr.mxu0 0.0
    %2220 = vmatpush1.msra.mxu0 %v2189
    %2221 = vmatprep.subr.mxu0 0.0
    %2222 = vmatpush1.msra.mxu0 %v2190
    %2223 = vmatprep.subr.mxu0 0.0
    %2224 = vmatpush1.msra.mxu0 0.0
    %2225 = vmatprep.subr.mxu0 0.0
    %2226 = vmatpush1.msra.mxu0 0.0
    %2227 = vmatprep.subr.mxu0 0.0
    %2228 = vmatpush1.msra.mxu0 0.0
    %2229 = vmatprep.subr.mxu0 0.0
    %2230 = vmatpush1.msra.mxu0 0.0
    %2231 = vmatprep.subr.mxu0 0.0
    %2232 = vmatpush1.msra.mxu0 0.0
    %2233 = vmatprep.subr.mxu0 0.0
    %2234 = vmatpush1.msra.mxu0 0.0
    %2235 = vmatprep.subr.mxu0 0.0
    %2236 = vmatpush1.msra.mxu0 0.0
    %2237 = vmatprep.subr.mxu0 0.0
    %2238 = vmatpush1.msra.mxu0 0.0
    %2239 = vmatprep.subr.mxu0 0.0
    %2240 = vmatpush1.msra.mxu0 0.0
    %2241 = vmatprep.subr.mxu0 0.0
    %2242 = vmatpush1.msra.mxu0 0.0
    %2243 = vmatprep.subr.mxu0 0.0
    %2244 = vmatpush1.msra.mxu0 0.0
    %2245 = vmatprep.subr.mxu0 0.0
    %2246 = vmatpush1.msra.mxu0 0.0
    %2247 = vmatprep.subr.mxu0 0.0
    %2248 = vmatpush1.msra.mxu0 0.0
    %2249 = vmatprep.subr.mxu0 0.0
    %2250 = vmatpush1.msra.mxu0 0.0
    %2251 = vmatprep.subr.mxu0 0.0
    %2252 = vmatpush1.msra.mxu0 0.0
    %2253 = vmatprep.subr.mxu0 0.0
    %2254 = vmatpush1.msra.mxu0 0.0
    %2255 = vmatprep.mubr.f32.mxu0 0.0
    %2256 = vmatmul.mubr.f32.gmra.mrb[0].mxu0 %v2171
    %v2257 = vpop.f32.mrb[0].mxu0
    %v2258 = vadd.f32 0.0, %v2257
    %v2259 = vpop.f32.mrb[0].mxu0
    %2260 = vmatprep.mubr.f32.mxu0 0.0
    %2261 = vmatmul.mubr.f32.gmra.mrb[0].mxu0 %v2172
    %v2262 = vpop.f32.mrb[0].mxu0
    %v2263 = vadd.f32 0.0, %v2262
    %v2264 = vpop.f32.mrb[0].mxu0
    %2265 = vmatprep.mubr.f32.mxu0 0.0
    %2266 = vmatmul.mubr.f32.gmra.mrb[0].mxu0 %v2173
    %v2267 = vpop.f32.mrb[0].mxu0
    %v2268 = vadd.f32 0.0, %v2267
    %v2269 = vpop.f32.mrb[0].mxu0
    %2270 = vmatprep.mubr.f32.mxu0 0.0
    %2271 = vmatmul.mubr.f32.gmra.mrb[0].mxu0 %v2174
    %v2272 = vpop.f32.mrb[0].mxu0
    %v2273 = vadd.f32 0.0, %v2272
    %v2274 = vpop.f32.mrb[0].mxu0
    %2275 = vdwg.mxu0
    %v2276 = vadd.f32 %v2258, %v2263
    %v2277 = vadd.f32 %v2276, %v2268
    %v2278 = vadd.f32 %v2277, %v2273
    %v2279 = vrot.slane %v2278, 4
    %v2280 = vadd.f32 %v2278, %v2279
    %v2281 = vrot.slane %v2280, 2
    %v2282 = vadd.f32 %v2280, %v2281
    %v2283 = vrot.slane %v2282, 1
    %v2284 = vadd.f32 %v2282, %v2283
    %v2285 = vmul.f32 %v2171, %v2171
    %v2286 = vmul.f32 %v2172, %v2172
    %v2287 = vmul.f32 %v2173, %v2173
    %v2288 = vmul.f32 %v2174, %v2174
    %2289 = vmatprep.subr.mxu0 0.0
    %2290 = vmatpush1.msra.mxu0 %v2175
    %2291 = vmatprep.subr.mxu0 0.0
    %2292 = vmatpush1.msra.mxu0 %v2176
    %2293 = vmatprep.subr.mxu0 0.0
    %2294 = vmatpush1.msra.mxu0 %v2177
    %2295 = vmatprep.subr.mxu0 0.0
    %2296 = vmatpush1.msra.mxu0 %v2178
    %2297 = vmatprep.subr.mxu0 0.0
    %2298 = vmatpush1.msra.mxu0 %v2179
    %2299 = vmatprep.subr.mxu0 0.0
    %2300 = vmatpush1.msra.mxu0 %v2180
    %2301 = vmatprep.subr.mxu0 0.0
    %2302 = vmatpush1.msra.mxu0 %v2181
    %2303 = vmatprep.subr.mxu0 0.0
    %2304 = vmatpush1.msra.mxu0 %v2182
    %2305 = vmatprep.subr.mxu0 0.0
    %2306 = vmatpush1.msra.mxu0 %v2183
    %2307 = vmatprep.subr.mxu0 0.0
    %2308 = vmatpush1.msra.mxu0 %v2184
    %2309 = vmatprep.subr.mxu0 0.0
    %2310 = vmatpush1.msra.mxu0 %v2185
    %2311 = vmatprep.subr.mxu0 0.0
    %2312 = vmatpush1.msra.mxu0 %v2186
    %2313 = vmatprep.subr.mxu0 0.0
    %2314 = vmatpush1.msra.mxu0 %v2187
    %2315 = vmatprep.subr.mxu0 0.0
    %2316 = vmatpush1.msra.mxu0 %v2188
    %2317 = vmatprep.subr.mxu0 0.0
    %2318 = vmatpush1.msra.mxu0 %v2189
    %2319 = vmatprep.subr.mxu0 0.0
    %2320 = vmatpush1.msra.mxu0 %v2190
    %2321 = vmatprep.subr.mxu0 0.0
    %2322 = vmatpush1.msra.mxu0 0.0
    %2323 = vmatprep.subr.mxu0 0.0
    %2324 = vmatpush1.msra.mxu0 0.0
    %2325 = vmatprep.subr.mxu0 0.0
    %2326 = vmatpush1.msra.mxu0 0.0
    %2327 = vmatprep.subr.mxu0 0.0
    %2328 = vmatpush1.msra.mxu0 0.0
    %2329 = vmatprep.subr.mxu0 0.0
    %2330 = vmatpush1.msra.mxu0 0.0
    %2331 = vmatprep.subr.mxu0 0.0
    %2332 = vmatpush1.msra.mxu0 0.0
    %2333 = vmatprep.subr.mxu0 0.0
    %2334 = vmatpush1.msra.mxu0 0.0
    %2335 = vmatprep.subr.mxu0 0.0
    %2336 = vmatpush1.msra.mxu0 0.0
    %2337 = vmatprep.subr.mxu0 0.0
    %2338 = vmatpush1.msra.mxu0 0.0
    %2339 = vmatprep.subr.mxu0 0.0
    %2340 = vmatpush1.msra.mxu0 0.0
    %2341 = vmatprep.subr.mxu0 0.0
    %2342 = vmatpush1.msra.mxu0 0.0
    %2343 = vmatprep.subr.mxu0 0.0
    %2344 = vmatpush1.msra.mxu0 0.0
    %2345 = vmatprep.subr.mxu0 0.0
    %2346 = vmatpush1.msra.mxu0 0.0
    %2347 = vmatprep.subr.mxu0 0.0
    %2348 = vmatpush1.msra.mxu0 0.0
    %2349 = vmatprep.subr.mxu0 0.0
    %2350 = vmatpush1.msra.mxu0 0.0
    %2351 = vmatprep.subr.mxu0 0.0
    %2352 = vmatpush1.msra.mxu0 0.0
    %2353 = vmatprep.mubr.f32.mxu0 0.0
    %2354 = vmatmul.mubr.f32.gmra.mrb[0].mxu0 %v2285
    %v2355 = vpop.f32.mrb[0].mxu0
    %v2356 = vadd.f32 0.0, %v2355
    %v2357 = vpop.f32.mrb[0].mxu0
    %2358 = vmatprep.mubr.f32.mxu0 0.0
    %2359 = vmatmul.mubr.f32.gmra.mrb[0].mxu0 %v2286
    %v2360 = vpop.f32.mrb[0].mxu0
    %v2361 = vadd.f32 0.0, %v2360
    %v2362 = vpop.f32.mrb[0].mxu0
    %2363 = vmatprep.mubr.f32.mxu0 0.0
    %2364 = vmatmul.mubr.f32.gmra.mrb[0].mxu0 %v2287
    %v2365 = vpop.f32.mrb[0].mxu0
    %v2366 = vadd.f32 0.0, %v2365
    %v2367 = vpop.f32.mrb[0].mxu0
    %2368 = vmatprep.mubr.f32.mxu0 0.0
    %2369 = vmatmul.mubr.f32.gmra.mrb[0].mxu0 %v2288
    %v2370 = vpop.f32.mrb[0].mxu0
    %v2371 = vadd.f32 0.0, %v2370
    %v2372 = vpop.f32.mrb[0].mxu0
    %2373 = vdwg.mxu0
    %v2374 = vadd.f32 %v2356, %v2361
    %v2375 = vadd.f32 %v2374, %v2366
    %v2376 = vadd.f32 %v2375, %v2371
    %v2377 = vrot.slane %v2376, 4
    %v2378 = vadd.f32 %v2376, %v2377
    %v2379 = vrot.slane %v2378, 2
    %v2380 = vadd.f32 %v2378, %v2379
    %v2381 = vrot.slane %v2380, 1
    %v2382 = vadd.f32 %v2380, %v2381
    %v2383 = vmul.f32 %v2284, 0.001953125
    %v2384 = vmul.f32 %v2382, 0.001953125
    %v2385 = vmul.f32 %v2383, %v2383
    %v2386 = vsub.f32 %v2384, %v2385
    %v2387 = vsub.f32 %v2171, %v2383
    %v2388 = vsub.f32 %v2172, %v2383
    %v2389 = vsub.f32 %v2173, %v2383
    %v2390 = vsub.f32 %v2174, %v2383
    %v2391 = vld [vmem:[%s16] sm:$0x1]
    %v2392 = vadd.f32 %v2386, 1e-05
    %v2393 = vrsqrt.pop %v2392
    %v2394 = vmul.f32 %v2391, %v2393
    %v2396 = vlaneseq
    %v2397 = vshrl.u32 %v2396, 7
    %v2398 = vsub.s32 0, %v2397
    %v2399 = vrot.slane %v2394, %v2398
    %v2401 = vmul.f32 %v2387, %v2399
    %v2402 = vmul.f32 %v2388, %v2399
    %v2403 = vmul.f32 %v2389, %v2399
    %v2404 = vmul.f32 %v2390, %v2399
    %v2405 = vld [vmem:[%s17] sm:$0x1]
    %v2407 = vlaneseq
    %v2408 = vshrl.u32 %v2407, 7
    %v2409 = vsub.s32 0, %v2408
    %v2410 = vrot.slane %v2405, %v2409
    %v2412 = vadd.f32 %v2401, %v2410
    %v2413 = vadd.f32 %v2402, %v2410
    %v2414 = vadd.f32 %v2403, %v2410
    %v2415 = vadd.f32 %v2404, %v2410
    %v2416 = vmax.f32 %v2412, 0.0
    %v2417 = vmax.f32 %v2413, 0.0
    %v2418 = vmax.f32 %v2414, 0.0
    %v2419 = vmax.f32 %v2415, 0.0
    %2420 = vmatprep.subr.mxu0 0.0
    %2421 = vmatpush1.msra.mxu0 %v2416
    %2422 = vmatprep.subr.mxu0 0.0
    %2423 = vmatpush1.msra.mxu0 %v2417
    %2424 = vmatprep.subr.mxu0 0.0
    %2425 = vmatpush1.msra.mxu0 %v2418
    %2426 = vmatprep.subr.mxu0 0.0
    %2427 = vmatpush1.msra.mxu0 %v2419
    %2428 = vmatprep.subr.mxu0 0.0
    %2429 = vmatpush1.msra.mxu0 0.0
    %2430 = vmatprep.subr.mxu0 0.0
    %2431 = vmatpush1.msra.mxu0 0.0
    %2432 = vmatprep.subr.mxu0 0.0
    %2433 = vmatpush1.msra.mxu0 0.0
    %2434 = vmatprep.subr.mxu0 0.0
    %2435 = vmatpush1.msra.mxu0 0.0
    %2436 = vmatprep.subr.mxu0 0.0
    %2437 = vmatpush1.msra.mxu0 0.0
    %2438 = vmatprep.subr.mxu0 0.0
    %2439 = vmatpush1.msra.mxu0 0.0
    %2440 = vmatprep.subr.mxu0 0.0
    %2441 = vmatpush1.msra.mxu0 0.0
    %2442 = vmatprep.subr.mxu0 0.0
    %2443 = vmatpush1.msra.mxu0 0.0
    %2444 = vmatprep.subr.mxu0 0.0
    %2445 = vmatpush1.msra.mxu0 0.0
    %2446 = vmatprep.subr.mxu0 0.0
    %2447 = vmatpush1.msra.mxu0 0.0
    %2448 = vmatprep.subr.mxu0 0.0
    %2449 = vmatpush1.msra.mxu0 0.0
    %2450 = vmatprep.subr.mxu0 0.0
    %2451 = vmatpush1.msra.mxu0 0.0
    %2452 = vmatprep.subr.mxu0 0.0
    %2453 = vmatpush1.msra.mxu0 0.0
    %2454 = vmatprep.subr.mxu0 0.0
    %2455 = vmatpush1.msra.mxu0 0.0
    %2456 = vmatprep.subr.mxu0 0.0
    %2457 = vmatpush1.msra.mxu0 0.0
    %2458 = vmatprep.subr.mxu0 0.0
    %2459 = vmatpush1.msra.mxu0 0.0
    %2460 = vmatprep.subr.mxu0 0.0
    %2461 = vmatpush1.msra.mxu0 0.0
    %2462 = vmatprep.subr.mxu0 0.0
    %2463 = vmatpush1.msra.mxu0 0.0
    %2464 = vmatprep.subr.mxu0 0.0
    %2465 = vmatpush1.msra.mxu0 0.0
    %2466 = vmatprep.subr.mxu0 0.0
    %2467 = vmatpush1.msra.mxu0 0.0
    %2468 = vmatprep.subr.mxu0 0.0
    %2469 = vmatpush1.msra.mxu0 0.0
    %2470 = vmatprep.subr.mxu0 0.0
    %2471 = vmatpush1.msra.mxu0 0.0
    %2472 = vmatprep.subr.mxu0 0.0
    %2473 = vmatpush1.msra.mxu0 0.0
    %2474 = vmatprep.subr.mxu0 0.0
    %2475 = vmatpush1.msra.mxu0 0.0
    %2476 = vmatprep.subr.mxu0 0.0
    %2477 = vmatpush1.msra.mxu0 0.0
    %2478 = vmatprep.subr.mxu0 0.0
    %2479 = vmatpush1.msra.mxu0 0.0
    %2480 = vmatprep.subr.mxu0 0.0
    %2481 = vmatpush1.msra.mxu0 0.0
    %2482 = vmatprep.subr.mxu0 0.0
    %2483 = vmatpush1.msra.mxu0 0.0
    %2484 = vmatprep.mubr.f32.mxu0 0.0
    %2485 = vmatmul.mubr.f32.gmra.mrb[0].mxu0 %v135
    %v2486 = vpop.f32.mrb[0].mxu0
    %v2487 = vadd.f32 0.0, %v2486
    %v2488 = vpop.f32.mrb[0].mxu0
    %2489 = vmatprep.mubr.f32.mxu0 0.0
    %2490 = vmatmul.mubr.f32.gmra.mrb[0].mxu0 %v138
    %v2491 = vpop.f32.mrb[0].mxu0
    %v2492 = vadd.f32 0.0, %v2491
    %v2493 = vpop.f32.mrb[0].mxu0
    %2494 = vmatprep.mubr.f32.mxu0 0.0
    %2495 = vmatmul.mubr.f32.gmra.mrb[0].mxu0 %v141
    %v2496 = vpop.f32.mrb[0].mxu0
    %v2497 = vadd.f32 0.0, %v2496
    %v2498 = vpop.f32.mrb[0].mxu0
    %2499 = vmatprep.mubr.f32.mxu0 0.0
    %2500 = vmatmul.mubr.f32.gmra.mrb[0].mxu0 %v144
    %v2501 = vpop.f32.mrb[0].mxu0
    %v2502 = vadd.f32 0.0, %v2501
    %v2503 = vpop.f32.mrb[0].mxu0
    %2504 = vdwg.mxu0
    %2505 = vmatprep.subr.mxu0 0.0
    %2506 = vmatpush1.msra.mxu0 %v2416
    %2507 = vmatprep.subr.mxu0 0.0
    %2508 = vmatpush1.msra.mxu0 %v2417
    %2509 = vmatprep.subr.mxu0 0.0
    %2510 = vmatpush1.msra.mxu0 %v2418
    %2511 = vmatprep.subr.mxu0 0.0
    %2512 = vmatpush1.msra.mxu0 %v2419
    %2513 = vmatprep.subr.mxu0 0.0
    %2514 = vmatpush1.msra.mxu0 0.0
    %2515 = vmatprep.subr.mxu0 0.0
    %2516 = vmatpush1.msra.mxu0 0.0
    %2517 = vmatprep.subr.mxu0 0.0
    %2518 = vmatpush1.msra.mxu0 0.0
    %2519 = vmatprep.subr.mxu0 0.0
    %2520 = vmatpush1.msra.mxu0 0.0
    %2521 = vmatprep.subr.mxu0 0.0
    %2522 = vmatpush1.msra.mxu0 0.0
    %2523 = vmatprep.subr.mxu0 0.0
    %2524 = vmatpush1.msra.mxu0 0.0
    %2525 = vmatprep.subr.mxu0 0.0
    %2526 = vmatpush1.msra.mxu0 0.0
    %2527 = vmatprep.subr.mxu0 0.0
    %2528 = vmatpush1.msra.mxu0 0.0
    %2529 = vmatprep.subr.mxu0 0.0
    %2530 = vmatpush1.msra.mxu0 0.0
    %2531 = vmatprep.subr.mxu0 0.0
    %2532 = vmatpush1.msra.mxu0 0.0
    %2533 = vmatprep.subr.mxu0 0.0
    %2534 = vmatpush1.msra.mxu0 0.0
    %2535 = vmatprep.subr.mxu0 0.0
    %2536 = vmatpush1.msra.mxu0 0.0
    %2537 = vmatprep.subr.mxu0 0.0
    %2538 = vmatpush1.msra.mxu0 0.0
    %2539 = vmatprep.subr.mxu0 0.0
    %2540 = vmatpush1.msra.mxu0 0.0
    %2541 = vmatprep.subr.mxu0 0.0
    %2542 = vmatpush1.msra.mxu0 0.0
    %2543 = vmatprep.subr.mxu0 0.0
    %2544 = vmatpush1.msra.mxu0 0.0
    %2545 = vmatprep.subr.mxu0 0.0
    %2546 = vmatpush1.msra.mxu0 0.0
    %2547 = vmatprep.subr.mxu0 0.0
    %2548 = vmatpush1.msra.mxu0 0.0
    %2549 = vmatprep.subr.mxu0 0.0
    %2550 = vmatpush1.msra.mxu0 0.0
    %2551 = vmatprep.subr.mxu0 0.0
    %2552 = vmatpush1.msra.mxu0 0.0
    %2553 = vmatprep.subr.mxu0 0.0
    %2554 = vmatpush1.msra.mxu0 0.0
    %2555 = vmatprep.subr.mxu0 0.0
    %2556 = vmatpush1.msra.mxu0 0.0
    %2557 = vmatprep.subr.mxu0 0.0
    %2558 = vmatpush1.msra.mxu0 0.0
    %2559 = vmatprep.subr.mxu0 0.0
    %2560 = vmatpush1.msra.mxu0 0.0
    %2561 = vmatprep.subr.mxu0 0.0
    %2562 = vmatpush1.msra.mxu0 0.0
    %2563 = vmatprep.subr.mxu0 0.0
    %2564 = vmatpush1.msra.mxu0 0.0
    %2565 = vmatprep.subr.mxu0 0.0
    %2566 = vmatpush1.msra.mxu0 0.0
    %2567 = vmatprep.subr.mxu0 0.0
    %2568 = vmatpush1.msra.mxu0 0.0
    %2569 = vmatprep.mubr.f32.mxu0 0.0
    %2570 = vmatmul.mubr.f32.gmra.mrb[0].mxu0 %v236
    %v2571 = vpop.f32.mrb[0].mxu0
    %v2572 = vadd.f32 0.0, %v2571
    %v2573 = vpop.f32.mrb[0].mxu0
    %2574 = vmatprep.mubr.f32.mxu0 0.0
    %2575 = vmatmul.mubr.f32.gmra.mrb[0].mxu0 %v239
    %v2576 = vpop.f32.mrb[0].mxu0
    %v2577 = vadd.f32 0.0, %v2576
    %v2578 = vpop.f32.mrb[0].mxu0
    %2579 = vmatprep.mubr.f32.mxu0 0.0
    %2580 = vmatmul.mubr.f32.gmra.mrb[0].mxu0 %v242
    %v2581 = vpop.f32.mrb[0].mxu0
    %v2582 = vadd.f32 0.0, %v2581
    %v2583 = vpop.f32.mrb[0].mxu0
    %2584 = vmatprep.mubr.f32.mxu0 0.0
    %2585 = vmatmul.mubr.f32.gmra.mrb[0].mxu0 %v245
    %v2586 = vpop.f32.mrb[0].mxu0
    %v2587 = vadd.f32 0.0, %v2586
    %v2588 = vpop.f32.mrb[0].mxu0
    %2589 = vdwg.mxu0
    %v2590 = vld [vmem:[%s18] sm:$0xff]
    %v2591 = vld [vmem:[%s18 + $0x8] sm:$0xff]
    %v2592 = vld [vmem:[%s18 + $0x10] sm:$0xff]
    %v2593 = vld [vmem:[%s18 + $0x18] sm:$0xff]
    %v2594 = vld [vmem:[%s18 + $0x20] sm:$0xff]
    %v2595 = vld [vmem:[%s18 + $0x28] sm:$0xff]
    %v2596 = vld [vmem:[%s18 + $0x30] sm:$0xff]
    %v2597 = vld [vmem:[%s18 + $0x38] sm:$0xff]
    %v2598 = vld [vmem:[%s18 + $0x40] sm:$0xff]
    %v2599 = vld [vmem:[%s18 + $0x48] sm:$0xff]
    %v2600 = vld [vmem:[%s18 + $0x50] sm:$0xff]
    %v2601 = vld [vmem:[%s18 + $0x58] sm:$0xff]
    %v2602 = vld [vmem:[%s18 + $0x60] sm:$0xff]
    %v2603 = vld [vmem:[%s18 + $0x68] sm:$0xff]
    %v2604 = vld [vmem:[%s18 + $0x70] sm:$0xff]
    %v2605 = vld [vmem:[%s18 + $0x78] sm:$0xff]
    %s2606 = scalar_lea.vmem %s18, 128
    %v2607 = vld [vmem:[%s2606] sm:$0xff]
    %v2608 = vld [vmem:[%s2606 + $0x8] sm:$0xff]
    %v2609 = vld [vmem:[%s2606 + $0x10] sm:$0xff]
    %v2610 = vld [vmem:[%s2606 + $0x18] sm:$0xff]
    %v2611 = vld [vmem:[%s2606 + $0x20] sm:$0xff]
    %v2612 = vld [vmem:[%s2606 + $0x28] sm:$0xff]
    %v2613 = vld [vmem:[%s2606 + $0x30] sm:$0xff]
    %v2614 = vld [vmem:[%s2606 + $0x38] sm:$0xff]
    %v2615 = vld [vmem:[%s2606 + $0x40] sm:$0xff]
    %v2616 = vld [vmem:[%s2606 + $0x48] sm:$0xff]
    %v2617 = vld [vmem:[%s2606 + $0x50] sm:$0xff]
    %v2618 = vld [vmem:[%s2606 + $0x58] sm:$0xff]
    %v2619 = vld [vmem:[%s2606 + $0x60] sm:$0xff]
    %v2620 = vld [vmem:[%s2606 + $0x68] sm:$0xff]
    %v2621 = vld [vmem:[%s2606 + $0x70] sm:$0xff]
    %v2622 = vld [vmem:[%s2606 + $0x78] sm:$0xff]
    %2623 = vmatprep.subr.mxu0 0.0
    %2624 = vmatpush1.msra.mxu0 %v2607
    %2625 = vmatprep.subr.mxu0 0.0
    %2626 = vmatpush1.msra.mxu0 %v2608
    %2627 = vmatprep.subr.mxu0 0.0
    %2628 = vmatpush1.msra.mxu0 %v2609
    %2629 = vmatprep.subr.mxu0 0.0
    %2630 = vmatpush1.msra.mxu0 %v2610
    %2631 = vmatprep.subr.mxu0 0.0
    %2632 = vmatpush1.msra.mxu0 %v2611
    %2633 = vmatprep.subr.mxu0 0.0
    %2634 = vmatpush1.msra.mxu0 %v2612
    %2635 = vmatprep.subr.mxu0 0.0
    %2636 = vmatpush1.msra.mxu0 %v2613
    %2637 = vmatprep.subr.mxu0 0.0
    %2638 = vmatpush1.msra.mxu0 %v2614
    %2639 = vmatprep.subr.mxu0 0.0
    %2640 = vmatpush1.msra.mxu0 %v2615
    %2641 = vmatprep.subr.mxu0 0.0
    %2642 = vmatpush1.msra.mxu0 %v2616
    %2643 = vmatprep.subr.mxu0 0.0
    %2644 = vmatpush1.msra.mxu0 %v2617
    %2645 = vmatprep.subr.mxu0 0.0
    %2646 = vmatpush1.msra.mxu0 %v2618
    %2647 = vmatprep.subr.mxu0 0.0
    %2648 = vmatpush1.msra.mxu0 %v2619
    %2649 = vmatprep.subr.mxu0 0.0
    %2650 = vmatpush1.msra.mxu0 %v2620
    %2651 = vmatprep.subr.mxu0 0.0
    %2652 = vmatpush1.msra.mxu0 %v2621
    %2653 = vmatprep.subr.mxu0 0.0
    %2654 = vmatpush1.msra.mxu0 %v2622
    %2655 = vmatprep.subr.mxu0 0.0
    %2656 = vmatpush1.msra.mxu0 0.0
    %2657 = vmatprep.subr.mxu0 0.0
    %2658 = vmatpush1.msra.mxu0 0.0
    %2659 = vmatprep.subr.mxu0 0.0
    %2660 = vmatpush1.msra.mxu0 0.0
    %2661 = vmatprep.subr.mxu0 0.0
    %2662 = vmatpush1.msra.mxu0 0.0
    %2663 = vmatprep.subr.mxu0 0.0
    %2664 = vmatpush1.msra.mxu0 0.0
    %2665 = vmatprep.subr.mxu0 0.0
    %2666 = vmatpush1.msra.mxu0 0.0
    %2667 = vmatprep.subr.mxu0 0.0
    %2668 = vmatpush1.msra.mxu0 0.0
    %2669 = vmatprep.subr.mxu0 0.0
    %2670 = vmatpush1.msra.mxu0 0.0
    %2671 = vmatprep.subr.mxu0 0.0
    %2672 = vmatpush1.msra.mxu0 0.0
    %2673 = vmatprep.subr.mxu0 0.0
    %2674 = vmatpush1.msra.mxu0 0.0
    %2675 = vmatprep.subr.mxu0 0.0
    %2676 = vmatpush1.msra.mxu0 0.0
    %2677 = vmatprep.subr.mxu0 0.0
    %2678 = vmatpush1.msra.mxu0 0.0
    %2679 = vmatprep.subr.mxu0 0.0
    %2680 = vmatpush1.msra.mxu0 0.0
    %2681 = vmatprep.subr.mxu0 0.0
    %2682 = vmatpush1.msra.mxu0 0.0
    %2683 = vmatprep.subr.mxu0 0.0
    %2684 = vmatpush1.msra.mxu0 0.0
    %2685 = vmatprep.subr.mxu0 0.0
    %2686 = vmatpush1.msra.mxu0 0.0
    %2687 = vmatprep.mubr.f32.mxu0 0.0
    %2688 = vmatmul.mubr.f32.gmra.mrb[0].mxu0 %v2416
    %v2689 = vpop.f32.mrb[0].mxu0
    %v2690 = vadd.f32 0.0, %v2689
    %v2691 = vpop.f32.mrb[0].mxu0
    %2692 = vmatprep.mubr.f32.mxu0 0.0
    %2693 = vmatmul.mubr.f32.gmra.mrb[0].mxu0 %v2417
    %v2694 = vpop.f32.mrb[0].mxu0
    %v2695 = vadd.f32 0.0, %v2694
    %v2696 = vpop.f32.mrb[0].mxu0
    %2697 = vmatprep.mubr.f32.mxu0 0.0
    %2698 = vmatmul.mubr.f32.gmra.mrb[0].mxu0 %v2418
    %v2699 = vpop.f32.mrb[0].mxu0
    %v2700 = vadd.f32 0.0, %v2699
    %v2701 = vpop.f32.mrb[0].mxu0
    %2702 = vmatprep.mubr.f32.mxu0 0.0
    %2703 = vmatmul.mubr.f32.gmra.mrb[0].mxu0 %v2419
    %v2704 = vpop.f32.mrb[0].mxu0
    %v2705 = vadd.f32 0.0, %v2704
    %v2706 = vpop.f32.mrb[0].mxu0
    %2707 = vdwg.mxu0
    %2708 = vmatprep.subr.mxu0 0.0
    %2709 = vmatpush1.msra.mxu0 %v2590
    %2710 = vmatprep.subr.mxu0 0.0
    %2711 = vmatpush1.msra.mxu0 %v2591
    %2712 = vmatprep.subr.mxu0 0.0
    %2713 = vmatpush1.msra.mxu0 %v2592
    %2714 = vmatprep.subr.mxu0 0.0
    %2715 = vmatpush1.msra.mxu0 %v2593
    %2716 = vmatprep.subr.mxu0 0.0
    %2717 = vmatpush1.msra.mxu0 %v2594
    %2718 = vmatprep.subr.mxu0 0.0
    %2719 = vmatpush1.msra.mxu0 %v2595
    %2720 = vmatprep.subr.mxu0 0.0
    %2721 = vmatpush1.msra.mxu0 %v2596
    %2722 = vmatprep.subr.mxu0 0.0
    %2723 = vmatpush1.msra.mxu0 %v2597
    %2724 = vmatprep.subr.mxu0 0.0
    %2725 = vmatpush1.msra.mxu0 %v2598
    %2726 = vmatprep.subr.mxu0 0.0
    %2727 = vmatpush1.msra.mxu0 %v2599
    %2728 = vmatprep.subr.mxu0 0.0
    %2729 = vmatpush1.msra.mxu0 %v2600
    %2730 = vmatprep.subr.mxu0 0.0
    %2731 = vmatpush1.msra.mxu0 %v2601
    %2732 = vmatprep.subr.mxu0 0.0
    %2733 = vmatpush1.msra.mxu0 %v2602
    %2734 = vmatprep.subr.mxu0 0.0
    %2735 = vmatpush1.msra.mxu0 %v2603
    %2736 = vmatprep.subr.mxu0 0.0
    %2737 = vmatpush1.msra.mxu0 %v2604
    %2738 = vmatprep.subr.mxu0 0.0
    %2739 = vmatpush1.msra.mxu0 %v2605
    %2740 = vmatprep.subr.mxu0 0.0
    %2741 = vmatpush1.msra.mxu0 0.0
    %2742 = vmatprep.subr.mxu0 0.0
    %2743 = vmatpush1.msra.mxu0 0.0
    %2744 = vmatprep.subr.mxu0 0.0
    %2745 = vmatpush1.msra.mxu0 0.0
    %2746 = vmatprep.subr.mxu0 0.0
    %2747 = vmatpush1.msra.mxu0 0.0
    %2748 = vmatprep.subr.mxu0 0.0
    %2749 = vmatpush1.msra.mxu0 0.0
    %2750 = vmatprep.subr.mxu0 0.0
    %2751 = vmatpush1.msra.mxu0 0.0
    %2752 = vmatprep.subr.mxu0 0.0
    %2753 = vmatpush1.msra.mxu0 0.0
    %2754 = vmatprep.subr.mxu0 0.0
    %2755 = vmatpush1.msra.mxu0 0.0
    %2756 = vmatprep.subr.mxu0 0.0
    %2757 = vmatpush1.msra.mxu0 0.0
    %2758 = vmatprep.subr.mxu0 0.0
    %2759 = vmatpush1.msra.mxu0 0.0
    %2760 = vmatprep.subr.mxu0 0.0
    %2761 = vmatpush1.msra.mxu0 0.0
    %2762 = vmatprep.subr.mxu0 0.0
    %2763 = vmatpush1.msra.mxu0 0.0
    %2764 = vmatprep.subr.mxu0 0.0
    %2765 = vmatpush1.msra.mxu0 0.0
    %2766 = vmatprep.subr.mxu0 0.0
    %2767 = vmatpush1.msra.mxu0 0.0
    %2768 = vmatprep.subr.mxu0 0.0
    %2769 = vmatpush1.msra.mxu0 0.0
    %2770 = vmatprep.subr.mxu0 0.0
    %2771 = vmatpush1.msra.mxu0 0.0
    %2772 = vmatprep.mubr.f32.mxu0 0.0
    %2773 = vmatmul.mubr.f32.gmra.mrb[0].mxu0 %v2487
    %v2774 = vpop.f32.mrb[0].mxu0
    %v2775 = vadd.f32 %v2690, %v2774
    %v2776 = vpop.f32.mrb[0].mxu0
    %2777 = vmatprep.mubr.f32.mxu0 0.0
    %2778 = vmatmul.mubr.f32.gmra.mrb[0].mxu0 %v2492
    %v2779 = vpop.f32.mrb[0].mxu0
    %v2780 = vadd.f32 %v2695, %v2779
    %v2781 = vpop.f32.mrb[0].mxu0
    %2782 = vmatprep.mubr.f32.mxu0 0.0
    %2783 = vmatmul.mubr.f32.gmra.mrb[0].mxu0 %v2497
    %v2784 = vpop.f32.mrb[0].mxu0
    %v2785 = vadd.f32 %v2700, %v2784
    %v2786 = vpop.f32.mrb[0].mxu0
    %2787 = vmatprep.mubr.f32.mxu0 0.0
    %2788 = vmatmul.mubr.f32.gmra.mrb[0].mxu0 %v2502
    %v2789 = vpop.f32.mrb[0].mxu0
    %v2790 = vadd.f32 %v2705, %v2789
    %v2791 = vpop.f32.mrb[0].mxu0
    %2792 = vdwg.mxu0
    %s2793 = scalar_lea.vmem %s18, 256
    %v2794 = vld [vmem:[%s2793] sm:$0xff]
    %v2795 = vld [vmem:[%s2793 + $0x8] sm:$0xff]
    %v2796 = vld [vmem:[%s2793 + $0x10] sm:$0xff]
    %v2797 = vld [vmem:[%s2793 + $0x18] sm:$0xff]
    %v2798 = vld [vmem:[%s2793 + $0x20] sm:$0xff]
    %v2799 = vld [vmem:[%s2793 + $0x28] sm:$0xff]
    %v2800 = vld [vmem:[%s2793 + $0x30] sm:$0xff]
    %v2801 = vld [vmem:[%s2793 + $0x38] sm:$0xff]
    %v2802 = vld [vmem:[%s2793 + $0x40] sm:$0xff]
    %v2803 = vld [vmem:[%s2793 + $0x48] sm:$0xff]
    %v2804 = vld [vmem:[%s2793 + $0x50] sm:$0xff]
    %v2805 = vld [vmem:[%s2793 + $0x58] sm:$0xff]
    %v2806 = vld [vmem:[%s2793 + $0x60] sm:$0xff]
    %v2807 = vld [vmem:[%s2793 + $0x68] sm:$0xff]
    %v2808 = vld [vmem:[%s2793 + $0x70] sm:$0xff]
    %v2809 = vld [vmem:[%s2793 + $0x78] sm:$0xff]
    %2810 = vmatprep.subr.mxu0 0.0
    %2811 = vmatpush1.msra.mxu0 %v2794
    %2812 = vmatprep.subr.mxu0 0.0
    %2813 = vmatpush1.msra.mxu0 %v2795
    %2814 = vmatprep.subr.mxu0 0.0
    %2815 = vmatpush1.msra.mxu0 %v2796
    %2816 = vmatprep.subr.mxu0 0.0
    %2817 = vmatpush1.msra.mxu0 %v2797
    %2818 = vmatprep.subr.mxu0 0.0
    %2819 = vmatpush1.msra.mxu0 %v2798
    %2820 = vmatprep.subr.mxu0 0.0
    %2821 = vmatpush1.msra.mxu0 %v2799
    %2822 = vmatprep.subr.mxu0 0.0
    %2823 = vmatpush1.msra.mxu0 %v2800
    %2824 = vmatprep.subr.mxu0 0.0
    %2825 = vmatpush1.msra.mxu0 %v2801
    %2826 = vmatprep.subr.mxu0 0.0
    %2827 = vmatpush1.msra.mxu0 %v2802
    %2828 = vmatprep.subr.mxu0 0.0
    %2829 = vmatpush1.msra.mxu0 %v2803
    %2830 = vmatprep.subr.mxu0 0.0
    %2831 = vmatpush1.msra.mxu0 %v2804
    %2832 = vmatprep.subr.mxu0 0.0
    %2833 = vmatpush1.msra.mxu0 %v2805
    %2834 = vmatprep.subr.mxu0 0.0
    %2835 = vmatpush1.msra.mxu0 %v2806
    %2836 = vmatprep.subr.mxu0 0.0
    %2837 = vmatpush1.msra.mxu0 %v2807
    %2838 = vmatprep.subr.mxu0 0.0
    %2839 = vmatpush1.msra.mxu0 %v2808
    %2840 = vmatprep.subr.mxu0 0.0
    %2841 = vmatpush1.msra.mxu0 %v2809
    %2842 = vmatprep.subr.mxu0 0.0
    %2843 = vmatpush1.msra.mxu0 0.0
    %2844 = vmatprep.subr.mxu0 0.0
    %2845 = vmatpush1.msra.mxu0 0.0
    %2846 = vmatprep.subr.mxu0 0.0
    %2847 = vmatpush1.msra.mxu0 0.0
    %2848 = vmatprep.subr.mxu0 0.0
    %2849 = vmatpush1.msra.mxu0 0.0
    %2850 = vmatprep.subr.mxu0 0.0
    %2851 = vmatpush1.msra.mxu0 0.0
    %2852 = vmatprep.subr.mxu0 0.0
    %2853 = vmatpush1.msra.mxu0 0.0
    %2854 = vmatprep.subr.mxu0 0.0
    %2855 = vmatpush1.msra.mxu0 0.0
    %2856 = vmatprep.subr.mxu0 0.0
    %2857 = vmatpush1.msra.mxu0 0.0
    %2858 = vmatprep.subr.mxu0 0.0
    %2859 = vmatpush1.msra.mxu0 0.0
    %2860 = vmatprep.subr.mxu0 0.0
    %2861 = vmatpush1.msra.mxu0 0.0
    %2862 = vmatprep.subr.mxu0 0.0
    %2863 = vmatpush1.msra.mxu0 0.0
    %2864 = vmatprep.subr.mxu0 0.0
    %2865 = vmatpush1.msra.mxu0 0.0
    %2866 = vmatprep.subr.mxu0 0.0
    %2867 = vmatpush1.msra.mxu0 0.0
    %2868 = vmatprep.subr.mxu0 0.0
    %2869 = vmatpush1.msra.mxu0 0.0
    %2870 = vmatprep.subr.mxu0 0.0
    %2871 = vmatpush1.msra.mxu0 0.0
    %2872 = vmatprep.subr.mxu0 0.0
    %2873 = vmatpush1.msra.mxu0 0.0
    %2874 = vmatprep.mubr.f32.mxu0 0.0
    %2875 = vmatmul.mubr.f32.gmra.mrb[0].mxu0 %v2572
    %v2876 = vpop.f32.mrb[0].mxu0
    %v2877 = vadd.f32 0.0, %v2876
    %v2878 = vpop.f32.mrb[0].mxu0
    %2879 = vmatprep.mubr.f32.mxu0 0.0
    %2880 = vmatmul.mubr.f32.gmra.mrb[0].mxu0 %v2577
    %v2881 = vpop.f32.mrb[0].mxu0
    %v2882 = vadd.f32 0.0, %v2881
    %v2883 = vpop.f32.mrb[0].mxu0
    %2884 = vmatprep.mubr.f32.mxu0 0.0
    %2885 = vmatmul.mubr.f32.gmra.mrb[0].mxu0 %v2582
    %v2886 = vpop.f32.mrb[0].mxu0
    %v2887 = vadd.f32 0.0, %v2886
    %v2888 = vpop.f32.mrb[0].mxu0
    %2889 = vmatprep.mubr.f32.mxu0 0.0
    %2890 = vmatmul.mubr.f32.gmra.mrb[0].mxu0 %v2587
    %v2891 = vpop.f32.mrb[0].mxu0
    %v2892 = vadd.f32 0.0, %v2891
    %v2893 = vpop.f32.mrb[0].mxu0
    %2894 = vdwg.mxu0
    %v2895 = vadd.f32 %v2775, %v2877
    %v2896 = vadd.f32 %v2780, %v2882
    %v2897 = vadd.f32 %v2785, %v2887
    %v2898 = vadd.f32 %v2790, %v2892
    %v2899 = vld [vmem:[%s19] sm:$0x1]
    %v2901 = vlaneseq
    %v2902 = vshrl.u32 %v2901, 7
    %v2903 = vsub.s32 0, %v2902
    %v2904 = vrot.slane %v2899, %v2903
    %v2906 = vadd.f32 %v2895, %v2904
    %v2907 = vadd.f32 %v2896, %v2904
    %v2908 = vadd.f32 %v2897, %v2904
    %v2909 = vadd.f32 %v2898, %v2904
    %v2910 = vld [vmem:[%s20] sm:$0xff]
    %v2911 = vld [vmem:[%s20 + $0x8] sm:$0xff]
    %v2912 = vld [vmem:[%s20 + $0x10] sm:$0xff]
    %v2913 = vld [vmem:[%s20 + $0x18] sm:$0xff]
    %v2914 = vld [vmem:[%s20 + $0x20] sm:$0xff]
    %v2915 = vld [vmem:[%s20 + $0x28] sm:$0xff]
    %v2916 = vld [vmem:[%s20 + $0x30] sm:$0xff]
    %v2917 = vld [vmem:[%s20 + $0x38] sm:$0xff]
    %v2919 = vsel %vm349, %v2906, 0
    %v2922 = vsel %vm349, %v2907, 0
    %v2925 = vsel %vm349, %v2908, 0
    %v2928 = vsel %vm349, %v2909, 0
    %2930 = vmatprep.subr.mxu0 0.0
    %2931 = vmatpush1.msra.mxu0 %v2910
    %2932 = vmatprep.subr.mxu0 0.0
    %2933 = vmatpush1.msra.mxu0 %v2911
    %2934 = vmatprep.subr.mxu0 0.0
    %2935 = vmatpush1.msra.mxu0 %v2912
    %2936 = vmatprep.subr.mxu0 0.0
    %2937 = vmatpush1.msra.mxu0 %v2913
    %2938 = vmatprep.subr.mxu0 0.0
    %2939 = vmatpush1.msra.mxu0 %v2914
    %2940 = vmatprep.subr.mxu0 0.0
    %2941 = vmatpush1.msra.mxu0 %v2915
    %2942 = vmatprep.subr.mxu0 0.0
    %2943 = vmatpush1.msra.mxu0 %v2916
    %2944 = vmatprep.subr.mxu0 0.0
    %2945 = vmatpush1.msra.mxu0 %v2917
    %2946 = vmatprep.subr.mxu0 0.0
    %2947 = vmatpush1.msra.mxu0 0.0
    %2948 = vmatprep.subr.mxu0 0.0
    %2949 = vmatpush1.msra.mxu0 0.0
    %2950 = vmatprep.subr.mxu0 0.0
    %2951 = vmatpush1.msra.mxu0 0.0
    %2952 = vmatprep.subr.mxu0 0.0
    %2953 = vmatpush1.msra.mxu0 0.0
    %2954 = vmatprep.subr.mxu0 0.0
    %2955 = vmatpush1.msra.mxu0 0.0
    %2956 = vmatprep.subr.mxu0 0.0
    %2957 = vmatpush1.msra.mxu0 0.0
    %2958 = vmatprep.subr.mxu0 0.0
    %2959 = vmatpush1.msra.mxu0 0.0
    %2960 = vmatprep.subr.mxu0 0.0
    %2961 = vmatpush1.msra.mxu0 0.0
    %2962 = vmatprep.subr.mxu0 0.0
    %2963 = vmatpush1.msra.mxu0 0.0
    %2964 = vmatprep.subr.mxu0 0.0
    %2965 = vmatpush1.msra.mxu0 0.0
    %2966 = vmatprep.subr.mxu0 0.0
    %2967 = vmatpush1.msra.mxu0 0.0
    %2968 = vmatprep.subr.mxu0 0.0
    %2969 = vmatpush1.msra.mxu0 0.0
    %2970 = vmatprep.subr.mxu0 0.0
    %2971 = vmatpush1.msra.mxu0 0.0
    %2972 = vmatprep.subr.mxu0 0.0
    %2973 = vmatpush1.msra.mxu0 0.0
    %2974 = vmatprep.subr.mxu0 0.0
    %2975 = vmatpush1.msra.mxu0 0.0
    %2976 = vmatprep.subr.mxu0 0.0
    %2977 = vmatpush1.msra.mxu0 0.0
    %2978 = vmatprep.subr.mxu0 0.0
    %2979 = vmatpush1.msra.mxu0 0.0
    %2980 = vmatprep.subr.mxu0 0.0
    %2981 = vmatpush1.msra.mxu0 0.0
    %2982 = vmatprep.subr.mxu0 0.0
    %2983 = vmatpush1.msra.mxu0 0.0
    %2984 = vmatprep.subr.mxu0 0.0
    %2985 = vmatpush1.msra.mxu0 0.0
    %2986 = vmatprep.subr.mxu0 0.0
    %2987 = vmatpush1.msra.mxu0 0.0
    %2988 = vmatprep.subr.mxu0 0.0
    %2989 = vmatpush1.msra.mxu0 0.0
    %2990 = vmatprep.subr.mxu0 0.0
    %2991 = vmatpush1.msra.mxu0 0.0
    %2992 = vmatprep.subr.mxu0 0.0
    %2993 = vmatpush1.msra.mxu0 0.0
    %2994 = vmatprep.mubr.f32.mxu0 0.0
    %2995 = vmatmul.mubr.f32.gmra.mrb[0].mxu0 %v2919
    %v2996 = vpop.f32.mrb[0].mxu0
    %v2997 = vadd.f32 0.0, %v2996
    %v2998 = vpop.f32.mrb[0].mxu0
    %2999 = vmatprep.mubr.f32.mxu0 0.0
    %3000 = vmatmul.mubr.f32.gmra.mrb[0].mxu0 %v2922
    %v3001 = vpop.f32.mrb[0].mxu0
    %v3002 = vadd.f32 0.0, %v3001
    %v3003 = vpop.f32.mrb[0].mxu0
    %3004 = vmatprep.mubr.f32.mxu0 0.0
    %3005 = vmatmul.mubr.f32.gmra.mrb[0].mxu0 %v2925
    %v3006 = vpop.f32.mrb[0].mxu0
    %v3007 = vadd.f32 0.0, %v3006
    %v3008 = vpop.f32.mrb[0].mxu0
    %3009 = vmatprep.mubr.f32.mxu0 0.0
    %3010 = vmatmul.mubr.f32.gmra.mrb[0].mxu0 %v2928
    %v3011 = vpop.f32.mrb[0].mxu0
    %v3012 = vadd.f32 0.0, %v3011
    %v3013 = vpop.f32.mrb[0].mxu0
    %3014 = vdwg.mxu0
    %v3015 = vsel %vm349, %v2997, 0.0
    %v3016 = vsel %vm349, %v3002, 0.0
    %v3017 = vadd.f32 %v3015, %v3016
    %v3018 = vsel %vm349, %v3007, 0.0
    %v3019 = vadd.f32 %v3017, %v3018
    %v3020 = vsel %vm349, %v3012, 0.0
    %v3021 = vadd.f32 %v3019, %v3020
    %v3022 = vrot.slane %v3021, 4
    %v3023 = vadd.f32 %v3021, %v3022
    %v3024 = vrot.slane %v3023, 2
    %v3025 = vadd.f32 %v3023, %v3024
    %v3026 = vrot.slane %v3025, 1
    %v3027 = vadd.f32 %v3025, %v3026
    %v3028 = vmul.f32 %v2906, %v2906
    %v3029 = vmul.f32 %v2907, %v2907
    %v3030 = vmul.f32 %v2908, %v2908
    %v3031 = vmul.f32 %v2909, %v2909
    %v3033 = vsel %vm349, %v3028, 0
    %v3036 = vsel %vm349, %v3029, 0
    %v3039 = vsel %vm349, %v3030, 0
    %v3042 = vsel %vm349, %v3031, 0
    %3044 = vmatprep.subr.mxu0 0.0
    %3045 = vmatpush1.msra.mxu0 %v2910
    %3046 = vmatprep.subr.mxu0 0.0
    %3047 = vmatpush1.msra.mxu0 %v2911
    %3048 = vmatprep.subr.mxu0 0.0
    %3049 = vmatpush1.msra.mxu0 %v2912
    %3050 = vmatprep.subr.mxu0 0.0
    %3051 = vmatpush1.msra.mxu0 %v2913
    %3052 = vmatprep.subr.mxu0 0.0
    %3053 = vmatpush1.msra.mxu0 %v2914
    %3054 = vmatprep.subr.mxu0 0.0
    %3055 = vmatpush1.msra.mxu0 %v2915
    %3056 = vmatprep.subr.mxu0 0.0
    %3057 = vmatpush1.msra.mxu0 %v2916
    %3058 = vmatprep.subr.mxu0 0.0
    %3059 = vmatpush1.msra.mxu0 %v2917
    %3060 = vmatprep.subr.mxu0 0.0
    %3061 = vmatpush1.msra.mxu0 0.0
    %3062 = vmatprep.subr.mxu0 0.0
    %3063 = vmatpush1.msra.mxu0 0.0
    %3064 = vmatprep.subr.mxu0 0.0
    %3065 = vmatpush1.msra.mxu0 0.0
    %3066 = vmatprep.subr.mxu0 0.0
    %3067 = vmatpush1.msra.mxu0 0.0
    %3068 = vmatprep.subr.mxu0 0.0
    %3069 = vmatpush1.msra.mxu0 0.0
    %3070 = vmatprep.subr.mxu0 0.0
    %3071 = vmatpush1.msra.mxu0 0.0
    %3072 = vmatprep.subr.mxu0 0.0
    %3073 = vmatpush1.msra.mxu0 0.0
    %3074 = vmatprep.subr.mxu0 0.0
    %3075 = vmatpush1.msra.mxu0 0.0
    %3076 = vmatprep.subr.mxu0 0.0
    %3077 = vmatpush1.msra.mxu0 0.0
    %3078 = vmatprep.subr.mxu0 0.0
    %3079 = vmatpush1.msra.mxu0 0.0
    %3080 = vmatprep.subr.mxu0 0.0
    %3081 = vmatpush1.msra.mxu0 0.0
    %3082 = vmatprep.subr.mxu0 0.0
    %3083 = vmatpush1.msra.mxu0 0.0
    %3084 = vmatprep.subr.mxu0 0.0
    %3085 = vmatpush1.msra.mxu0 0.0
    %3086 = vmatprep.subr.mxu0 0.0
    %3087 = vmatpush1.msra.mxu0 0.0
    %3088 = vmatprep.subr.mxu0 0.0
    %3089 = vmatpush1.msra.mxu0 0.0
    %3090 = vmatprep.subr.mxu0 0.0
    %3091 = vmatpush1.msra.mxu0 0.0
    %3092 = vmatprep.subr.mxu0 0.0
    %3093 = vmatpush1.msra.mxu0 0.0
    %3094 = vmatprep.subr.mxu0 0.0
    %3095 = vmatpush1.msra.mxu0 0.0
    %3096 = vmatprep.subr.mxu0 0.0
    %3097 = vmatpush1.msra.mxu0 0.0
    %3098 = vmatprep.subr.mxu0 0.0
    %3099 = vmatpush1.msra.mxu0 0.0
    %3100 = vmatprep.subr.mxu0 0.0
    %3101 = vmatpush1.msra.mxu0 0.0
    %3102 = vmatprep.subr.mxu0 0.0
    %3103 = vmatpush1.msra.mxu0 0.0
    %3104 = vmatprep.subr.mxu0 0.0
    %3105 = vmatpush1.msra.mxu0 0.0
    %3106 = vmatprep.subr.mxu0 0.0
    %3107 = vmatpush1.msra.mxu0 0.0
    %3108 = vmatprep.mubr.f32.mxu0 0.0
    %3109 = vmatmul.mubr.f32.gmra.mrb[0].mxu0 %v3033
    %v3110 = vpop.f32.mrb[0].mxu0
    %v3111 = vadd.f32 0.0, %v3110
    %v3112 = vpop.f32.mrb[0].mxu0
    %3113 = vmatprep.mubr.f32.mxu0 0.0
    %3114 = vmatmul.mubr.f32.gmra.mrb[0].mxu0 %v3036
    %v3115 = vpop.f32.mrb[0].mxu0
    %v3116 = vadd.f32 0.0, %v3115
    %v3117 = vpop.f32.mrb[0].mxu0
    %3118 = vmatprep.mubr.f32.mxu0 0.0
    %3119 = vmatmul.mubr.f32.gmra.mrb[0].mxu0 %v3039
    %v3120 = vpop.f32.mrb[0].mxu0
    %v3121 = vadd.f32 0.0, %v3120
    %v3122 = vpop.f32.mrb[0].mxu0
    %3123 = vmatprep.mubr.f32.mxu0 0.0
    %3124 = vmatmul.mubr.f32.gmra.mrb[0].mxu0 %v3042
    %v3125 = vpop.f32.mrb[0].mxu0
    %v3126 = vadd.f32 0.0, %v3125
    %v3127 = vpop.f32.mrb[0].mxu0
    %3128 = vdwg.mxu0
    %v3129 = vsel %vm349, %v3111, 0.0
    %v3130 = vsel %vm349, %v3116, 0.0
    %v3131 = vadd.f32 %v3129, %v3130
    %v3132 = vsel %vm349, %v3121, 0.0
    %v3133 = vadd.f32 %v3131, %v3132
    %v3134 = vsel %vm349, %v3126, 0.0
    %v3135 = vadd.f32 %v3133, %v3134
    %v3136 = vrot.slane %v3135, 4
    %v3137 = vadd.f32 %v3135, %v3136
    %v3138 = vrot.slane %v3137, 2
    %v3139 = vadd.f32 %v3137, %v3138
    %v3140 = vrot.slane %v3139, 1
    %v3141 = vadd.f32 %v3139, %v3140
    %v3142 = vmul.f32 %v3027, 0.001953125
    %v3143 = vmul.f32 %v3141, 0.001953125
    %v3144 = vmul.f32 %v3142, %v3142
    %v3145 = vsub.f32 %v3143, %v3144
    %v3146 = vsub.f32 %v2906, %v3142
    %v3147 = vsub.f32 %v2907, %v3142
    %v3148 = vsub.f32 %v2908, %v3142
    %v3149 = vsub.f32 %v2909, %v3142
    %v3150 = vld [vmem:[%s21] sm:$0x1]
    %v3151 = vadd.f32 %v3145, 1e-05
    %v3152 = vrsqrt.pop %v3151
    %v3153 = vmul.f32 %v3150, %v3152
    %v3155 = vlaneseq
    %v3156 = vshrl.u32 %v3155, 7
    %v3157 = vsub.s32 0, %v3156
    %v3158 = vrot.slane %v3153, %v3157
    %v3160 = vmul.f32 %v3146, %v3158
    %v3161 = vmul.f32 %v3147, %v3158
    %v3162 = vmul.f32 %v3148, %v3158
    %v3163 = vmul.f32 %v3149, %v3158
    %v3164 = vld [vmem:[%s22] sm:$0x1]
    %v3166 = vlaneseq
    %v3167 = vshrl.u32 %v3166, 7
    %v3168 = vsub.s32 0, %v3167
    %v3169 = vrot.slane %v3164, %v3168
    %v3171 = vadd.f32 %v3160, %v3169
    %v3172 = vadd.f32 %v3161, %v3169
    %v3173 = vadd.f32 %v3162, %v3169
    %v3174 = vadd.f32 %v3163, %v3169
    %v3175 = vmax.f32 %v3171, 0.0
    %v3176 = vmax.f32 %v3172, 0.0
    %v3177 = vmax.f32 %v3173, 0.0
    %v3178 = vmax.f32 %v3174, 0.0
    %3179 = vmatprep.subr.mxu0 0.0
    %3180 = vmatpush1.msra.mxu0 %v3175
    %3181 = vmatprep.subr.mxu0 0.0
    %3182 = vmatpush1.msra.mxu0 %v3176
    %3183 = vmatprep.subr.mxu0 0.0
    %3184 = vmatpush1.msra.mxu0 %v3177
    %3185 = vmatprep.subr.mxu0 0.0
    %3186 = vmatpush1.msra.mxu0 %v3178
    %3187 = vmatprep.subr.mxu0 0.0
    %3188 = vmatpush1.msra.mxu0 0.0
    %3189 = vmatprep.subr.mxu0 0.0
    %3190 = vmatpush1.msra.mxu0 0.0
    %3191 = vmatprep.subr.mxu0 0.0
    %3192 = vmatpush1.msra.mxu0 0.0
    %3193 = vmatprep.subr.mxu0 0.0
    %3194 = vmatpush1.msra.mxu0 0.0
    %3195 = vmatprep.subr.mxu0 0.0
    %3196 = vmatpush1.msra.mxu0 0.0
    %3197 = vmatprep.subr.mxu0 0.0
    %3198 = vmatpush1.msra.mxu0 0.0
    %3199 = vmatprep.subr.mxu0 0.0
    %3200 = vmatpush1.msra.mxu0 0.0
    %3201 = vmatprep.subr.mxu0 0.0
    %3202 = vmatpush1.msra.mxu0 0.0
    %3203 = vmatprep.subr.mxu0 0.0
    %3204 = vmatpush1.msra.mxu0 0.0
    %3205 = vmatprep.subr.mxu0 0.0
    %3206 = vmatpush1.msra.mxu0 0.0
    %3207 = vmatprep.subr.mxu0 0.0
    %3208 = vmatpush1.msra.mxu0 0.0
    %3209 = vmatprep.subr.mxu0 0.0
    %3210 = vmatpush1.msra.mxu0 0.0
    %3211 = vmatprep.subr.mxu0 0.0
    %3212 = vmatpush1.msra.mxu0 0.0
    %3213 = vmatprep.subr.mxu0 0.0
    %3214 = vmatpush1.msra.mxu0 0.0
    %3215 = vmatprep.subr.mxu0 0.0
    %3216 = vmatpush1.msra.mxu0 0.0
    %3217 = vmatprep.subr.mxu0 0.0
    %3218 = vmatpush1.msra.mxu0 0.0
    %3219 = vmatprep.subr.mxu0 0.0
    %3220 = vmatpush1.msra.mxu0 0.0
    %3221 = vmatprep.subr.mxu0 0.0
    %3222 = vmatpush1.msra.mxu0 0.0
    %3223 = vmatprep.subr.mxu0 0.0
    %3224 = vmatpush1.msra.mxu0 0.0
    %3225 = vmatprep.subr.mxu0 0.0
    %3226 = vmatpush1.msra.mxu0 0.0
    %3227 = vmatprep.subr.mxu0 0.0
    %3228 = vmatpush1.msra.mxu0 0.0
    %3229 = vmatprep.subr.mxu0 0.0
    %3230 = vmatpush1.msra.mxu0 0.0
    %3231 = vmatprep.subr.mxu0 0.0
    %3232 = vmatpush1.msra.mxu0 0.0
    %3233 = vmatprep.subr.mxu0 0.0
    %3234 = vmatpush1.msra.mxu0 0.0
    %3235 = vmatprep.subr.mxu0 0.0
    %3236 = vmatpush1.msra.mxu0 0.0
    %3237 = vmatprep.subr.mxu0 0.0
    %3238 = vmatpush1.msra.mxu0 0.0
    %3239 = vmatprep.subr.mxu0 0.0
    %3240 = vmatpush1.msra.mxu0 0.0
    %3241 = vmatprep.subr.mxu0 0.0
    %3242 = vmatpush1.msra.mxu0 0.0
    %3243 = vmatprep.mubr.f32.mxu0 0.0
    %3244 = vmatmul.mubr.f32.gmra.mrb[0].mxu0 %v135
    %v3245 = vpop.f32.mrb[0].mxu0
    %v3246 = vadd.f32 0.0, %v3245
    %v3247 = vpop.f32.mrb[0].mxu0
    %3248 = vmatprep.mubr.f32.mxu0 0.0
    %3249 = vmatmul.mubr.f32.gmra.mrb[0].mxu0 %v138
    %v3250 = vpop.f32.mrb[0].mxu0
    %v3251 = vadd.f32 0.0, %v3250
    %v3252 = vpop.f32.mrb[0].mxu0
    %3253 = vmatprep.mubr.f32.mxu0 0.0
    %3254 = vmatmul.mubr.f32.gmra.mrb[0].mxu0 %v141
    %v3255 = vpop.f32.mrb[0].mxu0
    %v3256 = vadd.f32 0.0, %v3255
    %v3257 = vpop.f32.mrb[0].mxu0
    %3258 = vmatprep.mubr.f32.mxu0 0.0
    %3259 = vmatmul.mubr.f32.gmra.mrb[0].mxu0 %v144
    %v3260 = vpop.f32.mrb[0].mxu0
    %v3261 = vadd.f32 0.0, %v3260
    %v3262 = vpop.f32.mrb[0].mxu0
    %3263 = vdwg.mxu0
    %3264 = vmatprep.subr.mxu0 0.0
    %3265 = vmatpush1.msra.mxu0 %v3175
    %3266 = vmatprep.subr.mxu0 0.0
    %3267 = vmatpush1.msra.mxu0 %v3176
    %3268 = vmatprep.subr.mxu0 0.0
    %3269 = vmatpush1.msra.mxu0 %v3177
    %3270 = vmatprep.subr.mxu0 0.0
    %3271 = vmatpush1.msra.mxu0 %v3178
    %3272 = vmatprep.subr.mxu0 0.0
    %3273 = vmatpush1.msra.mxu0 0.0
    %3274 = vmatprep.subr.mxu0 0.0
    %3275 = vmatpush1.msra.mxu0 0.0
    %3276 = vmatprep.subr.mxu0 0.0
    %3277 = vmatpush1.msra.mxu0 0.0
    %3278 = vmatprep.subr.mxu0 0.0
    %3279 = vmatpush1.msra.mxu0 0.0
    %3280 = vmatprep.subr.mxu0 0.0
    %3281 = vmatpush1.msra.mxu0 0.0
    %3282 = vmatprep.subr.mxu0 0.0
    %3283 = vmatpush1.msra.mxu0 0.0
    %3284 = vmatprep.subr.mxu0 0.0
    %3285 = vmatpush1.msra.mxu0 0.0
    %3286 = vmatprep.subr.mxu0 0.0
    %3287 = vmatpush1.msra.mxu0 0.0
    %3288 = vmatprep.subr.mxu0 0.0
    %3289 = vmatpush1.msra.mxu0 0.0
    %3290 = vmatprep.subr.mxu0 0.0
    %3291 = vmatpush1.msra.mxu0 0.0
    %3292 = vmatprep.subr.mxu0 0.0
    %3293 = vmatpush1.msra.mxu0 0.0
    %3294 = vmatprep.subr.mxu0 0.0
    %3295 = vmatpush1.msra.mxu0 0.0
    %3296 = vmatprep.subr.mxu0 0.0
    %3297 = vmatpush1.msra.mxu0 0.0
    %3298 = vmatprep.subr.mxu0 0.0
    %3299 = vmatpush1.msra.mxu0 0.0
    %3300 = vmatprep.subr.mxu0 0.0
    %3301 = vmatpush1.msra.mxu0 0.0
    %3302 = vmatprep.subr.mxu0 0.0
    %3303 = vmatpush1.msra.mxu0 0.0
    %3304 = vmatprep.subr.mxu0 0.0
    %3305 = vmatpush1.msra.mxu0 0.0
    %3306 = vmatprep.subr.mxu0 0.0
    %3307 = vmatpush1.msra.mxu0 0.0
    %3308 = vmatprep.subr.mxu0 0.0
    %3309 = vmatpush1.msra.mxu0 0.0
    %3310 = vmatprep.subr.mxu0 0.0
    %3311 = vmatpush1.msra.mxu0 0.0
    %3312 = vmatprep.subr.mxu0 0.0
    %3313 = vmatpush1.msra.mxu0 0.0
    %3314 = vmatprep.subr.mxu0 0.0
    %3315 = vmatpush1.msra.mxu0 0.0
    %3316 = vmatprep.subr.mxu0 0.0
    %3317 = vmatpush1.msra.mxu0 0.0
    %3318 = vmatprep.subr.mxu0 0.0
    %3319 = vmatpush1.msra.mxu0 0.0
    %3320 = vmatprep.subr.mxu0 0.0
    %3321 = vmatpush1.msra.mxu0 0.0
    %3322 = vmatprep.subr.mxu0 0.0
    %3323 = vmatpush1.msra.mxu0 0.0
    %3324 = vmatprep.subr.mxu0 0.0
    %3325 = vmatpush1.msra.mxu0 0.0
    %3326 = vmatprep.subr.mxu0 0.0
    %3327 = vmatpush1.msra.mxu0 0.0
    %3328 = vmatprep.mubr.f32.mxu0 0.0
    %3329 = vmatmul.mubr.f32.gmra.mrb[0].mxu0 %v236
    %v3330 = vpop.f32.mrb[0].mxu0
    %v3331 = vadd.f32 0.0, %v3330
    %v3332 = vpop.f32.mrb[0].mxu0
    %3333 = vmatprep.mubr.f32.mxu0 0.0
    %3334 = vmatmul.mubr.f32.gmra.mrb[0].mxu0 %v239
    %v3335 = vpop.f32.mrb[0].mxu0
    %v3336 = vadd.f32 0.0, %v3335
    %v3337 = vpop.f32.mrb[0].mxu0
    %3338 = vmatprep.mubr.f32.mxu0 0.0
    %3339 = vmatmul.mubr.f32.gmra.mrb[0].mxu0 %v242
    %v3340 = vpop.f32.mrb[0].mxu0
    %v3341 = vadd.f32 0.0, %v3340
    %v3342 = vpop.f32.mrb[0].mxu0
    %3343 = vmatprep.mubr.f32.mxu0 0.0
    %3344 = vmatmul.mubr.f32.gmra.mrb[0].mxu0 %v245
    %v3345 = vpop.f32.mrb[0].mxu0
    %v3346 = vadd.f32 0.0, %v3345
    %v3347 = vpop.f32.mrb[0].mxu0
    %3348 = vdwg.mxu0
    %v3349 = vld [vmem:[%s23] sm:$0xff]
    %v3350 = vld [vmem:[%s23 + $0x8] sm:$0xff]
    %v3351 = vld [vmem:[%s23 + $0x10] sm:$0xff]
    %v3352 = vld [vmem:[%s23 + $0x18] sm:$0xff]
    %v3353 = vld [vmem:[%s23 + $0x20] sm:$0xff]
    %v3354 = vld [vmem:[%s23 + $0x28] sm:$0xff]
    %v3355 = vld [vmem:[%s23 + $0x30] sm:$0xff]
    %v3356 = vld [vmem:[%s23 + $0x38] sm:$0xff]
    %s3357 = scalar_lea.vmem %s23, 64
    %v3358 = vld [vmem:[%s3357] sm:$0xff]
    %v3359 = vld [vmem:[%s3357 + $0x8] sm:$0xff]
    %v3360 = vld [vmem:[%s3357 + $0x10] sm:$0xff]
    %v3361 = vld [vmem:[%s3357 + $0x18] sm:$0xff]
    %v3362 = vld [vmem:[%s3357 + $0x20] sm:$0xff]
    %v3363 = vld [vmem:[%s3357 + $0x28] sm:$0xff]
    %v3364 = vld [vmem:[%s3357 + $0x30] sm:$0xff]
    %v3365 = vld [vmem:[%s3357 + $0x38] sm:$0xff]
    %v3367 = vsel %vm349, %v3175, 0
    %v3370 = vsel %vm349, %v3176, 0
    %v3373 = vsel %vm349, %v3177, 0
    %v3376 = vsel %vm349, %v3178, 0
    %3378 = vmatprep.subr.mxu0 0.0
    %3379 = vmatpush1.msra.mxu0 %v3358
    %3380 = vmatprep.subr.mxu0 0.0
    %3381 = vmatpush1.msra.mxu0 %v3359
    %3382 = vmatprep.subr.mxu0 0.0
    %3383 = vmatpush1.msra.mxu0 %v3360
    %3384 = vmatprep.subr.mxu0 0.0
    %3385 = vmatpush1.msra.mxu0 %v3361
    %3386 = vmatprep.subr.mxu0 0.0
    %3387 = vmatpush1.msra.mxu0 %v3362
    %3388 = vmatprep.subr.mxu0 0.0
    %3389 = vmatpush1.msra.mxu0 %v3363
    %3390 = vmatprep.subr.mxu0 0.0
    %3391 = vmatpush1.msra.mxu0 %v3364
    %3392 = vmatprep.subr.mxu0 0.0
    %3393 = vmatpush1.msra.mxu0 %v3365
    %3394 = vmatprep.subr.mxu0 0.0
    %3395 = vmatpush1.msra.mxu0 0.0
    %3396 = vmatprep.subr.mxu0 0.0
    %3397 = vmatpush1.msra.mxu0 0.0
    %3398 = vmatprep.subr.mxu0 0.0
    %3399 = vmatpush1.msra.mxu0 0.0
    %3400 = vmatprep.subr.mxu0 0.0
    %3401 = vmatpush1.msra.mxu0 0.0
    %3402 = vmatprep.subr.mxu0 0.0
    %3403 = vmatpush1.msra.mxu0 0.0
    %3404 = vmatprep.subr.mxu0 0.0
    %3405 = vmatpush1.msra.mxu0 0.0
    %3406 = vmatprep.subr.mxu0 0.0
    %3407 = vmatpush1.msra.mxu0 0.0
    %3408 = vmatprep.subr.mxu0 0.0
    %3409 = vmatpush1.msra.mxu0 0.0
    %3410 = vmatprep.subr.mxu0 0.0
    %3411 = vmatpush1.msra.mxu0 0.0
    %3412 = vmatprep.subr.mxu0 0.0
    %3413 = vmatpush1.msra.mxu0 0.0
    %3414 = vmatprep.subr.mxu0 0.0
    %3415 = vmatpush1.msra.mxu0 0.0
    %3416 = vmatprep.subr.mxu0 0.0
    %3417 = vmatpush1.msra.mxu0 0.0
    %3418 = vmatprep.subr.mxu0 0.0
    %3419 = vmatpush1.msra.mxu0 0.0
    %3420 = vmatprep.subr.mxu0 0.0
    %3421 = vmatpush1.msra.mxu0 0.0
    %3422 = vmatprep.subr.mxu0 0.0
    %3423 = vmatpush1.msra.mxu0 0.0
    %3424 = vmatprep.subr.mxu0 0.0
    %3425 = vmatpush1.msra.mxu0 0.0
    %3426 = vmatprep.subr.mxu0 0.0
    %3427 = vmatpush1.msra.mxu0 0.0
    %3428 = vmatprep.subr.mxu0 0.0
    %3429 = vmatpush1.msra.mxu0 0.0
    %3430 = vmatprep.subr.mxu0 0.0
    %3431 = vmatpush1.msra.mxu0 0.0
    %3432 = vmatprep.subr.mxu0 0.0
    %3433 = vmatpush1.msra.mxu0 0.0
    %3434 = vmatprep.subr.mxu0 0.0
    %3435 = vmatpush1.msra.mxu0 0.0
    %3436 = vmatprep.subr.mxu0 0.0
    %3437 = vmatpush1.msra.mxu0 0.0
    %3438 = vmatprep.subr.mxu0 0.0
    %3439 = vmatpush1.msra.mxu0 0.0
    %3440 = vmatprep.subr.mxu0 0.0
    %3441 = vmatpush1.msra.mxu0 0.0
    %3442 = vmatprep.mubr.f32.mxu0 0.0
    %3443 = vmatmul.mubr.f32.gmra.mrb[0].mxu0 %v3367
    %v3444 = vpop.f32.mrb[0].mxu0
    %v3445 = vadd.f32 0.0, %v3444
    %v3446 = vpop.f32.mrb[0].mxu0
    %3447 = vmatprep.mubr.f32.mxu0 0.0
    %3448 = vmatmul.mubr.f32.gmra.mrb[0].mxu0 %v3370
    %v3449 = vpop.f32.mrb[0].mxu0
    %v3450 = vadd.f32 0.0, %v3449
    %v3451 = vpop.f32.mrb[0].mxu0
    %3452 = vmatprep.mubr.f32.mxu0 0.0
    %3453 = vmatmul.mubr.f32.gmra.mrb[0].mxu0 %v3373
    %v3454 = vpop.f32.mrb[0].mxu0
    %v3455 = vadd.f32 0.0, %v3454
    %v3456 = vpop.f32.mrb[0].mxu0
    %3457 = vmatprep.mubr.f32.mxu0 0.0
    %3458 = vmatmul.mubr.f32.gmra.mrb[0].mxu0 %v3376
    %v3459 = vpop.f32.mrb[0].mxu0
    %v3460 = vadd.f32 0.0, %v3459
    %v3461 = vpop.f32.mrb[0].mxu0
    %3462 = vdwg.mxu0
    %v3464 = vsel %vm349, %v3246, 0
    %v3467 = vsel %vm349, %v3251, 0
    %v3470 = vsel %vm349, %v3256, 0
    %v3473 = vsel %vm349, %v3261, 0
    %3475 = vmatprep.subr.mxu0 0.0
    %3476 = vmatpush1.msra.mxu0 %v3349
    %3477 = vmatprep.subr.mxu0 0.0
    %3478 = vmatpush1.msra.mxu0 %v3350
    %3479 = vmatprep.subr.mxu0 0.0
    %3480 = vmatpush1.msra.mxu0 %v3351
    %3481 = vmatprep.subr.mxu0 0.0
    %3482 = vmatpush1.msra.mxu0 %v3352
    %3483 = vmatprep.subr.mxu0 0.0
    %3484 = vmatpush1.msra.mxu0 %v3353
    %3485 = vmatprep.subr.mxu0 0.0
    %3486 = vmatpush1.msra.mxu0 %v3354
    %3487 = vmatprep.subr.mxu0 0.0
    %3488 = vmatpush1.msra.mxu0 %v3355
    %3489 = vmatprep.subr.mxu0 0.0
    %3490 = vmatpush1.msra.mxu0 %v3356
    %3491 = vmatprep.subr.mxu0 0.0
    %3492 = vmatpush1.msra.mxu0 0.0
    %3493 = vmatprep.subr.mxu0 0.0
    %3494 = vmatpush1.msra.mxu0 0.0
    %3495 = vmatprep.subr.mxu0 0.0
    %3496 = vmatpush1.msra.mxu0 0.0
    %3497 = vmatprep.subr.mxu0 0.0
    %3498 = vmatpush1.msra.mxu0 0.0
    %3499 = vmatprep.subr.mxu0 0.0
    %3500 = vmatpush1.msra.mxu0 0.0
    %3501 = vmatprep.subr.mxu0 0.0
    %3502 = vmatpush1.msra.mxu0 0.0
    %3503 = vmatprep.subr.mxu0 0.0
    %3504 = vmatpush1.msra.mxu0 0.0
    %3505 = vmatprep.subr.mxu0 0.0
    %3506 = vmatpush1.msra.mxu0 0.0
    %3507 = vmatprep.subr.mxu0 0.0
    %3508 = vmatpush1.msra.mxu0 0.0
    %3509 = vmatprep.subr.mxu0 0.0
    %3510 = vmatpush1.msra.mxu0 0.0
    %3511 = vmatprep.subr.mxu0 0.0
    %3512 = vmatpush1.msra.mxu0 0.0
    %3513 = vmatprep.subr.mxu0 0.0
    %3514 = vmatpush1.msra.mxu0 0.0
    %3515 = vmatprep.subr.mxu0 0.0
    %3516 = vmatpush1.msra.mxu0 0.0
    %3517 = vmatprep.subr.mxu0 0.0
    %3518 = vmatpush1.msra.mxu0 0.0
    %3519 = vmatprep.subr.mxu0 0.0
    %3520 = vmatpush1.msra.mxu0 0.0
    %3521 = vmatprep.subr.mxu0 0.0
    %3522 = vmatpush1.msra.mxu0 0.0
    %3523 = vmatprep.subr.mxu0 0.0
    %3524 = vmatpush1.msra.mxu0 0.0
    %3525 = vmatprep.subr.mxu0 0.0
    %3526 = vmatpush1.msra.mxu0 0.0
    %3527 = vmatprep.subr.mxu0 0.0
    %3528 = vmatpush1.msra.mxu0 0.0
    %3529 = vmatprep.subr.mxu0 0.0
    %3530 = vmatpush1.msra.mxu0 0.0
    %3531 = vmatprep.subr.mxu0 0.0
    %3532 = vmatpush1.msra.mxu0 0.0
    %3533 = vmatprep.subr.mxu0 0.0
    %3534 = vmatpush1.msra.mxu0 0.0
    %3535 = vmatprep.subr.mxu0 0.0
    %3536 = vmatpush1.msra.mxu0 0.0
    %3537 = vmatprep.subr.mxu0 0.0
    %3538 = vmatpush1.msra.mxu0 0.0
    %3539 = vmatprep.mubr.f32.mxu0 0.0
    %3540 = vmatmul.mubr.f32.gmra.mrb[0].mxu0 %v3464
    %v3541 = vpop.f32.mrb[0].mxu0
    %v3542 = vadd.f32 %v3445, %v3541
    %v3543 = vpop.f32.mrb[0].mxu0
    %3544 = vmatprep.mubr.f32.mxu0 0.0
    %3545 = vmatmul.mubr.f32.gmra.mrb[0].mxu0 %v3467
    %v3546 = vpop.f32.mrb[0].mxu0
    %v3547 = vadd.f32 %v3450, %v3546
    %v3548 = vpop.f32.mrb[0].mxu0
    %3549 = vmatprep.mubr.f32.mxu0 0.0
    %3550 = vmatmul.mubr.f32.gmra.mrb[0].mxu0 %v3470
    %v3551 = vpop.f32.mrb[0].mxu0
    %v3552 = vadd.f32 %v3455, %v3551
    %v3553 = vpop.f32.mrb[0].mxu0
    %3554 = vmatprep.mubr.f32.mxu0 0.0
    %3555 = vmatmul.mubr.f32.gmra.mrb[0].mxu0 %v3473
    %v3556 = vpop.f32.mrb[0].mxu0
    %v3557 = vadd.f32 %v3460, %v3556
    %v3558 = vpop.f32.mrb[0].mxu0
    %3559 = vdwg.mxu0
    %s3560 = scalar_lea.vmem %s23, 128
    %v3561 = vld [vmem:[%s3560] sm:$0xff]
    %v3562 = vld [vmem:[%s3560 + $0x8] sm:$0xff]
    %v3563 = vld [vmem:[%s3560 + $0x10] sm:$0xff]
    %v3564 = vld [vmem:[%s3560 + $0x18] sm:$0xff]
    %v3565 = vld [vmem:[%s3560 + $0x20] sm:$0xff]
    %v3566 = vld [vmem:[%s3560 + $0x28] sm:$0xff]
    %v3567 = vld [vmem:[%s3560 + $0x30] sm:$0xff]
    %v3568 = vld [vmem:[%s3560 + $0x38] sm:$0xff]
    %v3570 = vsel %vm349, %v3331, 0
    %v3573 = vsel %vm349, %v3336, 0
    %v3576 = vsel %vm349, %v3341, 0
    %v3579 = vsel %vm349, %v3346, 0
    %3581 = vmatprep.subr.mxu0 0.0
    %3582 = vmatpush1.msra.mxu0 %v3561
    %3583 = vmatprep.subr.mxu0 0.0
    %3584 = vmatpush1.msra.mxu0 %v3562
    %3585 = vmatprep.subr.mxu0 0.0
    %3586 = vmatpush1.msra.mxu0 %v3563
    %3587 = vmatprep.subr.mxu0 0.0
    %3588 = vmatpush1.msra.mxu0 %v3564
    %3589 = vmatprep.subr.mxu0 0.0
    %3590 = vmatpush1.msra.mxu0 %v3565
    %3591 = vmatprep.subr.mxu0 0.0
    %3592 = vmatpush1.msra.mxu0 %v3566
    %3593 = vmatprep.subr.mxu0 0.0
    %3594 = vmatpush1.msra.mxu0 %v3567
    %3595 = vmatprep.subr.mxu0 0.0
    %3596 = vmatpush1.msra.mxu0 %v3568
    %3597 = vmatprep.subr.mxu0 0.0
    %3598 = vmatpush1.msra.mxu0 0.0
    %3599 = vmatprep.subr.mxu0 0.0
    %3600 = vmatpush1.msra.mxu0 0.0
    %3601 = vmatprep.subr.mxu0 0.0
    %3602 = vmatpush1.msra.mxu0 0.0
    %3603 = vmatprep.subr.mxu0 0.0
    %3604 = vmatpush1.msra.mxu0 0.0
    %3605 = vmatprep.subr.mxu0 0.0
    %3606 = vmatpush1.msra.mxu0 0.0
    %3607 = vmatprep.subr.mxu0 0.0
    %3608 = vmatpush1.msra.mxu0 0.0
    %3609 = vmatprep.subr.mxu0 0.0
    %3610 = vmatpush1.msra.mxu0 0.0
    %3611 = vmatprep.subr.mxu0 0.0
    %3612 = vmatpush1.msra.mxu0 0.0
    %3613 = vmatprep.subr.mxu0 0.0
    %3614 = vmatpush1.msra.mxu0 0.0
    %3615 = vmatprep.subr.mxu0 0.0
    %3616 = vmatpush1.msra.mxu0 0.0
    %3617 = vmatprep.subr.mxu0 0.0
    %3618 = vmatpush1.msra.mxu0 0.0
    %3619 = vmatprep.subr.mxu0 0.0
    %3620 = vmatpush1.msra.mxu0 0.0
    %3621 = vmatprep.subr.mxu0 0.0
    %3622 = vmatpush1.msra.mxu0 0.0
    %3623 = vmatprep.subr.mxu0 0.0
    %3624 = vmatpush1.msra.mxu0 0.0
    %3625 = vmatprep.subr.mxu0 0.0
    %3626 = vmatpush1.msra.mxu0 0.0
    %3627 = vmatprep.subr.mxu0 0.0
    %3628 = vmatpush1.msra.mxu0 0.0
    %3629 = vmatprep.subr.mxu0 0.0
    %3630 = vmatpush1.msra.mxu0 0.0
    %3631 = vmatprep.subr.mxu0 0.0
    %3632 = vmatpush1.msra.mxu0 0.0
    %3633 = vmatprep.subr.mxu0 0.0
    %3634 = vmatpush1.msra.mxu0 0.0
    %3635 = vmatprep.subr.mxu0 0.0
    %3636 = vmatpush1.msra.mxu0 0.0
    %3637 = vmatprep.subr.mxu0 0.0
    %3638 = vmatpush1.msra.mxu0 0.0
    %3639 = vmatprep.subr.mxu0 0.0
    %3640 = vmatpush1.msra.mxu0 0.0
    %3641 = vmatprep.subr.mxu0 0.0
    %3642 = vmatpush1.msra.mxu0 0.0
    %3643 = vmatprep.subr.mxu0 0.0
    %3644 = vmatpush1.msra.mxu0 0.0
    %3645 = vmatprep.mubr.f32.mxu0 0.0
    %3646 = vmatmul.mubr.f32.gmra.mrb[0].mxu0 %v3570
    %v3647 = vpop.f32.mrb[0].mxu0
    %v3648 = vadd.f32 0.0, %v3647
    %v3649 = vpop.f32.mrb[0].mxu0
    %3650 = vmatprep.mubr.f32.mxu0 0.0
    %3651 = vmatmul.mubr.f32.gmra.mrb[0].mxu0 %v3573
    %v3652 = vpop.f32.mrb[0].mxu0
    %v3653 = vadd.f32 0.0, %v3652
    %v3654 = vpop.f32.mrb[0].mxu0
    %3655 = vmatprep.mubr.f32.mxu0 0.0
    %3656 = vmatmul.mubr.f32.gmra.mrb[0].mxu0 %v3576
    %v3657 = vpop.f32.mrb[0].mxu0
    %v3658 = vadd.f32 0.0, %v3657
    %v3659 = vpop.f32.mrb[0].mxu0
    %3660 = vmatprep.mubr.f32.mxu0 0.0
    %3661 = vmatmul.mubr.f32.gmra.mrb[0].mxu0 %v3579
    %v3662 = vpop.f32.mrb[0].mxu0
    %v3663 = vadd.f32 0.0, %v3662
    %v3664 = vpop.f32.mrb[0].mxu0
    %3665 = vdwg.mxu0
    %v3666 = vadd.f32 %v3542, %v3648
    %v3667 = vadd.f32 %v3547, %v3653
    %v3668 = vadd.f32 %v3552, %v3658
    %v3669 = vadd.f32 %v3557, %v3663
    %v3670 = vld [vmem:[%s24] sm:$0x1]
    %v3672 = vlaneseq
    %v3673 = vshrl.u32 %v3672, 7
    %v3674 = vsub.s32 0, %v3673
    %v3675 = vrot.slane %v3670, %v3674
    %v3677 = vadd.f32 %v3666, %v3675
    %v3678 = vadd.f32 %v3667, %v3675
    %v3679 = vadd.f32 %v3668, %v3675
    %v3680 = vadd.f32 %v3669, %v3675
    %3681 = vmatprep.subr.mxu0 0.0
    %3682 = vmatpush1.msra.mxu0 %v3677
    %3683 = vmatprep.subr.mxu0 0.0
    %3684 = vmatpush1.msra.mxu0 %v3678
    %3685 = vmatprep.subr.mxu0 0.0
    %3686 = vmatpush1.msra.mxu0 %v3679
    %3687 = vmatprep.subr.mxu0 0.0
    %3688 = vmatpush1.msra.mxu0 %v3680
    %3689 = vmatprep.subr.mxu0 0.0
    %3690 = vmatpush1.msra.mxu0 0.0
    %3691 = vmatprep.subr.mxu0 0.0
    %3692 = vmatpush1.msra.mxu0 0.0
    %3693 = vmatprep.subr.mxu0 0.0
    %3694 = vmatpush1.msra.mxu0 0.0
    %3695 = vmatprep.subr.mxu0 0.0
    %3696 = vmatpush1.msra.mxu0 0.0
    %3697 = vmatprep.subr.mxu0 0.0
    %3698 = vmatpush1.msra.mxu0 0.0
    %3699 = vmatprep.subr.mxu0 0.0
    %3700 = vmatpush1.msra.mxu0 0.0
    %3701 = vmatprep.subr.mxu0 0.0
    %3702 = vmatpush1.msra.mxu0 0.0
    %3703 = vmatprep.subr.mxu0 0.0
    %3704 = vmatpush1.msra.mxu0 0.0
    %3705 = vmatprep.subr.mxu0 0.0
    %3706 = vmatpush1.msra.mxu0 0.0
    %3707 = vmatprep.subr.mxu0 0.0
    %3708 = vmatpush1.msra.mxu0 0.0
    %3709 = vmatprep.subr.mxu0 0.0
    %3710 = vmatpush1.msra.mxu0 0.0
    %3711 = vmatprep.subr.mxu0 0.0
    %3712 = vmatpush1.msra.mxu0 0.0
    %3713 = vmatprep.subr.mxu0 0.0
    %3714 = vmatpush1.msra.mxu0 0.0
    %3715 = vmatprep.subr.mxu0 0.0
    %3716 = vmatpush1.msra.mxu0 0.0
    %3717 = vmatprep.subr.mxu0 0.0
    %3718 = vmatpush1.msra.mxu0 0.0
    %3719 = vmatprep.subr.mxu0 0.0
    %3720 = vmatpush1.msra.mxu0 0.0
    %3721 = vmatprep.subr.mxu0 0.0
    %3722 = vmatpush1.msra.mxu0 0.0
    %3723 = vmatprep.subr.mxu0 0.0
    %3724 = vmatpush1.msra.mxu0 0.0
    %3725 = vmatprep.subr.mxu0 0.0
    %3726 = vmatpush1.msra.mxu0 0.0
    %3727 = vmatprep.subr.mxu0 0.0
    %3728 = vmatpush1.msra.mxu0 0.0
    %3729 = vmatprep.subr.mxu0 0.0
    %3730 = vmatpush1.msra.mxu0 0.0
    %3731 = vmatprep.subr.mxu0 0.0
    %3732 = vmatpush1.msra.mxu0 0.0
    %3733 = vmatprep.subr.mxu0 0.0
    %3734 = vmatpush1.msra.mxu0 0.0
    %3735 = vmatprep.subr.mxu0 0.0
    %3736 = vmatpush1.msra.mxu0 0.0
    %3737 = vmatprep.subr.mxu0 0.0
    %3738 = vmatpush1.msra.mxu0 0.0
    %3739 = vmatprep.subr.mxu0 0.0
    %3740 = vmatpush1.msra.mxu0 0.0
    %3741 = vmatprep.subr.mxu0 0.0
    %3742 = vmatpush1.msra.mxu0 0.0
    %3743 = vmatprep.subr.mxu0 0.0
    %3744 = vmatpush1.msra.mxu0 0.0
    %3745 = vmatprep.mubr.f32.mxu0 0.0
    %3746 = vmatmul.mubr.f32.gmra.mrb[0].mxu0 %v135
    %v3747 = vpop.f32.mrb[0].mxu0
    %v3748 = vadd.f32 0.0, %v3747
    %v3749 = vpop.f32.mrb[0].mxu0
    %3750 = vmatprep.mubr.f32.mxu0 0.0
    %3751 = vmatmul.mubr.f32.gmra.mrb[0].mxu0 %v138
    %v3752 = vpop.f32.mrb[0].mxu0
    %v3753 = vadd.f32 0.0, %v3752
    %v3754 = vpop.f32.mrb[0].mxu0
    %3755 = vmatprep.mubr.f32.mxu0 0.0
    %3756 = vmatmul.mubr.f32.gmra.mrb[0].mxu0 %v141
    %v3757 = vpop.f32.mrb[0].mxu0
    %v3758 = vadd.f32 0.0, %v3757
    %v3759 = vpop.f32.mrb[0].mxu0
    %3760 = vmatprep.mubr.f32.mxu0 0.0
    %3761 = vmatmul.mubr.f32.gmra.mrb[0].mxu0 %v144
    %v3762 = vpop.f32.mrb[0].mxu0
    %v3763 = vadd.f32 0.0, %v3762
    %v3764 = vpop.f32.mrb[0].mxu0
    %3765 = vdwg.mxu0
    %3766 = vmatprep.subr.mxu0 0.0
    %3767 = vmatpush1.msra.mxu0 %v3677
    %3768 = vmatprep.subr.mxu0 0.0
    %3769 = vmatpush1.msra.mxu0 %v3678
    %3770 = vmatprep.subr.mxu0 0.0
    %3771 = vmatpush1.msra.mxu0 %v3679
    %3772 = vmatprep.subr.mxu0 0.0
    %3773 = vmatpush1.msra.mxu0 %v3680
    %3774 = vmatprep.subr.mxu0 0.0
    %3775 = vmatpush1.msra.mxu0 0.0
    %3776 = vmatprep.subr.mxu0 0.0
    %3777 = vmatpush1.msra.mxu0 0.0
    %3778 = vmatprep.subr.mxu0 0.0
    %3779 = vmatpush1.msra.mxu0 0.0
    %3780 = vmatprep.subr.mxu0 0.0
    %3781 = vmatpush1.msra.mxu0 0.0
    %3782 = vmatprep.subr.mxu0 0.0
    %3783 = vmatpush1.msra.mxu0 0.0
    %3784 = vmatprep.subr.mxu0 0.0
    %3785 = vmatpush1.msra.mxu0 0.0
    %3786 = vmatprep.subr.mxu0 0.0
    %3787 = vmatpush1.msra.mxu0 0.0
    %3788 = vmatprep.subr.mxu0 0.0
    %3789 = vmatpush1.msra.mxu0 0.0
    %3790 = vmatprep.subr.mxu0 0.0
    %3791 = vmatpush1.msra.mxu0 0.0
    %3792 = vmatprep.subr.mxu0 0.0
    %3793 = vmatpush1.msra.mxu0 0.0
    %3794 = vmatprep.subr.mxu0 0.0
    %3795 = vmatpush1.msra.mxu0 0.0
    %3796 = vmatprep.subr.mxu0 0.0
    %3797 = vmatpush1.msra.mxu0 0.0
    %3798 = vmatprep.subr.mxu0 0.0
    %3799 = vmatpush1.msra.mxu0 0.0
    %3800 = vmatprep.subr.mxu0 0.0
    %3801 = vmatpush1.msra.mxu0 0.0
    %3802 = vmatprep.subr.mxu0 0.0
    %3803 = vmatpush1.msra.mxu0 0.0
    %3804 = vmatprep.subr.mxu0 0.0
    %3805 = vmatpush1.msra.mxu0 0.0
    %3806 = vmatprep.subr.mxu0 0.0
    %3807 = vmatpush1.msra.mxu0 0.0
    %3808 = vmatprep.subr.mxu0 0.0
    %3809 = vmatpush1.msra.mxu0 0.0
    %3810 = vmatprep.subr.mxu0 0.0
    %3811 = vmatpush1.msra.mxu0 0.0
    %3812 = vmatprep.subr.mxu0 0.0
    %3813 = vmatpush1.msra.mxu0 0.0
    %3814 = vmatprep.subr.mxu0 0.0
    %3815 = vmatpush1.msra.mxu0 0.0
    %3816 = vmatprep.subr.mxu0 0.0
    %3817 = vmatpush1.msra.mxu0 0.0
    %3818 = vmatprep.subr.mxu0 0.0
    %3819 = vmatpush1.msra.mxu0 0.0
    %3820 = vmatprep.subr.mxu0 0.0
    %3821 = vmatpush1.msra.mxu0 0.0
    %3822 = vmatprep.subr.mxu0 0.0
    %3823 = vmatpush1.msra.mxu0 0.0
    %3824 = vmatprep.subr.mxu0 0.0
    %3825 = vmatpush1.msra.mxu0 0.0
    %3826 = vmatprep.subr.mxu0 0.0
    %3827 = vmatpush1.msra.mxu0 0.0
    %3828 = vmatprep.subr.mxu0 0.0
    %3829 = vmatpush1.msra.mxu0 0.0
    %3830 = vmatprep.mubr.f32.mxu0 0.0
    %3831 = vmatmul.mubr.f32.gmra.mrb[0].mxu0 %v236
    %v3832 = vpop.f32.mrb[0].mxu0
    %v3833 = vadd.f32 0.0, %v3832
    %v3834 = vpop.f32.mrb[0].mxu0
    %3835 = vmatprep.mubr.f32.mxu0 0.0
    %3836 = vmatmul.mubr.f32.gmra.mrb[0].mxu0 %v239
    %v3837 = vpop.f32.mrb[0].mxu0
    %v3838 = vadd.f32 0.0, %v3837
    %v3839 = vpop.f32.mrb[0].mxu0
    %3840 = vmatprep.mubr.f32.mxu0 0.0
    %3841 = vmatmul.mubr.f32.gmra.mrb[0].mxu0 %v242
    %v3842 = vpop.f32.mrb[0].mxu0
    %v3843 = vadd.f32 0.0, %v3842
    %v3844 = vpop.f32.mrb[0].mxu0
    %3845 = vmatprep.mubr.f32.mxu0 0.0
    %3846 = vmatmul.mubr.f32.gmra.mrb[0].mxu0 %v245
    %v3847 = vpop.f32.mrb[0].mxu0
    %v3848 = vadd.f32 0.0, %v3847
    %v3849 = vpop.f32.mrb[0].mxu0
    %3850 = vdwg.mxu0
    %v3851 = vld [vmem:[%s25] sm:$0xff]
    %v3852 = vld [vmem:[%s25 + $0x8] sm:$0xff]
    %v3853 = vld [vmem:[%s25 + $0x10] sm:$0xff]
    %v3854 = vld [vmem:[%s25 + $0x18] sm:$0xff]
    %v3855 = vld [vmem:[%s25 + $0x20] sm:$0xff]
    %v3856 = vld [vmem:[%s25 + $0x28] sm:$0xff]
    %v3857 = vld [vmem:[%s25 + $0x30] sm:$0xff]
    %v3858 = vld [vmem:[%s25 + $0x38] sm:$0xff]
    %v3859 = vld [vmem:[%s25 + $0x40] sm:$0xff]
    %v3860 = vld [vmem:[%s25 + $0x48] sm:$0xff]
    %v3861 = vld [vmem:[%s25 + $0x50] sm:$0xff]
    %v3862 = vld [vmem:[%s25 + $0x58] sm:$0xff]
    %v3863 = vld [vmem:[%s25 + $0x60] sm:$0xff]
    %v3864 = vld [vmem:[%s25 + $0x68] sm:$0xff]
    %v3865 = vld [vmem:[%s25 + $0x70] sm:$0xff]
    %v3866 = vld [vmem:[%s25 + $0x78] sm:$0xff]
    %s3867 = scalar_lea.vmem %s25, 128
    %v3868 = vld [vmem:[%s3867] sm:$0xff]
    %v3869 = vld [vmem:[%s3867 + $0x8] sm:$0xff]
    %v3870 = vld [vmem:[%s3867 + $0x10] sm:$0xff]
    %v3871 = vld [vmem:[%s3867 + $0x18] sm:$0xff]
    %v3872 = vld [vmem:[%s3867 + $0x20] sm:$0xff]
    %v3873 = vld [vmem:[%s3867 + $0x28] sm:$0xff]
    %v3874 = vld [vmem:[%s3867 + $0x30] sm:$0xff]
    %v3875 = vld [vmem:[%s3867 + $0x38] sm:$0xff]
    %v3876 = vld [vmem:[%s3867 + $0x40] sm:$0xff]
    %v3877 = vld [vmem:[%s3867 + $0x48] sm:$0xff]
    %v3878 = vld [vmem:[%s3867 + $0x50] sm:$0xff]
    %v3879 = vld [vmem:[%s3867 + $0x58] sm:$0xff]
    %v3880 = vld [vmem:[%s3867 + $0x60] sm:$0xff]
    %v3881 = vld [vmem:[%s3867 + $0x68] sm:$0xff]
    %v3882 = vld [vmem:[%s3867 + $0x70] sm:$0xff]
    %v3883 = vld [vmem:[%s3867 + $0x78] sm:$0xff]
    %3884 = vmatprep.subr.mxu0 0.0
    %3885 = vmatpush1.msra.mxu0 %v3868
    %3886 = vmatprep.subr.mxu0 0.0
    %3887 = vmatpush1.msra.mxu0 %v3869
    %3888 = vmatprep.subr.mxu0 0.0
    %3889 = vmatpush1.msra.mxu0 %v3870
    %3890 = vmatprep.subr.mxu0 0.0
    %3891 = vmatpush1.msra.mxu0 %v3871
    %3892 = vmatprep.subr.mxu0 0.0
    %3893 = vmatpush1.msra.mxu0 %v3872
    %3894 = vmatprep.subr.mxu0 0.0
    %3895 = vmatpush1.msra.mxu0 %v3873
    %3896 = vmatprep.subr.mxu0 0.0
    %3897 = vmatpush1.msra.mxu0 %v3874
    %3898 = vmatprep.subr.mxu0 0.0
    %3899 = vmatpush1.msra.mxu0 %v3875
    %3900 = vmatprep.subr.mxu0 0.0
    %3901 = vmatpush1.msra.mxu0 %v3876
    %3902 = vmatprep.subr.mxu0 0.0
    %3903 = vmatpush1.msra.mxu0 %v3877
    %3904 = vmatprep.subr.mxu0 0.0
    %3905 = vmatpush1.msra.mxu0 %v3878
    %3906 = vmatprep.subr.mxu0 0.0
    %3907 = vmatpush1.msra.mxu0 %v3879
    %3908 = vmatprep.subr.mxu0 0.0
    %3909 = vmatpush1.msra.mxu0 %v3880
    %3910 = vmatprep.subr.mxu0 0.0
    %3911 = vmatpush1.msra.mxu0 %v3881
    %3912 = vmatprep.subr.mxu0 0.0
    %3913 = vmatpush1.msra.mxu0 %v3882
    %3914 = vmatprep.subr.mxu0 0.0
    %3915 = vmatpush1.msra.mxu0 %v3883
    %3916 = vmatprep.subr.mxu0 0.0
    %3917 = vmatpush1.msra.mxu0 0.0
    %3918 = vmatprep.subr.mxu0 0.0
    %3919 = vmatpush1.msra.mxu0 0.0
    %3920 = vmatprep.subr.mxu0 0.0
    %3921 = vmatpush1.msra.mxu0 0.0
    %3922 = vmatprep.subr.mxu0 0.0
    %3923 = vmatpush1.msra.mxu0 0.0
    %3924 = vmatprep.subr.mxu0 0.0
    %3925 = vmatpush1.msra.mxu0 0.0
    %3926 = vmatprep.subr.mxu0 0.0
    %3927 = vmatpush1.msra.mxu0 0.0
    %3928 = vmatprep.subr.mxu0 0.0
    %3929 = vmatpush1.msra.mxu0 0.0
    %3930 = vmatprep.subr.mxu0 0.0
    %3931 = vmatpush1.msra.mxu0 0.0
    %3932 = vmatprep.subr.mxu0 0.0
    %3933 = vmatpush1.msra.mxu0 0.0
    %3934 = vmatprep.subr.mxu0 0.0
    %3935 = vmatpush1.msra.mxu0 0.0
    %3936 = vmatprep.subr.mxu0 0.0
    %3937 = vmatpush1.msra.mxu0 0.0
    %3938 = vmatprep.subr.mxu0 0.0
    %3939 = vmatpush1.msra.mxu0 0.0
    %3940 = vmatprep.subr.mxu0 0.0
    %3941 = vmatpush1.msra.mxu0 0.0
    %3942 = vmatprep.subr.mxu0 0.0
    %3943 = vmatpush1.msra.mxu0 0.0
    %3944 = vmatprep.subr.mxu0 0.0
    %3945 = vmatpush1.msra.mxu0 0.0
    %3946 = vmatprep.subr.mxu0 0.0
    %3947 = vmatpush1.msra.mxu0 0.0
    %3948 = vmatprep.mubr.f32.mxu0 0.0
    %3949 = vmatmul.mubr.f32.gmra.mrb[0].mxu0 %v3677
    %v3950 = vpop.f32.mrb[0].mxu0
    %v3951 = vadd.f32 0.0, %v3950
    %v3952 = vpop.f32.mrb[0].mxu0
    %3953 = vmatprep.mubr.f32.mxu0 0.0
    %3954 = vmatmul.mubr.f32.gmra.mrb[0].mxu0 %v3678
    %v3955 = vpop.f32.mrb[0].mxu0
    %v3956 = vadd.f32 0.0, %v3955
    %v3957 = vpop.f32.mrb[0].mxu0
    %3958 = vmatprep.mubr.f32.mxu0 0.0
    %3959 = vmatmul.mubr.f32.gmra.mrb[0].mxu0 %v3679
    %v3960 = vpop.f32.mrb[0].mxu0
    %v3961 = vadd.f32 0.0, %v3960
    %v3962 = vpop.f32.mrb[0].mxu0
    %3963 = vmatprep.mubr.f32.mxu0 0.0
    %3964 = vmatmul.mubr.f32.gmra.mrb[0].mxu0 %v3680
    %v3965 = vpop.f32.mrb[0].mxu0
    %v3966 = vadd.f32 0.0, %v3965
    %v3967 = vpop.f32.mrb[0].mxu0
    %3968 = vdwg.mxu0
    %3969 = vmatprep.subr.mxu0 0.0
    %3970 = vmatpush1.msra.mxu0 %v3851
    %3971 = vmatprep.subr.mxu0 0.0
    %3972 = vmatpush1.msra.mxu0 %v3852
    %3973 = vmatprep.subr.mxu0 0.0
    %3974 = vmatpush1.msra.mxu0 %v3853
    %3975 = vmatprep.subr.mxu0 0.0
    %3976 = vmatpush1.msra.mxu0 %v3854
    %3977 = vmatprep.subr.mxu0 0.0
    %3978 = vmatpush1.msra.mxu0 %v3855
    %3979 = vmatprep.subr.mxu0 0.0
    %3980 = vmatpush1.msra.mxu0 %v3856
    %3981 = vmatprep.subr.mxu0 0.0
    %3982 = vmatpush1.msra.mxu0 %v3857
    %3983 = vmatprep.subr.mxu0 0.0
    %3984 = vmatpush1.msra.mxu0 %v3858
    %3985 = vmatprep.subr.mxu0 0.0
    %3986 = vmatpush1.msra.mxu0 %v3859
    %3987 = vmatprep.subr.mxu0 0.0
    %3988 = vmatpush1.msra.mxu0 %v3860
    %3989 = vmatprep.subr.mxu0 0.0
    %3990 = vmatpush1.msra.mxu0 %v3861
    %3991 = vmatprep.subr.mxu0 0.0
    %3992 = vmatpush1.msra.mxu0 %v3862
    %3993 = vmatprep.subr.mxu0 0.0
    %3994 = vmatpush1.msra.mxu0 %v3863
    %3995 = vmatprep.subr.mxu0 0.0
    %3996 = vmatpush1.msra.mxu0 %v3864
    %3997 = vmatprep.subr.mxu0 0.0
    %3998 = vmatpush1.msra.mxu0 %v3865
    %3999 = vmatprep.subr.mxu0 0.0
    %4000 = vmatpush1.msra.mxu0 %v3866
    %4001 = vmatprep.subr.mxu0 0.0
    %4002 = vmatpush1.msra.mxu0 0.0
    %4003 = vmatprep.subr.mxu0 0.0
    %4004 = vmatpush1.msra.mxu0 0.0
    %4005 = vmatprep.subr.mxu0 0.0
    %4006 = vmatpush1.msra.mxu0 0.0
    %4007 = vmatprep.subr.mxu0 0.0
    %4008 = vmatpush1.msra.mxu0 0.0
    %4009 = vmatprep.subr.mxu0 0.0
    %4010 = vmatpush1.msra.mxu0 0.0
    %4011 = vmatprep.subr.mxu0 0.0
    %4012 = vmatpush1.msra.mxu0 0.0
    %4013 = vmatprep.subr.mxu0 0.0
    %4014 = vmatpush1.msra.mxu0 0.0
    %4015 = vmatprep.subr.mxu0 0.0
    %4016 = vmatpush1.msra.mxu0 0.0
    %4017 = vmatprep.subr.mxu0 0.0
    %4018 = vmatpush1.msra.mxu0 0.0
    %4019 = vmatprep.subr.mxu0 0.0
    %4020 = vmatpush1.msra.mxu0 0.0
    %4021 = vmatprep.subr.mxu0 0.0
    %4022 = vmatpush1.msra.mxu0 0.0
    %4023 = vmatprep.subr.mxu0 0.0
    %4024 = vmatpush1.msra.mxu0 0.0
    %4025 = vmatprep.subr.mxu0 0.0
    %4026 = vmatpush1.msra.mxu0 0.0
    %4027 = vmatprep.subr.mxu0 0.0
    %4028 = vmatpush1.msra.mxu0 0.0
    %4029 = vmatprep.subr.mxu0 0.0
    %4030 = vmatpush1.msra.mxu0 0.0
    %4031 = vmatprep.subr.mxu0 0.0
    %4032 = vmatpush1.msra.mxu0 0.0
    %4033 = vmatprep.mubr.f32.mxu0 0.0
    %4034 = vmatmul.mubr.f32.gmra.mrb[0].mxu0 %v3748
    %v4035 = vpop.f32.mrb[0].mxu0
    %v4036 = vadd.f32 %v3951, %v4035
    %v4037 = vpop.f32.mrb[0].mxu0
    %4038 = vmatprep.mubr.f32.mxu0 0.0
    %4039 = vmatmul.mubr.f32.gmra.mrb[0].mxu0 %v3753
    %v4040 = vpop.f32.mrb[0].mxu0
    %v4041 = vadd.f32 %v3956, %v4040
    %v4042 = vpop.f32.mrb[0].mxu0
    %4043 = vmatprep.mubr.f32.mxu0 0.0
    %4044 = vmatmul.mubr.f32.gmra.mrb[0].mxu0 %v3758
    %v4045 = vpop.f32.mrb[0].mxu0
    %v4046 = vadd.f32 %v3961, %v4045
    %v4047 = vpop.f32.mrb[0].mxu0
    %4048 = vmatprep.mubr.f32.mxu0 0.0
    %4049 = vmatmul.mubr.f32.gmra.mrb[0].mxu0 %v3763
    %v4050 = vpop.f32.mrb[0].mxu0
    %v4051 = vadd.f32 %v3966, %v4050
    %v4052 = vpop.f32.mrb[0].mxu0
    %4053 = vdwg.mxu0
    %s4054 = scalar_lea.vmem %s25, 256
    %v4055 = vld [vmem:[%s4054] sm:$0xff]
    %v4056 = vld [vmem:[%s4054 + $0x8] sm:$0xff]
    %v4057 = vld [vmem:[%s4054 + $0x10] sm:$0xff]
    %v4058 = vld [vmem:[%s4054 + $0x18] sm:$0xff]
    %v4059 = vld [vmem:[%s4054 + $0x20] sm:$0xff]
    %v4060 = vld [vmem:[%s4054 + $0x28] sm:$0xff]
    %v4061 = vld [vmem:[%s4054 + $0x30] sm:$0xff]
    %v4062 = vld [vmem:[%s4054 + $0x38] sm:$0xff]
    %v4063 = vld [vmem:[%s4054 + $0x40] sm:$0xff]
    %v4064 = vld [vmem:[%s4054 + $0x48] sm:$0xff]
    %v4065 = vld [vmem:[%s4054 + $0x50] sm:$0xff]
    %v4066 = vld [vmem:[%s4054 + $0x58] sm:$0xff]
    %v4067 = vld [vmem:[%s4054 + $0x60] sm:$0xff]
    %v4068 = vld [vmem:[%s4054 + $0x68] sm:$0xff]
    %v4069 = vld [vmem:[%s4054 + $0x70] sm:$0xff]
    %v4070 = vld [vmem:[%s4054 + $0x78] sm:$0xff]
    %4071 = vmatprep.subr.mxu0 0.0
    %4072 = vmatpush1.msra.mxu0 %v4055
    %4073 = vmatprep.subr.mxu0 0.0
    %4074 = vmatpush1.msra.mxu0 %v4056
    %4075 = vmatprep.subr.mxu0 0.0
    %4076 = vmatpush1.msra.mxu0 %v4057
    %4077 = vmatprep.subr.mxu0 0.0
    %4078 = vmatpush1.msra.mxu0 %v4058
    %4079 = vmatprep.subr.mxu0 0.0
    %4080 = vmatpush1.msra.mxu0 %v4059
    %4081 = vmatprep.subr.mxu0 0.0
    %4082 = vmatpush1.msra.mxu0 %v4060
    %4083 = vmatprep.subr.mxu0 0.0
    %4084 = vmatpush1.msra.mxu0 %v4061
    %4085 = vmatprep.subr.mxu0 0.0
    %4086 = vmatpush1.msra.mxu0 %v4062
    %4087 = vmatprep.subr.mxu0 0.0
    %4088 = vmatpush1.msra.mxu0 %v4063
    %4089 = vmatprep.subr.mxu0 0.0
    %4090 = vmatpush1.msra.mxu0 %v4064
    %4091 = vmatprep.subr.mxu0 0.0
    %4092 = vmatpush1.msra.mxu0 %v4065
    %4093 = vmatprep.subr.mxu0 0.0
    %4094 = vmatpush1.msra.mxu0 %v4066
    %4095 = vmatprep.subr.mxu0 0.0
    %4096 = vmatpush1.msra.mxu0 %v4067
    %4097 = vmatprep.subr.mxu0 0.0
    %4098 = vmatpush1.msra.mxu0 %v4068
    %4099 = vmatprep.subr.mxu0 0.0
    %4100 = vmatpush1.msra.mxu0 %v4069
    %4101 = vmatprep.subr.mxu0 0.0
    %4102 = vmatpush1.msra.mxu0 %v4070
    %4103 = vmatprep.subr.mxu0 0.0
    %4104 = vmatpush1.msra.mxu0 0.0
    %4105 = vmatprep.subr.mxu0 0.0
    %4106 = vmatpush1.msra.mxu0 0.0
    %4107 = vmatprep.subr.mxu0 0.0
    %4108 = vmatpush1.msra.mxu0 0.0
    %4109 = vmatprep.subr.mxu0 0.0
    %4110 = vmatpush1.msra.mxu0 0.0
    %4111 = vmatprep.subr.mxu0 0.0
    %4112 = vmatpush1.msra.mxu0 0.0
    %4113 = vmatprep.subr.mxu0 0.0
    %4114 = vmatpush1.msra.mxu0 0.0
    %4115 = vmatprep.subr.mxu0 0.0
    %4116 = vmatpush1.msra.mxu0 0.0
    %4117 = vmatprep.subr.mxu0 0.0
    %4118 = vmatpush1.msra.mxu0 0.0
    %4119 = vmatprep.subr.mxu0 0.0
    %4120 = vmatpush1.msra.mxu0 0.0
    %4121 = vmatprep.subr.mxu0 0.0
    %4122 = vmatpush1.msra.mxu0 0.0
    %4123 = vmatprep.subr.mxu0 0.0
    %4124 = vmatpush1.msra.mxu0 0.0
    %4125 = vmatprep.subr.mxu0 0.0
    %4126 = vmatpush1.msra.mxu0 0.0
    %4127 = vmatprep.subr.mxu0 0.0
    %4128 = vmatpush1.msra.mxu0 0.0
    %4129 = vmatprep.subr.mxu0 0.0
    %4130 = vmatpush1.msra.mxu0 0.0
    %4131 = vmatprep.subr.mxu0 0.0
    %4132 = vmatpush1.msra.mxu0 0.0
    %4133 = vmatprep.subr.mxu0 0.0
    %4134 = vmatpush1.msra.mxu0 0.0
    %4135 = vmatprep.mubr.f32.mxu0 0.0
    %4136 = vmatmul.mubr.f32.gmra.mrb[0].mxu0 %v3833
    %v4137 = vpop.f32.mrb[0].mxu0
    %v4138 = vadd.f32 0.0, %v4137
    %v4139 = vpop.f32.mrb[0].mxu0
    %4140 = vmatprep.mubr.f32.mxu0 0.0
    %4141 = vmatmul.mubr.f32.gmra.mrb[0].mxu0 %v3838
    %v4142 = vpop.f32.mrb[0].mxu0
    %v4143 = vadd.f32 0.0, %v4142
    %v4144 = vpop.f32.mrb[0].mxu0
    %4145 = vmatprep.mubr.f32.mxu0 0.0
    %4146 = vmatmul.mubr.f32.gmra.mrb[0].mxu0 %v3843
    %v4147 = vpop.f32.mrb[0].mxu0
    %v4148 = vadd.f32 0.0, %v4147
    %v4149 = vpop.f32.mrb[0].mxu0
    %4150 = vmatprep.mubr.f32.mxu0 0.0
    %4151 = vmatmul.mubr.f32.gmra.mrb[0].mxu0 %v3848
    %v4152 = vpop.f32.mrb[0].mxu0
    %v4153 = vadd.f32 0.0, %v4152
    %v4154 = vpop.f32.mrb[0].mxu0
    %4155 = vdwg.mxu0
    %v4156 = vadd.f32 %v4036, %v4138
    %v4157 = vadd.f32 %v4041, %v4143
    %v4158 = vadd.f32 %v4046, %v4148
    %v4159 = vadd.f32 %v4051, %v4153
    %v4160 = vld [vmem:[%s26] sm:$0x1]
    %v4162 = vlaneseq
    %v4163 = vshrl.u32 %v4162, 7
    %v4164 = vsub.s32 0, %v4163
    %v4165 = vrot.slane %v4160, %v4164
    %v4167 = vadd.f32 %v4156, %v4165
    %v4168 = vadd.f32 %v4157, %v4165
    %v4169 = vadd.f32 %v4158, %v4165
    %v4170 = vadd.f32 %v4159, %v4165
    %4171 = vst [vmem:[%s27] sm:$0xff] %v4167
    %4172 = vst [vmem:[%s27 + $0x8] sm:$0xff] %v4168
    %4173 = vst [vmem:[%s27 + $0x10] sm:$0xff] %v4169
    %4174 = vst [vmem:[%s27 + $0x18] sm:$0xff] %v4170
    // Predicated region
    $region122: #{zeroshot_forward.1} parent=1 // pred_check
      _
    $region123: #{zeroshot_forward.1} parent=1 // pred_check_branch
      %4176 = sbr.rel (0) target = $region125
    $region124: #{zeroshot_forward.1} parent=1 // pred_region
      _
    $region125: #{zeroshot_forward.1} parent=1 // pred_fallthru
      _
    // Predicated region
    $region126: #{zeroshot_forward.1} parent=1 // pred_check
      _
    $region127: #{zeroshot_forward.1} parent=1 // pred_check_branch
      %4178 = sbr.rel (0) target = $region129
    $region128: #{zeroshot_forward.1} parent=1 // pred_region
      _
    $region129: #{zeroshot_forward.1} parent=1 // pred_fallthru
      _
    %4179 = vsyncpa [#allocation3], 1
    %4180 = vsyncpa [#allocation5], 1

</llo_original>
